<compile_context>
chip_gen: v7x
topology: tpu7x:2x2x1
jax: 0.10.0
libtpu: 0.0.40
codegen_flags: <defaults>
</compile_context>

<pallas_src>
import math
from functools import partial

import jax
import jax.numpy as jnp
from jax.experimental import pallas as pl
from jax.experimental.pallas import tpu as pltpu

# ----------------------------- configuration -------------------------------
BATCH = 4              # molecules per call
N_ATOMS = 8            # atoms per molecule
HIDDEN = 32            # hidden_channels
NUM_FILTERS = 32       # num_filters
NUM_GAUSSIANS = 32     # num_gaussians
NUM_INTERACTIONS = 3   # num_interactions
CUTOFF = 10.0
LOG2 = math.log(2.0)
NE = N_ATOMS * N_ATOMS

C_PAD = 128            # lane-dense padded channel width (hidden/filters/gaussians)


def _ssp(x):
    # shifted softplus: softplus(x) - log(2)  (numerically stable)
    return jnp.maximum(x, 0.0) + jnp.log1p(jnp.exp(-jnp.abs(x))) - LOG2


# ------------------------------- kernel ------------------------------------
def schnet_kernel(dca_ref, h0_ref, offset_ref, w_all_ref, b_all_ref, out_ref,
                  *, coeff, num_layers, n_atoms, b_step):
    ne = n_atoms * n_atoms
    c = offset_ref.shape[-1]

    # Edge features for the B_step molecules of this grid step, folded into
    # the sublane dimension (tile-aligned sublane merge, no copy).
    dca = dca_ref[...].reshape(b_step * ne, 2)   # lane 0 = distance, lane 1 = CA
    d = dca[:, 0:1]                              # (B*NE, 1) pairwise distances
    CA = dca[:, 1:2]                             # (B*NE, 1) cos-cutoff * adjacency

    # GaussianSmearing: exp(coeff * (d - mu)^2) -> (B*NE, C)  (lane-dense)
    diff = d - offset_ref[...]
    edge_attr = jnp.exp(coeff * diff * diff)

    h = h0_ref[...].reshape(b_step * n_atoms, c)          # (B*N, C)

    for l in range(num_layers):
        w_mlp1 = w_all_ref[5 * l + 0]
        w_mlp2 = w_all_ref[5 * l + 1]
        w_lin1 = w_all_ref[5 * l + 2]
        w_lin2 = w_all_ref[5 * l + 3]
        w_lin = w_all_ref[5 * l + 4]
        b_mlp1 = b_all_ref[4 * l + 0]
        b_mlp2 = b_all_ref[4 * l + 1]
        b_lin2 = b_all_ref[4 * l + 2]
        b_lin = b_all_ref[4 * l + 3]

        # filter-generating MLP on edge attributes (MXU, K = 128 lane-dense)
        f1 = _ssp(jnp.dot(edge_attr, w_mlp1,
                          preferred_element_type=jnp.float32) + b_mlp1)
        W = jnp.dot(f1, w_mlp2,
                    preferred_element_type=jnp.float32) + b_mlp2          # (B*NE, C)
        W = W * CA

        # CFConv: lin1 -> message (x_j * W) -> add-aggregate onto targets -> lin2
        xf = jnp.dot(h, w_lin1, preferred_element_type=jnp.float32)       # (B*N, C)
        # Segmented reduce: edges of target i in molecule m are the contiguous,
        # tile-aligned rows m*NE + i*N .. +N-1, source j == row offset.
        W4 = W.reshape(b_step, n_atoms, n_atoms, c)
        xf4 = xf.reshape(b_step, 1, n_atoms, c)
        agg = jnp.sum(W4 * xf4, axis=2).reshape(b_step * n_atoms, c)      # (B*N, C)
        xc = jnp.dot(agg, w_lin2,
                     preferred_element_type=jnp.float32) + b_lin2         # (B*N, C)

        # interaction block tail: act + lin, then residual
        xo = jnp.dot(_ssp(xc), w_lin,
                     preferred_element_type=jnp.float32) + b_lin          # (B*N, C)
        h = h + xo

    out_ref[...] = h.reshape(b_step, n_atoms, c)           # lane-dense 128 store


# ------------------------------ wrapper -------------------------------------
def _shared_spec(shape):
    nd = len(shape)
    return pl.BlockSpec(shape, lambda i, _nd=nd: (0,) * _nd)


def _pad_w(w, rows, cols):
    out = jnp.zeros(w.shape[:-2] + (rows, cols), jnp.float32)
    return out.at[..., :w.shape[-2], :w.shape[-1]].set(w)


def _num_grid_steps(batch):
    # v7x has 2 TensorCores per chip -> give each one grid step; single-TC
    # parts (v5e/v6e) fold the whole batch into one step (grid is a serial loop).
    try:
        kind = jax.devices()[0].device_kind.lower()
    except Exception:
        kind = ""
    if "v7" in kind and batch % 2 == 0:
        return 2
    return 1


def schnet_forward(z, pos, params):
    """z: (B, N) int32 atomic numbers, pos: (B, N, 3) float32 -> (B, N, HIDDEN)."""
    b, n = z.shape
    ne = n * n

    # embedding lookup, zero-padded to C_PAD lanes
    emb = jnp.zeros((100, C_PAD), jnp.float32).at[:, :HIDDEN].set(params["embedding"])
    h0 = emb[z]                                                   # (B, N, C)

    # radius_graph glue (dense): pairwise distances + cutoff envelope
    dp = pos[:, :, None, :] - pos[:, None, :, :]                  # (B, N, N, 3)
    d2 = jnp.sum(dp * dp, axis=-1)
    eyeb = jnp.eye(n, dtype=bool)
    eyef = eyeb.astype(jnp.float32)
    dmat = jnp.sqrt(d2 + eyef) * (1.0 - eyef)                     # grad-safe sqrt, diag = 0
    # <= vs torch_cluster's strict < only differs exactly at the cutoff, where
    # the cosine envelope is zero anyway -> benign.
    adj = ((dmat <= CUTOFF) & (~eyeb)).astype(jnp.float32)
    # TODO(synk): radius_graph's max_num_neighbors=32 truncation is not applied
    # (all neighbors within the cutoff are kept; equivalent for N_ATOMS <= 33).
    ca = 0.5 * (jnp.cos(dmat * (math.pi / CUTOFF)) + 1.0) * adj   # cos-cutoff * adj

    # pack distance + envelope into a single edge input (fewer narrow DMAs)
    dca = jnp.stack([dmat.reshape(b, ne), ca.reshape(b, ne)], axis=-1)    # (B, NE, 2)

    # lane-pad parameters to C_PAD (zero fill -> exact on the first HIDDEN lanes)
    offset = jnp.zeros((1, C_PAD), jnp.float32).at[:, :NUM_GAUSSIANS].set(params["offset"])
    w_mlp1 = _pad_w(params["w_mlp1"], C_PAD, C_PAD)
    w_mlp2 = _pad_w(params["w_mlp2"], C_PAD, C_PAD)
    w_lin1 = _pad_w(params["w_lin1"], C_PAD, C_PAD)
    w_lin2 = _pad_w(params["w_lin2"], C_PAD, C_PAD)
    w_lin = _pad_w(params["w_lin"], C_PAD, C_PAD)
    b_mlp1 = _pad_w(params["b_mlp1"], 1, C_PAD)
    b_mlp2 = _pad_w(params["b_mlp2"], 1, C_PAD)
    b_lin2 = _pad_w(params["b_lin2"], 1, C_PAD)
    b_lin = _pad_w(params["b_lin"], 1, C_PAD)

    # stack per-layer weights/biases -> 2 operands instead of 10
    w_all = jnp.stack([w_mlp1, w_mlp2, w_lin1, w_lin2, w_lin],
                      axis=1).reshape(5 * NUM_INTERACTIONS, C_PAD, C_PAD)
    b_all = jnp.stack([b_mlp1, b_mlp2, b_lin2, b_lin],
                      axis=1).reshape(4 * NUM_INTERACTIONS, 1, C_PAD)

    num_steps = _num_grid_steps(b)
    b_step = b // num_steps

    edge_spec = pl.BlockSpec((b_step, ne, 2), lambda i: (i, 0, 0))
    node_spec = pl.BlockSpec((b_step, n, C_PAD), lambda i: (i, 0, 0))
    in_specs = [edge_spec, node_spec,
                _shared_spec(offset.shape),
                _shared_spec(w_all.shape),
                _shared_spec(b_all.shape)]

    kernel = partial(schnet_kernel, coeff=params["coeff"],
                     num_layers=NUM_INTERACTIONS, n_atoms=n, b_step=b_step)

    out = pl.pallas_call(
        kernel,
        out_shape=jax.ShapeDtypeStruct((b, n, C_PAD), jnp.float32),
        grid=(num_steps,),                       # 1 step (v5e/v6e) or 2 (v7x)
        in_specs=in_specs,
        out_specs=node_spec,
        compiler_params=pltpu.CompilerParams(dimension_semantics=("parallel",)),
    )(dca, h0, offset, w_all, b_all)

    return out[:, :, :HIDDEN]


# ------------------------ deterministic parameters --------------------------
def make_params(key):
    keys = jax.random.split(key, 2 + 5 * NUM_INTERACTIONS)
    it = iter(keys)

    def xavier(k, shape):
        bound = math.sqrt(6.0 / (shape[0] + shape[1]))
        return jax.random.uniform(k, shape, jnp.float32, -bound, bound)

    params = {}
    params["embedding"] = jax.random.normal(next(it), (100, HIDDEN), jnp.float32)

    offset = jnp.linspace(0.0, CUTOFF, NUM_GAUSSIANS)
    params["offset"] = offset.reshape(1, NUM_GAUSSIANS).astype(jnp.float32)
    params["coeff"] = float(-0.5 / float(offset[1] - offset[0]) ** 2)

    w_mlp1, w_mlp2, w_lin1, w_lin2, w_lin = [], [], [], [], []
    for _ in range(NUM_INTERACTIONS):
        w_mlp1.append(xavier(next(it), (NUM_GAUSSIANS, NUM_FILTERS)))
        w_mlp2.append(xavier(next(it), (NUM_FILTERS, NUM_FILTERS)))
        w_lin1.append(xavier(next(it), (HIDDEN, NUM_FILTERS)))
        w_lin2.append(xavier(next(it), (NUM_FILTERS, HIDDEN)))
        w_lin.append(xavier(next(it), (HIDDEN, HIDDEN)))
    params["w_mlp1"] = jnp.stack(w_mlp1)
    params["w_mlp2"] = jnp.stack(w_mlp2)
    params["w_lin1"] = jnp.stack(w_lin1)
    params["w_lin2"] = jnp.stack(w_lin2)
    params["w_lin"] = jnp.stack(w_lin)
    # reset_parameters fills all biases with 0
    params["b_mlp1"] = jnp.zeros((NUM_INTERACTIONS, 1, NUM_FILTERS), jnp.float32)
    params["b_mlp2"] = jnp.zeros((NUM_INTERACTIONS, 1, NUM_FILTERS), jnp.float32)
    params["b_lin2"] = jnp.zeros((NUM_INTERACTIONS, 1, HIDDEN), jnp.float32)
    params["b_lin"] = jnp.zeros((NUM_INTERACTIONS, 1, HIDDEN), jnp.float32)
    return params


# ----------------------------- pure-JAX reference ----------------------------
def ref_forward(z, pos, p):
    n = z.shape[0]
    h = p["embedding"][z]
    dp = pos[:, None, :] - pos[None, :, :]
    d = jnp.sqrt(jnp.sum(dp * dp, axis=-1))
    adj = ((d <= CUTOFF) & (~jnp.eye(n, dtype=bool))).astype(jnp.float32)
    mu = p["offset"].reshape(-1)
    ea = jnp.exp(p["coeff"] * (d[:, :, None] - mu[None, None, :]) ** 2)
    C = 0.5 * (jnp.cos(d * math.pi / CUTOFF) + 1.0) * adj

    def ssp(x):
        return jax.nn.softplus(x) - LOG2

    for l in range(NUM_INTERACTIONS):
        W = ssp(ea @ p["w_mlp1"][l] + p["b_mlp1"][l]) @ p["w_mlp2"][l] + p["b_mlp2"][l]
        W = W * C[:, :, None]
        xf = h @ p["w_lin1"][l]
        agg = jnp.sum(W * xf[None, :, :], axis=1)
        xc = agg @ p["w_lin2"][l] + p["b_lin2"][l]
        xo = ssp(xc) @ p["w_lin"][l] + p["b_lin"][l]
        h = h + xo
    return h


# --------------------------------- main --------------------------------------
if __name__ == "__main__":
    key = jax.random.PRNGKey(0)
    k_z, k_pos, k_par = jax.random.split(key, 3)

    z = jax.random.randint(k_z, (BATCH, N_ATOMS), 1, 10, dtype=jnp.int32)   # atomic numbers
    pos = jax.random.uniform(k_pos, (BATCH, N_ATOMS, 3), jnp.float32, 0.0, 3.0)
    params = make_params(k_par)

    out = schnet_forward(z, pos, params)
    out = jax.block_until_ready(out)

    refs = jnp.stack([ref_forward(z[i], pos[i], params) for i in range(BATCH)])
    refs = jax.block_until_ready(refs)

    assert out.shape == (BATCH, N_ATOMS, HIDDEN)
    assert jnp.allclose(out, refs, rtol=1e-4, atol=1e-4), "mismatch vs. JAX reference"

    print("KERNEL_OK")
</pallas_src>

<mosaic_0001>
module attributes {stable_mosaic.version = 11 : i64} {
  func.func @schnet_kernel(%arg0: i32, %arg1: memref<4x64x2xf32, #tpu.memory_space<vmem>>, %arg2: memref<4x8x128xf32, #tpu.memory_space<vmem>>, %arg3: memref<1x128xf32, #tpu.memory_space<vmem>>, %arg4: memref<15x128x128xf32, #tpu.memory_space<vmem>>, %arg5: memref<12x1x128xf32, #tpu.memory_space<vmem>>, %arg6: memref<4x8x128xf32, #tpu.memory_space<vmem>>) attributes {dimension_semantics = [#tpu.dimension_semantics<parallel>], iteration_bounds = array<i64: 1>, scalar_prefetch = 0 : i64, scratch_operands = 0 : i64, tpu.core_type = #tpu.core_type<tc>, window_params = [{transform_indices = @transform_0, window_bounds = array<i64: 4, 64, 2>}, {transform_indices = @transform_1, window_bounds = array<i64: 4, 8, 128>}, {pipeline_mode = #tpu.pipeline_mode<synchronous>, transform_indices = @transform_2, window_bounds = array<i64: 1, 128>}, {pipeline_mode = #tpu.pipeline_mode<synchronous>, transform_indices = @transform_3, window_bounds = array<i64: 15, 128, 128>}, {pipeline_mode = #tpu.pipeline_mode<synchronous>, transform_indices = @transform_4, window_bounds = array<i64: 12, 1, 128>}, {transform_indices = @transform_5, window_bounds = array<i64: 4, 8, 128>}]} {
    %c0 = arith.constant 0 : index
    %c0_0 = arith.constant 0 : index
    %c0_1 = arith.constant 0 : index
    %0 = vector.load %arg1[%c0, %c0_0, %c0_1] : memref<4x64x2xf32, #tpu.memory_space<vmem>>, vector<4x64x2xf32>
    %1 = vector.shape_cast %0 : vector<4x64x2xf32> to vector<256x2xf32>
    %2 = vector.extract_strided_slice %1 {offsets = [0, 0], sizes = [256, 1], strides = [1, 1]} : vector<256x2xf32> to vector<256x1xf32>
    %3 = vector.extract_strided_slice %1 {offsets = [0, 1], sizes = [256, 1], strides = [1, 1]} : vector<256x2xf32> to vector<256x1xf32>
    %c0_2 = arith.constant 0 : index
    %c0_3 = arith.constant 0 : index
    %4 = vector.load %arg3[%c0_2, %c0_3] : memref<1x128xf32, #tpu.memory_space<vmem>>, vector<1x128xf32>
    %5 = vector.broadcast %2 : vector<256x1xf32> to vector<256x128xf32>
    %6 = vector.broadcast %4 : vector<1x128xf32> to vector<256x128xf32>
    %7 = arith.subf %5, %6 : vector<256x128xf32>
    %cst = arith.constant -4.80500031 : f32
    %8 = vector.broadcast %cst : f32 to vector<256x128xf32>
    %9 = arith.mulf %8, %7 : vector<256x128xf32>
    %10 = arith.mulf %9, %7 : vector<256x128xf32>
    %11 = math.exp %10 : vector<256x128xf32>
    %c0_4 = arith.constant 0 : index
    %c0_5 = arith.constant 0 : index
    %c0_6 = arith.constant 0 : index
    %12 = vector.load %arg2[%c0_4, %c0_5, %c0_6] : memref<4x8x128xf32, #tpu.memory_space<vmem>>, vector<4x8x128xf32>
    %13 = vector.shape_cast %12 : vector<4x8x128xf32> to vector<32x128xf32>
    %c0_7 = arith.constant 0 : index
    %c0_8 = arith.constant 0 : index
    %c0_9 = arith.constant 0 : index
    %14 = vector.load %arg4[%c0_7, %c0_8, %c0_9] : memref<15x128x128xf32, #tpu.memory_space<vmem>>, vector<1x128x128xf32>
    %15 = vector.shape_cast %14 : vector<1x128x128xf32> to vector<128x128xf32>
    %c1 = arith.constant 1 : index
    %c0_10 = arith.constant 0 : index
    %c0_11 = arith.constant 0 : index
    %16 = vector.load %arg4[%c1, %c0_10, %c0_11] : memref<15x128x128xf32, #tpu.memory_space<vmem>>, vector<1x128x128xf32>
    %17 = vector.shape_cast %16 : vector<1x128x128xf32> to vector<128x128xf32>
    %c2 = arith.constant 2 : index
    %c0_12 = arith.constant 0 : index
    %c0_13 = arith.constant 0 : index
    %18 = vector.load %arg4[%c2, %c0_12, %c0_13] : memref<15x128x128xf32, #tpu.memory_space<vmem>>, vector<1x128x128xf32>
    %19 = vector.shape_cast %18 : vector<1x128x128xf32> to vector<128x128xf32>
    %c3 = arith.constant 3 : index
    %c0_14 = arith.constant 0 : index
    %c0_15 = arith.constant 0 : index
    %20 = vector.load %arg4[%c3, %c0_14, %c0_15] : memref<15x128x128xf32, #tpu.memory_space<vmem>>, vector<1x128x128xf32>
    %21 = vector.shape_cast %20 : vector<1x128x128xf32> to vector<128x128xf32>
    %c4 = arith.constant 4 : index
    %c0_16 = arith.constant 0 : index
    %c0_17 = arith.constant 0 : index
    %22 = vector.load %arg4[%c4, %c0_16, %c0_17] : memref<15x128x128xf32, #tpu.memory_space<vmem>>, vector<1x128x128xf32>
    %23 = vector.shape_cast %22 : vector<1x128x128xf32> to vector<128x128xf32>
    %c0_18 = arith.constant 0 : index
    %c0_19 = arith.constant 0 : index
    %c0_20 = arith.constant 0 : index
    %24 = vector.load %arg5[%c0_18, %c0_19, %c0_20] : memref<12x1x128xf32, #tpu.memory_space<vmem>>, vector<1x1x128xf32>
    %25 = vector.shape_cast %24 : vector<1x1x128xf32> to vector<1x128xf32>
    %c1_21 = arith.constant 1 : index
    %c0_22 = arith.constant 0 : index
    %c0_23 = arith.constant 0 : index
    %26 = vector.load %arg5[%c1_21, %c0_22, %c0_23] : memref<12x1x128xf32, #tpu.memory_space<vmem>>, vector<1x1x128xf32>
    %27 = vector.shape_cast %26 : vector<1x1x128xf32> to vector<1x128xf32>
    %c2_24 = arith.constant 2 : index
    %c0_25 = arith.constant 0 : index
    %c0_26 = arith.constant 0 : index
    %28 = vector.load %arg5[%c2_24, %c0_25, %c0_26] : memref<12x1x128xf32, #tpu.memory_space<vmem>>, vector<1x1x128xf32>
    %29 = vector.shape_cast %28 : vector<1x1x128xf32> to vector<1x128xf32>
    %c3_27 = arith.constant 3 : index
    %c0_28 = arith.constant 0 : index
    %c0_29 = arith.constant 0 : index
    %30 = vector.load %arg5[%c3_27, %c0_28, %c0_29] : memref<12x1x128xf32, #tpu.memory_space<vmem>>, vector<1x1x128xf32>
    %31 = vector.shape_cast %30 : vector<1x1x128xf32> to vector<1x128xf32>
    %cst_30 = arith.constant dense<0.000000e+00> : vector<256x128xf32>
    %32 = tpu.matmul %11, %15, %cst_30 {dimension_numbers = #tpu.dot_dimension_numbers<[1], [0], [0], [1], [0, 0, 1, 1], [], []>} : vector<256x128xf32>, vector<128x128xf32>, vector<256x128xf32> -> vector<256x128xf32>
    %33 = vector.broadcast %25 : vector<1x128xf32> to vector<256x128xf32>
    %34 = arith.addf %32, %33 : vector<256x128xf32>
    %cst_31 = arith.constant 0.000000e+00 : f32
    %35 = vector.broadcast %cst_31 : f32 to vector<256x128xf32>
    %36 = arith.maximumf %34, %35 : vector<256x128xf32>
    %37 = math.absf %34 : vector<256x128xf32>
    %cst_32 = arith.constant 0.000000e+00 : f32
    %38 = vector.broadcast %cst_32 : f32 to vector<256x128xf32>
    %39 = arith.subf %38, %37 : vector<256x128xf32>
    %40 = math.exp %39 : vector<256x128xf32>
    %41 = math.log1p %40 : vector<256x128xf32>
    %42 = arith.addf %36, %41 : vector<256x128xf32>
    %cst_33 = arith.constant 0.693147182 : f32
    %43 = vector.broadcast %cst_33 : f32 to vector<256x128xf32>
    %44 = arith.subf %42, %43 : vector<256x128xf32>
    %cst_34 = arith.constant dense<0.000000e+00> : vector<256x128xf32>
    %45 = tpu.matmul %44, %17, %cst_34 {dimension_numbers = #tpu.dot_dimension_numbers<[1], [0], [0], [1], [0, 0, 1, 1], [], []>} : vector<256x128xf32>, vector<128x128xf32>, vector<256x128xf32> -> vector<256x128xf32>
    %46 = vector.broadcast %27 : vector<1x128xf32> to vector<256x128xf32>
    %47 = arith.addf %45, %46 : vector<256x128xf32>
    %48 = vector.broadcast %3 : vector<256x1xf32> to vector<256x128xf32>
    %49 = arith.mulf %47, %48 : vector<256x128xf32>
    %cst_35 = arith.constant dense<0.000000e+00> : vector<32x128xf32>
    %50 = tpu.matmul %13, %19, %cst_35 {dimension_numbers = #tpu.dot_dimension_numbers<[1], [0], [0], [1], [0, 0, 1, 1], [], []>} : vector<32x128xf32>, vector<128x128xf32>, vector<32x128xf32> -> vector<32x128xf32>
    %51 = vector.shape_cast %49 : vector<256x128xf32> to vector<4x8x8x128xf32>
    %52 = vector.shape_cast %50 : vector<32x128xf32> to vector<4x1x8x128xf32>
    %53 = vector.broadcast %52 : vector<4x1x8x128xf32> to vector<4x8x8x128xf32>
    %54 = arith.mulf %51, %53 : vector<4x8x8x128xf32>
    %cst_36 = arith.constant dense<0.000000e+00> : vector<4x8x128xf32>
    %55 = vector.multi_reduction <add>, %54, %cst_36 [2] : vector<4x8x8x128xf32> to vector<4x8x128xf32>
    %56 = vector.shape_cast %55 : vector<4x8x128xf32> to vector<32x128xf32>
    %cst_37 = arith.constant dense<0.000000e+00> : vector<32x128xf32>
    %57 = tpu.matmul %56, %21, %cst_37 {dimension_numbers = #tpu.dot_dimension_numbers<[1], [0], [0], [1], [0, 0, 1, 1], [], []>} : vector<32x128xf32>, vector<128x128xf32>, vector<32x128xf32> -> vector<32x128xf32>
    %58 = vector.broadcast %29 : vector<1x128xf32> to vector<32x128xf32>
    %59 = arith.addf %57, %58 : vector<32x128xf32>
    %cst_38 = arith.constant 0.000000e+00 : f32
    %60 = vector.broadcast %cst_38 : f32 to vector<32x128xf32>
    %61 = arith.maximumf %59, %60 : vector<32x128xf32>
    %62 = math.absf %59 : vector<32x128xf32>
    %cst_39 = arith.constant 0.000000e+00 : f32
    %63 = vector.broadcast %cst_39 : f32 to vector<32x128xf32>
    %64 = arith.subf %63, %62 : vector<32x128xf32>
    %65 = math.exp %64 : vector<32x128xf32>
    %66 = math.log1p %65 : vector<32x128xf32>
    %67 = arith.addf %61, %66 : vector<32x128xf32>
    %cst_40 = arith.constant 0.693147182 : f32
    %68 = vector.broadcast %cst_40 : f32 to vector<32x128xf32>
    %69 = arith.subf %67, %68 : vector<32x128xf32>
    %cst_41 = arith.constant dense<0.000000e+00> : vector<32x128xf32>
    %70 = tpu.matmul %69, %23, %cst_41 {dimension_numbers = #tpu.dot_dimension_numbers<[1], [0], [0], [1], [0, 0, 1, 1], [], []>} : vector<32x128xf32>, vector<128x128xf32>, vector<32x128xf32> -> vector<32x128xf32>
    %71 = vector.broadcast %31 : vector<1x128xf32> to vector<32x128xf32>
    %72 = arith.addf %70, %71 : vector<32x128xf32>
    %73 = arith.addf %13, %72 : vector<32x128xf32>
    %c5 = arith.constant 5 : index
    %c0_42 = arith.constant 0 : index
    %c0_43 = arith.constant 0 : index
    %74 = vector.load %arg4[%c5, %c0_42, %c0_43] : memref<15x128x128xf32, #tpu.memory_space<vmem>>, vector<1x128x128xf32>
    %75 = vector.shape_cast %74 : vector<1x128x128xf32> to vector<128x128xf32>
    %c6 = arith.constant 6 : index
    %c0_44 = arith.constant 0 : index
    %c0_45 = arith.constant 0 : index
    %76 = vector.load %arg4[%c6, %c0_44, %c0_45] : memref<15x128x128xf32, #tpu.memory_space<vmem>>, vector<1x128x128xf32>
    %77 = vector.shape_cast %76 : vector<1x128x128xf32> to vector<128x128xf32>
    %c7 = arith.constant 7 : index
    %c0_46 = arith.constant 0 : index
    %c0_47 = arith.constant 0 : index
    %78 = vector.load %arg4[%c7, %c0_46, %c0_47] : memref<15x128x128xf32, #tpu.memory_space<vmem>>, vector<1x128x128xf32>
    %79 = vector.shape_cast %78 : vector<1x128x128xf32> to vector<128x128xf32>
    %c8 = arith.constant 8 : index
    %c0_48 = arith.constant 0 : index
    %c0_49 = arith.constant 0 : index
    %80 = vector.load %arg4[%c8, %c0_48, %c0_49] : memref<15x128x128xf32, #tpu.memory_space<vmem>>, vector<1x128x128xf32>
    %81 = vector.shape_cast %80 : vector<1x128x128xf32> to vector<128x128xf32>
    %c9 = arith.constant 9 : index
    %c0_50 = arith.constant 0 : index
    %c0_51 = arith.constant 0 : index
    %82 = vector.load %arg4[%c9, %c0_50, %c0_51] : memref<15x128x128xf32, #tpu.memory_space<vmem>>, vector<1x128x128xf32>
    %83 = vector.shape_cast %82 : vector<1x128x128xf32> to vector<128x128xf32>
    %c4_52 = arith.constant 4 : index
    %c0_53 = arith.constant 0 : index
    %c0_54 = arith.constant 0 : index
    %84 = vector.load %arg5[%c4_52, %c0_53, %c0_54] : memref<12x1x128xf32, #tpu.memory_space<vmem>>, vector<1x1x128xf32>
    %85 = vector.shape_cast %84 : vector<1x1x128xf32> to vector<1x128xf32>
    %c5_55 = arith.constant 5 : index
    %c0_56 = arith.constant 0 : index
    %c0_57 = arith.constant 0 : index
    %86 = vector.load %arg5[%c5_55, %c0_56, %c0_57] : memref<12x1x128xf32, #tpu.memory_space<vmem>>, vector<1x1x128xf32>
    %87 = vector.shape_cast %86 : vector<1x1x128xf32> to vector<1x128xf32>
    %c6_58 = arith.constant 6 : index
    %c0_59 = arith.constant 0 : index
    %c0_60 = arith.constant 0 : index
    %88 = vector.load %arg5[%c6_58, %c0_59, %c0_60] : memref<12x1x128xf32, #tpu.memory_space<vmem>>, vector<1x1x128xf32>
    %89 = vector.shape_cast %88 : vector<1x1x128xf32> to vector<1x128xf32>
    %c7_61 = arith.constant 7 : index
    %c0_62 = arith.constant 0 : index
    %c0_63 = arith.constant 0 : index
    %90 = vector.load %arg5[%c7_61, %c0_62, %c0_63] : memref<12x1x128xf32, #tpu.memory_space<vmem>>, vector<1x1x128xf32>
    %91 = vector.shape_cast %90 : vector<1x1x128xf32> to vector<1x128xf32>
    %cst_64 = arith.constant dense<0.000000e+00> : vector<256x128xf32>
    %92 = tpu.matmul %11, %75, %cst_64 {dimension_numbers = #tpu.dot_dimension_numbers<[1], [0], [0], [1], [0, 0, 1, 1], [], []>} : vector<256x128xf32>, vector<128x128xf32>, vector<256x128xf32> -> vector<256x128xf32>
    %93 = vector.broadcast %85 : vector<1x128xf32> to vector<256x128xf32>
    %94 = arith.addf %92, %93 : vector<256x128xf32>
    %cst_65 = arith.constant 0.000000e+00 : f32
    %95 = vector.broadcast %cst_65 : f32 to vector<256x128xf32>
    %96 = arith.maximumf %94, %95 : vector<256x128xf32>
    %97 = math.absf %94 : vector<256x128xf32>
    %cst_66 = arith.constant 0.000000e+00 : f32
    %98 = vector.broadcast %cst_66 : f32 to vector<256x128xf32>
    %99 = arith.subf %98, %97 : vector<256x128xf32>
    %100 = math.exp %99 : vector<256x128xf32>
    %101 = math.log1p %100 : vector<256x128xf32>
    %102 = arith.addf %96, %101 : vector<256x128xf32>
    %cst_67 = arith.constant 0.693147182 : f32
    %103 = vector.broadcast %cst_67 : f32 to vector<256x128xf32>
    %104 = arith.subf %102, %103 : vector<256x128xf32>
    %cst_68 = arith.constant dense<0.000000e+00> : vector<256x128xf32>
    %105 = tpu.matmul %104, %77, %cst_68 {dimension_numbers = #tpu.dot_dimension_numbers<[1], [0], [0], [1], [0, 0, 1, 1], [], []>} : vector<256x128xf32>, vector<128x128xf32>, vector<256x128xf32> -> vector<256x128xf32>
    %106 = vector.broadcast %87 : vector<1x128xf32> to vector<256x128xf32>
    %107 = arith.addf %105, %106 : vector<256x128xf32>
    %108 = vector.broadcast %3 : vector<256x1xf32> to vector<256x128xf32>
    %109 = arith.mulf %107, %108 : vector<256x128xf32>
    %cst_69 = arith.constant dense<0.000000e+00> : vector<32x128xf32>
    %110 = tpu.matmul %73, %79, %cst_69 {dimension_numbers = #tpu.dot_dimension_numbers<[1], [0], [0], [1], [0, 0, 1, 1], [], []>} : vector<32x128xf32>, vector<128x128xf32>, vector<32x128xf32> -> vector<32x128xf32>
    %111 = vector.shape_cast %109 : vector<256x128xf32> to vector<4x8x8x128xf32>
    %112 = vector.shape_cast %110 : vector<32x128xf32> to vector<4x1x8x128xf32>
    %113 = vector.broadcast %112 : vector<4x1x8x128xf32> to vector<4x8x8x128xf32>
    %114 = arith.mulf %111, %113 : vector<4x8x8x128xf32>
    %cst_70 = arith.constant dense<0.000000e+00> : vector<4x8x128xf32>
    %115 = vector.multi_reduction <add>, %114, %cst_70 [2] : vector<4x8x8x128xf32> to vector<4x8x128xf32>
    %116 = vector.shape_cast %115 : vector<4x8x128xf32> to vector<32x128xf32>
    %cst_71 = arith.constant dense<0.000000e+00> : vector<32x128xf32>
    %117 = tpu.matmul %116, %81, %cst_71 {dimension_numbers = #tpu.dot_dimension_numbers<[1], [0], [0], [1], [0, 0, 1, 1], [], []>} : vector<32x128xf32>, vector<128x128xf32>, vector<32x128xf32> -> vector<32x128xf32>
    %118 = vector.broadcast %89 : vector<1x128xf32> to vector<32x128xf32>
    %119 = arith.addf %117, %118 : vector<32x128xf32>
    %cst_72 = arith.constant 0.000000e+00 : f32
    %120 = vector.broadcast %cst_72 : f32 to vector<32x128xf32>
    %121 = arith.maximumf %119, %120 : vector<32x128xf32>
    %122 = math.absf %119 : vector<32x128xf32>
    %cst_73 = arith.constant 0.000000e+00 : f32
    %123 = vector.broadcast %cst_73 : f32 to vector<32x128xf32>
    %124 = arith.subf %123, %122 : vector<32x128xf32>
    %125 = math.exp %124 : vector<32x128xf32>
    %126 = math.log1p %125 : vector<32x128xf32>
    %127 = arith.addf %121, %126 : vector<32x128xf32>
    %cst_74 = arith.constant 0.693147182 : f32
    %128 = vector.broadcast %cst_74 : f32 to vector<32x128xf32>
    %129 = arith.subf %127, %128 : vector<32x128xf32>
    %cst_75 = arith.constant dense<0.000000e+00> : vector<32x128xf32>
    %130 = tpu.matmul %129, %83, %cst_75 {dimension_numbers = #tpu.dot_dimension_numbers<[1], [0], [0], [1], [0, 0, 1, 1], [], []>} : vector<32x128xf32>, vector<128x128xf32>, vector<32x128xf32> -> vector<32x128xf32>
    %131 = vector.broadcast %91 : vector<1x128xf32> to vector<32x128xf32>
    %132 = arith.addf %130, %131 : vector<32x128xf32>
    %133 = arith.addf %73, %132 : vector<32x128xf32>
    %c10 = arith.constant 10 : index
    %c0_76 = arith.constant 0 : index
    %c0_77 = arith.constant 0 : index
    %134 = vector.load %arg4[%c10, %c0_76, %c0_77] : memref<15x128x128xf32, #tpu.memory_space<vmem>>, vector<1x128x128xf32>
    %135 = vector.shape_cast %134 : vector<1x128x128xf32> to vector<128x128xf32>
    %c11 = arith.constant 11 : index
    %c0_78 = arith.constant 0 : index
    %c0_79 = arith.constant 0 : index
    %136 = vector.load %arg4[%c11, %c0_78, %c0_79] : memref<15x128x128xf32, #tpu.memory_space<vmem>>, vector<1x128x128xf32>
    %137 = vector.shape_cast %136 : vector<1x128x128xf32> to vector<128x128xf32>
    %c12 = arith.constant 12 : index
    %c0_80 = arith.constant 0 : index
    %c0_81 = arith.constant 0 : index
    %138 = vector.load %arg4[%c12, %c0_80, %c0_81] : memref<15x128x128xf32, #tpu.memory_space<vmem>>, vector<1x128x128xf32>
    %139 = vector.shape_cast %138 : vector<1x128x128xf32> to vector<128x128xf32>
    %c13 = arith.constant 13 : index
    %c0_82 = arith.constant 0 : index
    %c0_83 = arith.constant 0 : index
    %140 = vector.load %arg4[%c13, %c0_82, %c0_83] : memref<15x128x128xf32, #tpu.memory_space<vmem>>, vector<1x128x128xf32>
    %141 = vector.shape_cast %140 : vector<1x128x128xf32> to vector<128x128xf32>
    %c14 = arith.constant 14 : index
    %c0_84 = arith.constant 0 : index
    %c0_85 = arith.constant 0 : index
    %142 = vector.load %arg4[%c14, %c0_84, %c0_85] : memref<15x128x128xf32, #tpu.memory_space<vmem>>, vector<1x128x128xf32>
    %143 = vector.shape_cast %142 : vector<1x128x128xf32> to vector<128x128xf32>
    %c8_86 = arith.constant 8 : index
    %c0_87 = arith.constant 0 : index
    %c0_88 = arith.constant 0 : index
    %144 = vector.load %arg5[%c8_86, %c0_87, %c0_88] : memref<12x1x128xf32, #tpu.memory_space<vmem>>, vector<1x1x128xf32>
    %145 = vector.shape_cast %144 : vector<1x1x128xf32> to vector<1x128xf32>
    %c9_89 = arith.constant 9 : index
    %c0_90 = arith.constant 0 : index
    %c0_91 = arith.constant 0 : index
    %146 = vector.load %arg5[%c9_89, %c0_90, %c0_91] : memref<12x1x128xf32, #tpu.memory_space<vmem>>, vector<1x1x128xf32>
    %147 = vector.shape_cast %146 : vector<1x1x128xf32> to vector<1x128xf32>
    %c10_92 = arith.constant 10 : index
    %c0_93 = arith.constant 0 : index
    %c0_94 = arith.constant 0 : index
    %148 = vector.load %arg5[%c10_92, %c0_93, %c0_94] : memref<12x1x128xf32, #tpu.memory_space<vmem>>, vector<1x1x128xf32>
    %149 = vector.shape_cast %148 : vector<1x1x128xf32> to vector<1x128xf32>
    %c11_95 = arith.constant 11 : index
    %c0_96 = arith.constant 0 : index
    %c0_97 = arith.constant 0 : index
    %150 = vector.load %arg5[%c11_95, %c0_96, %c0_97] : memref<12x1x128xf32, #tpu.memory_space<vmem>>, vector<1x1x128xf32>
    %151 = vector.shape_cast %150 : vector<1x1x128xf32> to vector<1x128xf32>
    %cst_98 = arith.constant dense<0.000000e+00> : vector<256x128xf32>
    %152 = tpu.matmul %11, %135, %cst_98 {dimension_numbers = #tpu.dot_dimension_numbers<[1], [0], [0], [1], [0, 0, 1, 1], [], []>} : vector<256x128xf32>, vector<128x128xf32>, vector<256x128xf32> -> vector<256x128xf32>
    %153 = vector.broadcast %145 : vector<1x128xf32> to vector<256x128xf32>
    %154 = arith.addf %152, %153 : vector<256x128xf32>
    %cst_99 = arith.constant 0.000000e+00 : f32
    %155 = vector.broadcast %cst_99 : f32 to vector<256x128xf32>
    %156 = arith.maximumf %154, %155 : vector<256x128xf32>
    %157 = math.absf %154 : vector<256x128xf32>
    %cst_100 = arith.constant 0.000000e+00 : f32
    %158 = vector.broadcast %cst_100 : f32 to vector<256x128xf32>
    %159 = arith.subf %158, %157 : vector<256x128xf32>
    %160 = math.exp %159 : vector<256x128xf32>
    %161 = math.log1p %160 : vector<256x128xf32>
    %162 = arith.addf %156, %161 : vector<256x128xf32>
    %cst_101 = arith.constant 0.693147182 : f32
    %163 = vector.broadcast %cst_101 : f32 to vector<256x128xf32>
    %164 = arith.subf %162, %163 : vector<256x128xf32>
    %cst_102 = arith.constant dense<0.000000e+00> : vector<256x128xf32>
    %165 = tpu.matmul %164, %137, %cst_102 {dimension_numbers = #tpu.dot_dimension_numbers<[1], [0], [0], [1], [0, 0, 1, 1], [], []>} : vector<256x128xf32>, vector<128x128xf32>, vector<256x128xf32> -> vector<256x128xf32>
    %166 = vector.broadcast %147 : vector<1x128xf32> to vector<256x128xf32>
    %167 = arith.addf %165, %166 : vector<256x128xf32>
    %168 = vector.broadcast %3 : vector<256x1xf32> to vector<256x128xf32>
    %169 = arith.mulf %167, %168 : vector<256x128xf32>
    %cst_103 = arith.constant dense<0.000000e+00> : vector<32x128xf32>
    %170 = tpu.matmul %133, %139, %cst_103 {dimension_numbers = #tpu.dot_dimension_numbers<[1], [0], [0], [1], [0, 0, 1, 1], [], []>} : vector<32x128xf32>, vector<128x128xf32>, vector<32x128xf32> -> vector<32x128xf32>
    %171 = vector.shape_cast %169 : vector<256x128xf32> to vector<4x8x8x128xf32>
    %172 = vector.shape_cast %170 : vector<32x128xf32> to vector<4x1x8x128xf32>
    %173 = vector.broadcast %172 : vector<4x1x8x128xf32> to vector<4x8x8x128xf32>
    %174 = arith.mulf %171, %173 : vector<4x8x8x128xf32>
    %cst_104 = arith.constant dense<0.000000e+00> : vector<4x8x128xf32>
    %175 = vector.multi_reduction <add>, %174, %cst_104 [2] : vector<4x8x8x128xf32> to vector<4x8x128xf32>
    %176 = vector.shape_cast %175 : vector<4x8x128xf32> to vector<32x128xf32>
    %cst_105 = arith.constant dense<0.000000e+00> : vector<32x128xf32>
    %177 = tpu.matmul %176, %141, %cst_105 {dimension_numbers = #tpu.dot_dimension_numbers<[1], [0], [0], [1], [0, 0, 1, 1], [], []>} : vector<32x128xf32>, vector<128x128xf32>, vector<32x128xf32> -> vector<32x128xf32>
    %178 = vector.broadcast %149 : vector<1x128xf32> to vector<32x128xf32>
    %179 = arith.addf %177, %178 : vector<32x128xf32>
    %cst_106 = arith.constant 0.000000e+00 : f32
    %180 = vector.broadcast %cst_106 : f32 to vector<32x128xf32>
    %181 = arith.maximumf %179, %180 : vector<32x128xf32>
    %182 = math.absf %179 : vector<32x128xf32>
    %cst_107 = arith.constant 0.000000e+00 : f32
    %183 = vector.broadcast %cst_107 : f32 to vector<32x128xf32>
    %184 = arith.subf %183, %182 : vector<32x128xf32>
    %185 = math.exp %184 : vector<32x128xf32>
    %186 = math.log1p %185 : vector<32x128xf32>
    %187 = arith.addf %181, %186 : vector<32x128xf32>
    %cst_108 = arith.constant 0.693147182 : f32
    %188 = vector.broadcast %cst_108 : f32 to vector<32x128xf32>
    %189 = arith.subf %187, %188 : vector<32x128xf32>
    %cst_109 = arith.constant dense<0.000000e+00> : vector<32x128xf32>
    %190 = tpu.matmul %189, %143, %cst_109 {dimension_numbers = #tpu.dot_dimension_numbers<[1], [0], [0], [1], [0, 0, 1, 1], [], []>} : vector<32x128xf32>, vector<128x128xf32>, vector<32x128xf32> -> vector<32x128xf32>
    %191 = vector.broadcast %151 : vector<1x128xf32> to vector<32x128xf32>
    %192 = arith.addf %190, %191 : vector<32x128xf32>
    %193 = arith.addf %133, %192 : vector<32x128xf32>
    %194 = vector.shape_cast %193 : vector<32x128xf32> to vector<4x8x128xf32>
    %c0_110 = arith.constant 0 : index
    %c0_111 = arith.constant 0 : index
    %c0_112 = arith.constant 0 : index
    %195 = vector.load %arg6[%c0_110, %c0_111, %c0_112] : memref<4x8x128xf32, #tpu.memory_space<vmem>>, vector<4x8x128xf32>
    tpu.vector_store %arg6[%c0_110, %c0_111, %c0_112], %194 {strides = array<i32>} : memref<4x8x128xf32, #tpu.memory_space<vmem>>, vector<4x8x128xf32>,
    return
  }
  func.func @transform_0(%arg0: i32) -> (i32, i32, i32) {
    %c0_i32 = arith.constant 0 : i32
    %c0_i32_0 = arith.constant 0 : i32
    %c0_i32_1 = arith.constant 0 : i32
    return %arg0, %c0_i32, %c0_i32_0 : i32, i32, i32
  }
  func.func @transform_1(%arg0: i32) -> (i32, i32, i32) {
    %c0_i32 = arith.constant 0 : i32
    %c0_i32_0 = arith.constant 0 : i32
    %c0_i32_1 = arith.constant 0 : i32
    return %arg0, %c0_i32, %c0_i32_0 : i32, i32, i32
  }
  func.func @transform_2(%arg0: i32) -> (i32, i32) {
    %c0_i32 = arith.constant 0 : i32
    %c0_i32_0 = arith.constant 0 : i32
    %c0_i32_1 = arith.constant 0 : i32
    return %c0_i32, %c0_i32_0 : i32, i32
  }
  func.func @transform_3(%arg0: i32) -> (i32, i32, i32) {
    %c0_i32 = arith.constant 0 : i32
    %c0_i32_0 = arith.constant 0 : i32
    %c0_i32_1 = arith.constant 0 : i32
    %c0_i32_2 = arith.constant 0 : i32
    return %c0_i32, %c0_i32_0, %c0_i32_1 : i32, i32, i32
  }
  func.func @transform_4(%arg0: i32) -> (i32, i32, i32) {
    %c0_i32 = arith.constant 0 : i32
    %c0_i32_0 = arith.constant 0 : i32
    %c0_i32_1 = arith.constant 0 : i32
    %c0_i32_2 = arith.constant 0 : i32
    return %c0_i32, %c0_i32_0, %c0_i32_1 : i32, i32, i32
  }
  func.func @transform_5(%arg0: i32) -> (i32, i32, i32) {
    %c0_i32 = arith.constant 0 : i32
    %c0_i32_0 = arith.constant 0 : i32
    %c0_i32_1 = arith.constant 0 : i32
    return %arg0, %c0_i32, %c0_i32_0 : i32, i32, i32
  }
}

</mosaic_0001>

<llo_original>
// kernel: tpu_custom_call.1
$region0: #{tpu_custom_call.1}
  #allocation0 [shape = 'u32[]', space=smem, size = 0x4, offset = 0x4, fixed_abs, tag = 'smem constant byte address 0x4 - core index']
  #allocation1 [shape = 'u32[144,128]{1,0:T(1,128)}', space=vmem, size = 0x12000, scoped, tag = 'internal scratch']
  %s0 = inlined_call_operand.vmem [shape: f32[4,64,2], index: 0, kind: input, shape index: {}]
  %s1 = inlined_call_operand.vmem [shape: f32[4,8,128], index: 1, kind: input, shape index: {}]
  %s2 = inlined_call_operand.vmem [shape: f32[1,128], index: 2, kind: input, shape index: {}]
  %s3 = inlined_call_operand.hbm [shape: f32[15,128,128], index: 3, kind: input, shape index: {}]
  %s4 = inlined_call_operand.vmem [shape: f32[12,1,128], index: 4, kind: input, shape index: {}]
  %s5 = inlined_call_operand.hbm [shape: f32[4,8,128], index: 5, kind: output, shape index: {}]
  %s6 = sld [smem:[#allocation0]]
  $region34: #{tpu_custom_call.1} parent=0
    _
  %s8 = ssub.s32 1, %s6
  %s9 = scalar_select 0, %s8, %s6
  $region1: #{tpu_custom_call.1} parent=0
    #allocation2 [shape = 'u8[983040]{0}', space=vmem, size = 0xf0000, scoped, tag = 'input window, operand 3, single buffered']
    #allocation3 [shape = 's32[1]{0}', space=sflag, size = 0x4, scoped, tag = 'scoped memory for tpu_custom_call.1']
    #allocation4 [shape = 's32[1]{0}', space=sflag, size = 0x4, scoped, tag = 'scoped memory for tpu_custom_call.1']
    #allocation5 [shape = 'u8[16384]{0}', space=vmem, size = 0x4000, scoped, tag = 'output window, operand 0, single buffered']
    %10 = vsyncpa [#allocation3], 0
    %11 = vsyncpa [#allocation4], 0
    // Predicated region
    $region2: #{tpu_custom_call.1} parent=1 // pred_check
      _
    $region3: #{tpu_custom_call.1} parent=1 // pred_check_branch
      %13 = sbr.rel (0) target = $region5
    $region4: #{tpu_custom_call.1} parent=1 // pred_region
      _
    $region5: #{tpu_custom_call.1} parent=1 // pred_fallthru
      _
    // Predicated region
    $region6: #{tpu_custom_call.1} parent=1 // pred_check
      _
    $region7: #{tpu_custom_call.1} parent=1 // pred_check_branch
      %15 = sbr.rel (0) target = $region9
    $region8: #{tpu_custom_call.1} parent=1 // pred_region
      _
    $region9: #{tpu_custom_call.1} parent=1 // pred_fallthru
      _
    // Predicated region
    $region10: #{tpu_custom_call.1} parent=1 // pred_check
      _
    $region11: #{tpu_custom_call.1} parent=1 // pred_check_branch
      %17 = sbr.rel (0) target = $region13
    $region12: #{tpu_custom_call.1} parent=1 // pred_region
      _
    $region13: #{tpu_custom_call.1} parent=1 // pred_fallthru
      _
    // Predicated region
    $region14: #{tpu_custom_call.1} parent=1 // pred_check
      _
    $region15: #{tpu_custom_call.1} parent=1 // pred_check_branch
      %19 = sbr.rel (0) target = $region17
    $region16: #{tpu_custom_call.1} parent=1 // pred_region
      %s21 = ssub.s32 30720, 30720
      %22 = vsyncadd [#allocation3], %s21
      %s23 = sshll.u32 [#allocation2], 4
      %s24 = int_to_ptr.vmem [resolvable:$true] %s23
      %29 = dma.hbm_to_vmem [thread:$0]  %s3, 30720, %s24, [#allocation3], 128, 128, 8
    $region17: #{tpu_custom_call.1} parent=1 // pred_fallthru
      _
    // Predicated region
    $region18: #{tpu_custom_call.1} parent=1 // pred_check
      _
    $region19: #{tpu_custom_call.1} parent=1 // pred_check_branch
      %31 = sbr.rel (0) target = $region21
    $region20: #{tpu_custom_call.1} parent=1 // pred_region
      _
    $region21: #{tpu_custom_call.1} parent=1 // pred_fallthru
      _
    // Predicated region
    $region22: #{tpu_custom_call.1} parent=1 // pred_check
      _
    $region23: #{tpu_custom_call.1} parent=1 // pred_check_branch
      %33 = sbr.rel (0) target = $region25
    $region24: #{tpu_custom_call.1} parent=1 // pred_region
      %34 = dma.done [#allocation3], 30720
    $region25: #{tpu_custom_call.1} parent=1 // pred_fallthru
      _
    %v35 = vld [vmem:[%s0] sm:$0xff]
    %v36 = vld [vmem:[%s0 + $0x8] sm:$0xff]
    %v37 = vld [vmem:[%s0 + $0x10] sm:$0xff]
    %v38 = vld [vmem:[%s0 + $0x18] sm:$0xff]
    %v39 = vld [vmem:[%s0 + $0x20] sm:$0xff]
    %v40 = vld [vmem:[%s0 + $0x28] sm:$0xff]
    %v41 = vld [vmem:[%s0 + $0x30] sm:$0xff]
    %v42 = vld [vmem:[%s0 + $0x38] sm:$0xff]
    %v43 = vld [vmem:[%s0 + $0x40] sm:$0xff]
    %v44 = vld [vmem:[%s0 + $0x48] sm:$0xff]
    %v45 = vld [vmem:[%s0 + $0x50] sm:$0xff]
    %v46 = vld [vmem:[%s0 + $0x58] sm:$0xff]
    %v47 = vld [vmem:[%s0 + $0x60] sm:$0xff]
    %v48 = vld [vmem:[%s0 + $0x68] sm:$0xff]
    %v49 = vld [vmem:[%s0 + $0x70] sm:$0xff]
    %v50 = vld [vmem:[%s0 + $0x78] sm:$0xff]
    %v51 = vld [vmem:[%s0 + $0x80] sm:$0xff]
    %v52 = vld [vmem:[%s0 + $0x88] sm:$0xff]
    %v53 = vld [vmem:[%s0 + $0x90] sm:$0xff]
    %v54 = vld [vmem:[%s0 + $0x98] sm:$0xff]
    %v55 = vld [vmem:[%s0 + $0xa0] sm:$0xff]
    %v56 = vld [vmem:[%s0 + $0xa8] sm:$0xff]
    %v57 = vld [vmem:[%s0 + $0xb0] sm:$0xff]
    %v58 = vld [vmem:[%s0 + $0xb8] sm:$0xff]
    %v59 = vld [vmem:[%s0 + $0xc0] sm:$0xff]
    %v60 = vld [vmem:[%s0 + $0xc8] sm:$0xff]
    %v61 = vld [vmem:[%s0 + $0xd0] sm:$0xff]
    %v62 = vld [vmem:[%s0 + $0xd8] sm:$0xff]
    %v63 = vld [vmem:[%s0 + $0xe0] sm:$0xff]
    %v64 = vld [vmem:[%s0 + $0xe8] sm:$0xff]
    %v65 = vld [vmem:[%s0 + $0xf0] sm:$0xff]
    %v66 = vld [vmem:[%s0 + $0xf8] sm:$0xff]
    %v67 = vld [vmem:[%s2] sm:$0x1]
    %69 = vset.pattern.permute.xlu0 0
    %70 = vperm.xlu0 %69, %v35
    %v71 = vpop.permute.xlu0 %70
    %74 = vset.pattern.permute.xlu0 0
    %75 = vperm.xlu0 %74, %v36
    %v76 = vpop.permute.xlu0 %75
    %79 = vset.pattern.permute.xlu0 0
    %80 = vperm.xlu0 %79, %v37
    %v81 = vpop.permute.xlu0 %80
    %84 = vset.pattern.permute.xlu0 0
    %85 = vperm.xlu0 %84, %v38
    %v86 = vpop.permute.xlu0 %85
    %89 = vset.pattern.permute.xlu0 0
    %90 = vperm.xlu0 %89, %v39
    %v91 = vpop.permute.xlu0 %90
    %94 = vset.pattern.permute.xlu0 0
    %95 = vperm.xlu0 %94, %v40
    %v96 = vpop.permute.xlu0 %95
    %99 = vset.pattern.permute.xlu0 0
    %100 = vperm.xlu0 %99, %v41
    %v101 = vpop.permute.xlu0 %100
    %104 = vset.pattern.permute.xlu0 0
    %105 = vperm.xlu0 %104, %v42
    %v106 = vpop.permute.xlu0 %105
    %109 = vset.pattern.permute.xlu0 0
    %110 = vperm.xlu0 %109, %v43
    %v111 = vpop.permute.xlu0 %110
    %114 = vset.pattern.permute.xlu0 0
    %115 = vperm.xlu0 %114, %v44
    %v116 = vpop.permute.xlu0 %115
    %119 = vset.pattern.permute.xlu0 0
    %120 = vperm.xlu0 %119, %v45
    %v121 = vpop.permute.xlu0 %120
    %124 = vset.pattern.permute.xlu0 0
    %125 = vperm.xlu0 %124, %v46
    %v126 = vpop.permute.xlu0 %125
    %129 = vset.pattern.permute.xlu0 0
    %130 = vperm.xlu0 %129, %v47
    %v131 = vpop.permute.xlu0 %130
    %134 = vset.pattern.permute.xlu0 0
    %135 = vperm.xlu0 %134, %v48
    %v136 = vpop.permute.xlu0 %135
    %139 = vset.pattern.permute.xlu0 0
    %140 = vperm.xlu0 %139, %v49
    %v141 = vpop.permute.xlu0 %140
    %144 = vset.pattern.permute.xlu0 0
    %145 = vperm.xlu0 %144, %v50
    %v146 = vpop.permute.xlu0 %145
    %149 = vset.pattern.permute.xlu0 0
    %150 = vperm.xlu0 %149, %v51
    %v151 = vpop.permute.xlu0 %150
    %154 = vset.pattern.permute.xlu0 0
    %155 = vperm.xlu0 %154, %v52
    %v156 = vpop.permute.xlu0 %155
    %159 = vset.pattern.permute.xlu0 0
    %160 = vperm.xlu0 %159, %v53
    %v161 = vpop.permute.xlu0 %160
    %164 = vset.pattern.permute.xlu0 0
    %165 = vperm.xlu0 %164, %v54
    %v166 = vpop.permute.xlu0 %165
    %169 = vset.pattern.permute.xlu0 0
    %170 = vperm.xlu0 %169, %v55
    %v171 = vpop.permute.xlu0 %170
    %174 = vset.pattern.permute.xlu0 0
    %175 = vperm.xlu0 %174, %v56
    %v176 = vpop.permute.xlu0 %175
    %179 = vset.pattern.permute.xlu0 0
    %180 = vperm.xlu0 %179, %v57
    %v181 = vpop.permute.xlu0 %180
    %184 = vset.pattern.permute.xlu0 0
    %185 = vperm.xlu0 %184, %v58
    %v186 = vpop.permute.xlu0 %185
    %189 = vset.pattern.permute.xlu0 0
    %190 = vperm.xlu0 %189, %v59
    %v191 = vpop.permute.xlu0 %190
    %194 = vset.pattern.permute.xlu0 0
    %195 = vperm.xlu0 %194, %v60
    %v196 = vpop.permute.xlu0 %195
    %199 = vset.pattern.permute.xlu0 0
    %200 = vperm.xlu0 %199, %v61
    %v201 = vpop.permute.xlu0 %200
    %204 = vset.pattern.permute.xlu0 0
    %205 = vperm.xlu0 %204, %v62
    %v206 = vpop.permute.xlu0 %205
    %209 = vset.pattern.permute.xlu0 0
    %210 = vperm.xlu0 %209, %v63
    %v211 = vpop.permute.xlu0 %210
    %214 = vset.pattern.permute.xlu0 0
    %215 = vperm.xlu0 %214, %v64
    %v216 = vpop.permute.xlu0 %215
    %219 = vset.pattern.permute.xlu0 0
    %220 = vperm.xlu0 %219, %v65
    %v221 = vpop.permute.xlu0 %220
    %224 = vset.pattern.permute.xlu0 0
    %225 = vperm.xlu0 %224, %v66
    %v226 = vpop.permute.xlu0 %225
    %v229 = vlaneseq
    %v230 = vshrl.u32 %v229, 7
    %v231 = vsub.s32 0, %v230
    %v232 = vrot.slane %v67, %v231
    %v234 = vsub.f32 %v71, %v232
    %v235 = vsub.f32 %v76, %v232
    %v236 = vsub.f32 %v81, %v232
    %v237 = vsub.f32 %v86, %v232
    %v238 = vsub.f32 %v91, %v232
    %v239 = vsub.f32 %v96, %v232
    %v240 = vsub.f32 %v101, %v232
    %v241 = vsub.f32 %v106, %v232
    %v242 = vsub.f32 %v111, %v232
    %v243 = vsub.f32 %v116, %v232
    %v244 = vsub.f32 %v121, %v232
    %v245 = vsub.f32 %v126, %v232
    %v246 = vsub.f32 %v131, %v232
    %v247 = vsub.f32 %v136, %v232
    %v248 = vsub.f32 %v141, %v232
    %v249 = vsub.f32 %v146, %v232
    %v250 = vsub.f32 %v151, %v232
    %v251 = vsub.f32 %v156, %v232
    %v252 = vsub.f32 %v161, %v232
    %v253 = vsub.f32 %v166, %v232
    %v254 = vsub.f32 %v171, %v232
    %v255 = vsub.f32 %v176, %v232
    %v256 = vsub.f32 %v181, %v232
    %v257 = vsub.f32 %v186, %v232
    %v258 = vsub.f32 %v191, %v232
    %v259 = vsub.f32 %v196, %v232
    %v260 = vsub.f32 %v201, %v232
    %v261 = vsub.f32 %v206, %v232
    %v262 = vsub.f32 %v211, %v232
    %v263 = vsub.f32 %v216, %v232
    %v264 = vsub.f32 %v221, %v232
    %v265 = vsub.f32 %v226, %v232
    %v266 = vmul.f32 %v234, -4.8050003
    %v267 = vmul.f32 %v235, -4.8050003
    %v268 = vmul.f32 %v236, -4.8050003
    %v269 = vmul.f32 %v237, -4.8050003
    %v270 = vmul.f32 %v238, -4.8050003
    %v271 = vmul.f32 %v239, -4.8050003
    %v272 = vmul.f32 %v240, -4.8050003
    %v273 = vmul.f32 %v241, -4.8050003
    %v274 = vmul.f32 %v242, -4.8050003
    %v275 = vmul.f32 %v243, -4.8050003
    %v276 = vmul.f32 %v244, -4.8050003
    %v277 = vmul.f32 %v245, -4.8050003
    %v278 = vmul.f32 %v246, -4.8050003
    %v279 = vmul.f32 %v247, -4.8050003
    %v280 = vmul.f32 %v248, -4.8050003
    %v281 = vmul.f32 %v249, -4.8050003
    %v282 = vmul.f32 %v250, -4.8050003
    %v283 = vmul.f32 %v251, -4.8050003
    %v284 = vmul.f32 %v252, -4.8050003
    %v285 = vmul.f32 %v253, -4.8050003
    %v286 = vmul.f32 %v254, -4.8050003
    %v287 = vmul.f32 %v255, -4.8050003
    %v288 = vmul.f32 %v256, -4.8050003
    %v289 = vmul.f32 %v257, -4.8050003
    %v290 = vmul.f32 %v258, -4.8050003
    %v291 = vmul.f32 %v259, -4.8050003
    %v292 = vmul.f32 %v260, -4.8050003
    %v293 = vmul.f32 %v261, -4.8050003
    %v294 = vmul.f32 %v262, -4.8050003
    %v295 = vmul.f32 %v263, -4.8050003
    %v296 = vmul.f32 %v264, -4.8050003
    %v297 = vmul.f32 %v265, -4.8050003
    %v298 = vmul.f32 %v266, %v234
    %v299 = vmul.f32 %v267, %v235
    %v300 = vmul.f32 %v268, %v236
    %v301 = vmul.f32 %v269, %v237
    %v302 = vmul.f32 %v270, %v238
    %v303 = vmul.f32 %v271, %v239
    %v304 = vmul.f32 %v272, %v240
    %v305 = vmul.f32 %v273, %v241
    %v306 = vmul.f32 %v274, %v242
    %v307 = vmul.f32 %v275, %v243
    %v308 = vmul.f32 %v276, %v244
    %v309 = vmul.f32 %v277, %v245
    %v310 = vmul.f32 %v278, %v246
    %v311 = vmul.f32 %v279, %v247
    %v312 = vmul.f32 %v280, %v248
    %v313 = vmul.f32 %v281, %v249
    %v314 = vmul.f32 %v282, %v250
    %v315 = vmul.f32 %v283, %v251
    %v316 = vmul.f32 %v284, %v252
    %v317 = vmul.f32 %v285, %v253
    %v318 = vmul.f32 %v286, %v254
    %v319 = vmul.f32 %v287, %v255
    %v320 = vmul.f32 %v288, %v256
    %v321 = vmul.f32 %v289, %v257
    %v322 = vmul.f32 %v290, %v258
    %v323 = vmul.f32 %v291, %v259
    %v324 = vmul.f32 %v292, %v260
    %v325 = vmul.f32 %v293, %v261
    %v326 = vmul.f32 %v294, %v262
    %v327 = vmul.f32 %v295, %v263
    %v328 = vmul.f32 %v296, %v264
    %v329 = vmul.f32 %v297, %v265
    %v330 = vmul.f32 %v298, 1.442695
    %v331 = vpow.pop %v330
    %v332 = vmul.f32 %v299, 1.442695
    %v333 = vpow.pop %v332
    %v334 = vmul.f32 %v300, 1.442695
    %v335 = vpow.pop %v334
    %v336 = vmul.f32 %v301, 1.442695
    %v337 = vpow.pop %v336
    %v338 = vmul.f32 %v302, 1.442695
    %v339 = vpow.pop %v338
    %v340 = vmul.f32 %v303, 1.442695
    %v341 = vpow.pop %v340
    %v342 = vmul.f32 %v304, 1.442695
    %v343 = vpow.pop %v342
    %v344 = vmul.f32 %v305, 1.442695
    %v345 = vpow.pop %v344
    %v346 = vmul.f32 %v306, 1.442695
    %v347 = vpow.pop %v346
    %v348 = vmul.f32 %v307, 1.442695
    %v349 = vpow.pop %v348
    %v350 = vmul.f32 %v308, 1.442695
    %v351 = vpow.pop %v350
    %v352 = vmul.f32 %v309, 1.442695
    %v353 = vpow.pop %v352
    %v354 = vmul.f32 %v310, 1.442695
    %v355 = vpow.pop %v354
    %v356 = vmul.f32 %v311, 1.442695
    %v357 = vpow.pop %v356
    %v358 = vmul.f32 %v312, 1.442695
    %v359 = vpow.pop %v358
    %v360 = vmul.f32 %v313, 1.442695
    %v361 = vpow.pop %v360
    %v362 = vmul.f32 %v314, 1.442695
    %v363 = vpow.pop %v362
    %v364 = vmul.f32 %v315, 1.442695
    %v365 = vpow.pop %v364
    %v366 = vmul.f32 %v316, 1.442695
    %v367 = vpow.pop %v366
    %v368 = vmul.f32 %v317, 1.442695
    %v369 = vpow.pop %v368
    %v370 = vmul.f32 %v318, 1.442695
    %v371 = vpow.pop %v370
    %v372 = vmul.f32 %v319, 1.442695
    %v373 = vpow.pop %v372
    %v374 = vmul.f32 %v320, 1.442695
    %v375 = vpow.pop %v374
    %v376 = vmul.f32 %v321, 1.442695
    %v377 = vpow.pop %v376
    %v378 = vmul.f32 %v322, 1.442695
    %v379 = vpow.pop %v378
    %v380 = vmul.f32 %v323, 1.442695
    %v381 = vpow.pop %v380
    %v382 = vmul.f32 %v324, 1.442695
    %v383 = vpow.pop %v382
    %v384 = vmul.f32 %v325, 1.442695
    %v385 = vpow.pop %v384
    %v386 = vmul.f32 %v326, 1.442695
    %v387 = vpow.pop %v386
    %v388 = vmul.f32 %v327, 1.442695
    %v389 = vpow.pop %v388
    %v390 = vmul.f32 %v328, 1.442695
    %v391 = vpow.pop %v390
    %v392 = vmul.f32 %v329, 1.442695
    %v393 = vpow.pop %v392
    %v394 = vld [vmem:[%s1] sm:$0xff]
    %v395 = vld [vmem:[%s1 + $0x8] sm:$0xff]
    %v396 = vld [vmem:[%s1 + $0x10] sm:$0xff]
    %v397 = vld [vmem:[%s1 + $0x18] sm:$0xff]
    %v398 = vld [vmem:[#allocation2] sm:$0xff]
    %v399 = vld [vmem:[#allocation2 + $0x8] sm:$0xff]
    %v400 = vld [vmem:[#allocation2 + $0x10] sm:$0xff]
    %v401 = vld [vmem:[#allocation2 + $0x18] sm:$0xff]
    %v402 = vld [vmem:[#allocation2 + $0x20] sm:$0xff]
    %v403 = vld [vmem:[#allocation2 + $0x28] sm:$0xff]
    %v404 = vld [vmem:[#allocation2 + $0x30] sm:$0xff]
    %v405 = vld [vmem:[#allocation2 + $0x38] sm:$0xff]
    %v406 = vld [vmem:[#allocation2 + $0x40] sm:$0xff]
    %v407 = vld [vmem:[#allocation2 + $0x48] sm:$0xff]
    %v408 = vld [vmem:[#allocation2 + $0x50] sm:$0xff]
    %v409 = vld [vmem:[#allocation2 + $0x58] sm:$0xff]
    %v410 = vld [vmem:[#allocation2 + $0x60] sm:$0xff]
    %v411 = vld [vmem:[#allocation2 + $0x68] sm:$0xff]
    %v412 = vld [vmem:[#allocation2 + $0x70] sm:$0xff]
    %v413 = vld [vmem:[#allocation2 + $0x78] sm:$0xff]
    %s414 = scalar_lea.vmem [#allocation2], 128
    %v415 = vld [vmem:[%s414] sm:$0xff]
    %v416 = vld [vmem:[%s414 + $0x8] sm:$0xff]
    %v417 = vld [vmem:[%s414 + $0x10] sm:$0xff]
    %v418 = vld [vmem:[%s414 + $0x18] sm:$0xff]
    %v419 = vld [vmem:[%s414 + $0x20] sm:$0xff]
    %v420 = vld [vmem:[%s414 + $0x28] sm:$0xff]
    %v421 = vld [vmem:[%s414 + $0x30] sm:$0xff]
    %v422 = vld [vmem:[%s414 + $0x38] sm:$0xff]
    %v423 = vld [vmem:[%s414 + $0x40] sm:$0xff]
    %v424 = vld [vmem:[%s414 + $0x48] sm:$0xff]
    %v425 = vld [vmem:[%s414 + $0x50] sm:$0xff]
    %v426 = vld [vmem:[%s414 + $0x58] sm:$0xff]
    %v427 = vld [vmem:[%s414 + $0x60] sm:$0xff]
    %v428 = vld [vmem:[%s414 + $0x68] sm:$0xff]
    %v429 = vld [vmem:[%s414 + $0x70] sm:$0xff]
    %v430 = vld [vmem:[%s414 + $0x78] sm:$0xff]
    %s431 = scalar_lea.vmem [#allocation2], 256
    %v432 = vld [vmem:[%s431] sm:$0xff]
    %v433 = vld [vmem:[%s431 + $0x8] sm:$0xff]
    %v434 = vld [vmem:[%s431 + $0x10] sm:$0xff]
    %v435 = vld [vmem:[%s431 + $0x18] sm:$0xff]
    %v436 = vld [vmem:[%s431 + $0x20] sm:$0xff]
    %v437 = vld [vmem:[%s431 + $0x28] sm:$0xff]
    %v438 = vld [vmem:[%s431 + $0x30] sm:$0xff]
    %v439 = vld [vmem:[%s431 + $0x38] sm:$0xff]
    %v440 = vld [vmem:[%s431 + $0x40] sm:$0xff]
    %v441 = vld [vmem:[%s431 + $0x48] sm:$0xff]
    %v442 = vld [vmem:[%s431 + $0x50] sm:$0xff]
    %v443 = vld [vmem:[%s431 + $0x58] sm:$0xff]
    %v444 = vld [vmem:[%s431 + $0x60] sm:$0xff]
    %v445 = vld [vmem:[%s431 + $0x68] sm:$0xff]
    %v446 = vld [vmem:[%s431 + $0x70] sm:$0xff]
    %v447 = vld [vmem:[%s431 + $0x78] sm:$0xff]
    %s448 = scalar_lea.vmem [#allocation2], 384
    %v449 = vld [vmem:[%s448] sm:$0xff]
    %v450 = vld [vmem:[%s448 + $0x8] sm:$0xff]
    %v451 = vld [vmem:[%s448 + $0x10] sm:$0xff]
    %v452 = vld [vmem:[%s448 + $0x18] sm:$0xff]
    %v453 = vld [vmem:[%s448 + $0x20] sm:$0xff]
    %v454 = vld [vmem:[%s448 + $0x28] sm:$0xff]
    %v455 = vld [vmem:[%s448 + $0x30] sm:$0xff]
    %v456 = vld [vmem:[%s448 + $0x38] sm:$0xff]
    %v457 = vld [vmem:[%s448 + $0x40] sm:$0xff]
    %v458 = vld [vmem:[%s448 + $0x48] sm:$0xff]
    %v459 = vld [vmem:[%s448 + $0x50] sm:$0xff]
    %v460 = vld [vmem:[%s448 + $0x58] sm:$0xff]
    %v461 = vld [vmem:[%s448 + $0x60] sm:$0xff]
    %v462 = vld [vmem:[%s448 + $0x68] sm:$0xff]
    %v463 = vld [vmem:[%s448 + $0x70] sm:$0xff]
    %v464 = vld [vmem:[%s448 + $0x78] sm:$0xff]
    %s465 = scalar_lea.vmem [#allocation2], 512
    %v466 = vld [vmem:[%s465] sm:$0xff]
    %v467 = vld [vmem:[%s465 + $0x8] sm:$0xff]
    %v468 = vld [vmem:[%s465 + $0x10] sm:$0xff]
    %v469 = vld [vmem:[%s465 + $0x18] sm:$0xff]
    %v470 = vld [vmem:[%s465 + $0x20] sm:$0xff]
    %v471 = vld [vmem:[%s465 + $0x28] sm:$0xff]
    %v472 = vld [vmem:[%s465 + $0x30] sm:$0xff]
    %v473 = vld [vmem:[%s465 + $0x38] sm:$0xff]
    %v474 = vld [vmem:[%s465 + $0x40] sm:$0xff]
    %v475 = vld [vmem:[%s465 + $0x48] sm:$0xff]
    %v476 = vld [vmem:[%s465 + $0x50] sm:$0xff]
    %v477 = vld [vmem:[%s465 + $0x58] sm:$0xff]
    %v478 = vld [vmem:[%s465 + $0x60] sm:$0xff]
    %v479 = vld [vmem:[%s465 + $0x68] sm:$0xff]
    %v480 = vld [vmem:[%s465 + $0x70] sm:$0xff]
    %v481 = vld [vmem:[%s465 + $0x78] sm:$0xff]
    %v482 = vld [vmem:[%s4] sm:$0x1]
    %s483 = scalar_lea.vmem %s4, 1
    %v484 = vld [vmem:[%s483] sm:$0x1]
    %s485 = scalar_lea.vmem %s4, 2
    %v486 = vld [vmem:[%s485] sm:$0x1]
    %s487 = scalar_lea.vmem %s4, 3
    %v488 = vld [vmem:[%s487] sm:$0x1]
    %v490 = vlaneseq
    %v491 = vshrl.u32 %v490, 7
    %v492 = vsub.s32 0, %v491
    %v493 = vrot.slane %v482, %v492
    %495 = vmatprep.subr.mxu0 0.0
    %496 = vmatpush1.msra.mxu0 %v398
    %497 = vmatprep.subr.mxu0 0.0
    %498 = vmatpush1.msra.mxu0 %v399
    %499 = vmatprep.subr.mxu0 0.0
    %500 = vmatpush1.msra.mxu0 %v400
    %501 = vmatprep.subr.mxu0 0.0
    %502 = vmatpush1.msra.mxu0 %v401
    %503 = vmatprep.subr.mxu0 0.0
    %504 = vmatpush1.msra.mxu0 %v402
    %505 = vmatprep.subr.mxu0 0.0
    %506 = vmatpush1.msra.mxu0 %v403
    %507 = vmatprep.subr.mxu0 0.0
    %508 = vmatpush1.msra.mxu0 %v404
    %509 = vmatprep.subr.mxu0 0.0
    %510 = vmatpush1.msra.mxu0 %v405
    %511 = vmatprep.subr.mxu0 0.0
    %512 = vmatpush1.msra.mxu0 %v406
    %513 = vmatprep.subr.mxu0 0.0
    %514 = vmatpush1.msra.mxu0 %v407
    %515 = vmatprep.subr.mxu0 0.0
    %516 = vmatpush1.msra.mxu0 %v408
    %517 = vmatprep.subr.mxu0 0.0
    %518 = vmatpush1.msra.mxu0 %v409
    %519 = vmatprep.subr.mxu0 0.0
    %520 = vmatpush1.msra.mxu0 %v410
    %521 = vmatprep.subr.mxu0 0.0
    %522 = vmatpush1.msra.mxu0 %v411
    %523 = vmatprep.subr.mxu0 0.0
    %524 = vmatpush1.msra.mxu0 %v412
    %525 = vmatprep.subr.mxu0 0.0
    %526 = vmatpush1.msra.mxu0 %v413
    %527 = vmatprep.subr.mxu0 0.0
    %528 = vmatpush1.msra.mxu0 0.0
    %529 = vmatprep.subr.mxu0 0.0
    %530 = vmatpush1.msra.mxu0 0.0
    %531 = vmatprep.subr.mxu0 0.0
    %532 = vmatpush1.msra.mxu0 0.0
    %533 = vmatprep.subr.mxu0 0.0
    %534 = vmatpush1.msra.mxu0 0.0
    %535 = vmatprep.subr.mxu0 0.0
    %536 = vmatpush1.msra.mxu0 0.0
    %537 = vmatprep.subr.mxu0 0.0
    %538 = vmatpush1.msra.mxu0 0.0
    %539 = vmatprep.subr.mxu0 0.0
    %540 = vmatpush1.msra.mxu0 0.0
    %541 = vmatprep.subr.mxu0 0.0
    %542 = vmatpush1.msra.mxu0 0.0
    %543 = vmatprep.subr.mxu0 0.0
    %544 = vmatpush1.msra.mxu0 0.0
    %545 = vmatprep.subr.mxu0 0.0
    %546 = vmatpush1.msra.mxu0 0.0
    %547 = vmatprep.subr.mxu0 0.0
    %548 = vmatpush1.msra.mxu0 0.0
    %549 = vmatprep.subr.mxu0 0.0
    %550 = vmatpush1.msra.mxu0 0.0
    %551 = vmatprep.subr.mxu0 0.0
    %552 = vmatpush1.msra.mxu0 0.0
    %553 = vmatprep.subr.mxu0 0.0
    %554 = vmatpush1.msra.mxu0 0.0
    %555 = vmatprep.subr.mxu0 0.0
    %556 = vmatpush1.msra.mxu0 0.0
    %557 = vmatprep.subr.mxu0 0.0
    %558 = vmatpush1.msra.mxu0 0.0
    %559 = vmatprep.mubr.f32.mxu0 0.0
    %560 = vmatmul.mubr.f32.gmra.mrb[0].mxu0 %v331
    %v561 = vpop.f32.mrb[0].mxu0
    %v562 = vadd.f32 %v493, %v561
    %v563 = vpop.f32.mrb[0].mxu0
    %564 = vmatprep.mubr.f32.mxu0 0.0
    %565 = vmatmul.mubr.f32.gmra.mrb[0].mxu0 %v333
    %v566 = vpop.f32.mrb[0].mxu0
    %v567 = vadd.f32 %v493, %v566
    %v568 = vpop.f32.mrb[0].mxu0
    %569 = vmatprep.mubr.f32.mxu0 0.0
    %570 = vmatmul.mubr.f32.gmra.mrb[0].mxu0 %v335
    %v571 = vpop.f32.mrb[0].mxu0
    %v572 = vadd.f32 %v493, %v571
    %v573 = vpop.f32.mrb[0].mxu0
    %574 = vmatprep.mubr.f32.mxu0 0.0
    %575 = vmatmul.mubr.f32.gmra.mrb[0].mxu0 %v337
    %v576 = vpop.f32.mrb[0].mxu0
    %v577 = vadd.f32 %v493, %v576
    %v578 = vpop.f32.mrb[0].mxu0
    %579 = vmatprep.mubr.f32.mxu0 0.0
    %580 = vmatmul.mubr.f32.gmra.mrb[0].mxu0 %v339
    %v581 = vpop.f32.mrb[0].mxu0
    %v582 = vadd.f32 %v493, %v581
    %v583 = vpop.f32.mrb[0].mxu0
    %584 = vmatprep.mubr.f32.mxu0 0.0
    %585 = vmatmul.mubr.f32.gmra.mrb[0].mxu0 %v341
    %v586 = vpop.f32.mrb[0].mxu0
    %v587 = vadd.f32 %v493, %v586
    %v588 = vpop.f32.mrb[0].mxu0
    %589 = vmatprep.mubr.f32.mxu0 0.0
    %590 = vmatmul.mubr.f32.gmra.mrb[0].mxu0 %v343
    %v591 = vpop.f32.mrb[0].mxu0
    %v592 = vadd.f32 %v493, %v591
    %v593 = vpop.f32.mrb[0].mxu0
    %594 = vmatprep.mubr.f32.mxu0 0.0
    %595 = vmatmul.mubr.f32.gmra.mrb[0].mxu0 %v345
    %v596 = vpop.f32.mrb[0].mxu0
    %v597 = vadd.f32 %v493, %v596
    %v598 = vpop.f32.mrb[0].mxu0
    %599 = vmatprep.mubr.f32.mxu0 0.0
    %600 = vmatmul.mubr.f32.gmra.mrb[0].mxu0 %v347
    %v601 = vpop.f32.mrb[0].mxu0
    %v602 = vadd.f32 %v493, %v601
    %v603 = vpop.f32.mrb[0].mxu0
    %604 = vmatprep.mubr.f32.mxu0 0.0
    %605 = vmatmul.mubr.f32.gmra.mrb[0].mxu0 %v349
    %v606 = vpop.f32.mrb[0].mxu0
    %v607 = vadd.f32 %v493, %v606
    %v608 = vpop.f32.mrb[0].mxu0
    %609 = vmatprep.mubr.f32.mxu0 0.0
    %610 = vmatmul.mubr.f32.gmra.mrb[0].mxu0 %v351
    %v611 = vpop.f32.mrb[0].mxu0
    %v612 = vadd.f32 %v493, %v611
    %v613 = vpop.f32.mrb[0].mxu0
    %614 = vmatprep.mubr.f32.mxu0 0.0
    %615 = vmatmul.mubr.f32.gmra.mrb[0].mxu0 %v353
    %v616 = vpop.f32.mrb[0].mxu0
    %v617 = vadd.f32 %v493, %v616
    %v618 = vpop.f32.mrb[0].mxu0
    %619 = vmatprep.mubr.f32.mxu0 0.0
    %620 = vmatmul.mubr.f32.gmra.mrb[0].mxu0 %v355
    %v621 = vpop.f32.mrb[0].mxu0
    %v622 = vadd.f32 %v493, %v621
    %v623 = vpop.f32.mrb[0].mxu0
    %624 = vmatprep.mubr.f32.mxu0 0.0
    %625 = vmatmul.mubr.f32.gmra.mrb[0].mxu0 %v357
    %v626 = vpop.f32.mrb[0].mxu0
    %v627 = vadd.f32 %v493, %v626
    %v628 = vpop.f32.mrb[0].mxu0
    %629 = vmatprep.mubr.f32.mxu0 0.0
    %630 = vmatmul.mubr.f32.gmra.mrb[0].mxu0 %v359
    %v631 = vpop.f32.mrb[0].mxu0
    %v632 = vadd.f32 %v493, %v631
    %v633 = vpop.f32.mrb[0].mxu0
    %634 = vmatprep.mubr.f32.mxu0 0.0
    %635 = vmatmul.mubr.f32.gmra.mrb[0].mxu0 %v361
    %v636 = vpop.f32.mrb[0].mxu0
    %v637 = vadd.f32 %v493, %v636
    %v638 = vpop.f32.mrb[0].mxu0
    %639 = vmatprep.mubr.f32.mxu0 0.0
    %640 = vmatmul.mubr.f32.gmra.mrb[0].mxu0 %v363
    %v641 = vpop.f32.mrb[0].mxu0
    %v642 = vadd.f32 %v493, %v641
    %v643 = vpop.f32.mrb[0].mxu0
    %644 = vmatprep.mubr.f32.mxu0 0.0
    %645 = vmatmul.mubr.f32.gmra.mrb[0].mxu0 %v365
    %v646 = vpop.f32.mrb[0].mxu0
    %v647 = vadd.f32 %v493, %v646
    %v648 = vpop.f32.mrb[0].mxu0
    %649 = vmatprep.mubr.f32.mxu0 0.0
    %650 = vmatmul.mubr.f32.gmra.mrb[0].mxu0 %v367
    %v651 = vpop.f32.mrb[0].mxu0
    %v652 = vadd.f32 %v493, %v651
    %v653 = vpop.f32.mrb[0].mxu0
    %654 = vmatprep.mubr.f32.mxu0 0.0
    %655 = vmatmul.mubr.f32.gmra.mrb[0].mxu0 %v369
    %v656 = vpop.f32.mrb[0].mxu0
    %v657 = vadd.f32 %v493, %v656
    %v658 = vpop.f32.mrb[0].mxu0
    %659 = vmatprep.mubr.f32.mxu0 0.0
    %660 = vmatmul.mubr.f32.gmra.mrb[0].mxu0 %v371
    %v661 = vpop.f32.mrb[0].mxu0
    %v662 = vadd.f32 %v493, %v661
    %v663 = vpop.f32.mrb[0].mxu0
    %664 = vmatprep.mubr.f32.mxu0 0.0
    %665 = vmatmul.mubr.f32.gmra.mrb[0].mxu0 %v373
    %v666 = vpop.f32.mrb[0].mxu0
    %v667 = vadd.f32 %v493, %v666
    %v668 = vpop.f32.mrb[0].mxu0
    %669 = vmatprep.mubr.f32.mxu0 0.0
    %670 = vmatmul.mubr.f32.gmra.mrb[0].mxu0 %v375
    %v671 = vpop.f32.mrb[0].mxu0
    %v672 = vadd.f32 %v493, %v671
    %v673 = vpop.f32.mrb[0].mxu0
    %674 = vmatprep.mubr.f32.mxu0 0.0
    %675 = vmatmul.mubr.f32.gmra.mrb[0].mxu0 %v377
    %v676 = vpop.f32.mrb[0].mxu0
    %v677 = vadd.f32 %v493, %v676
    %v678 = vpop.f32.mrb[0].mxu0
    %679 = vmatprep.mubr.f32.mxu0 0.0
    %680 = vmatmul.mubr.f32.gmra.mrb[0].mxu0 %v379
    %v681 = vpop.f32.mrb[0].mxu0
    %v682 = vadd.f32 %v493, %v681
    %v683 = vpop.f32.mrb[0].mxu0
    %684 = vmatprep.mubr.f32.mxu0 0.0
    %685 = vmatmul.mubr.f32.gmra.mrb[0].mxu0 %v381
    %v686 = vpop.f32.mrb[0].mxu0
    %v687 = vadd.f32 %v493, %v686
    %v688 = vpop.f32.mrb[0].mxu0
    %689 = vmatprep.mubr.f32.mxu0 0.0
    %690 = vmatmul.mubr.f32.gmra.mrb[0].mxu0 %v383
    %v691 = vpop.f32.mrb[0].mxu0
    %v692 = vadd.f32 %v493, %v691
    %v693 = vpop.f32.mrb[0].mxu0
    %694 = vmatprep.mubr.f32.mxu0 0.0
    %695 = vmatmul.mubr.f32.gmra.mrb[0].mxu0 %v385
    %v696 = vpop.f32.mrb[0].mxu0
    %v697 = vadd.f32 %v493, %v696
    %v698 = vpop.f32.mrb[0].mxu0
    %699 = vmatprep.mubr.f32.mxu0 0.0
    %700 = vmatmul.mubr.f32.gmra.mrb[0].mxu0 %v387
    %v701 = vpop.f32.mrb[0].mxu0
    %v702 = vadd.f32 %v493, %v701
    %v703 = vpop.f32.mrb[0].mxu0
    %704 = vmatprep.mubr.f32.mxu0 0.0
    %705 = vmatmul.mubr.f32.gmra.mrb[0].mxu0 %v389
    %v706 = vpop.f32.mrb[0].mxu0
    %v707 = vadd.f32 %v493, %v706
    %v708 = vpop.f32.mrb[0].mxu0
    %709 = vmatprep.mubr.f32.mxu0 0.0
    %710 = vmatmul.mubr.f32.gmra.mrb[0].mxu0 %v391
    %v711 = vpop.f32.mrb[0].mxu0
    %v712 = vadd.f32 %v493, %v711
    %v713 = vpop.f32.mrb[0].mxu0
    %714 = vmatprep.mubr.f32.mxu0 0.0
    %715 = vmatmul.mubr.f32.gmra.mrb[0].mxu0 %v393
    %v716 = vpop.f32.mrb[0].mxu0
    %v717 = vadd.f32 %v493, %v716
    %v718 = vpop.f32.mrb[0].mxu0
    %719 = vdwg.mxu0
    %v720 = vmax.f32 %v562, 0.0
    %v721 = vmax.f32 %v567, 0.0
    %v722 = vmax.f32 %v572, 0.0
    %v723 = vmax.f32 %v577, 0.0
    %v724 = vmax.f32 %v582, 0.0
    %v725 = vmax.f32 %v587, 0.0
    %v726 = vmax.f32 %v592, 0.0
    %v727 = vmax.f32 %v597, 0.0
    %v728 = vmax.f32 %v602, 0.0
    %v729 = vmax.f32 %v607, 0.0
    %v730 = vmax.f32 %v612, 0.0
    %v731 = vmax.f32 %v617, 0.0
    %v732 = vmax.f32 %v622, 0.0
    %v733 = vmax.f32 %v627, 0.0
    %v734 = vmax.f32 %v632, 0.0
    %v735 = vmax.f32 %v637, 0.0
    %v736 = vmax.f32 %v642, 0.0
    %v737 = vmax.f32 %v647, 0.0
    %v738 = vmax.f32 %v652, 0.0
    %v739 = vmax.f32 %v657, 0.0
    %v740 = vmax.f32 %v662, 0.0
    %v741 = vmax.f32 %v667, 0.0
    %v742 = vmax.f32 %v672, 0.0
    %v743 = vmax.f32 %v677, 0.0
    %v744 = vmax.f32 %v682, 0.0
    %v745 = vmax.f32 %v687, 0.0
    %v746 = vmax.f32 %v692, 0.0
    %v747 = vmax.f32 %v697, 0.0
    %v748 = vmax.f32 %v702, 0.0
    %v749 = vmax.f32 %v707, 0.0
    %v750 = vmax.f32 %v712, 0.0
    %v751 = vmax.f32 %v717, 0.0
    %v752 = vand.u32 2147483647, %v562
    %v753 = vand.u32 2147483647, %v567
    %v754 = vand.u32 2147483647, %v572
    %v755 = vand.u32 2147483647, %v577
    %v756 = vand.u32 2147483647, %v582
    %v757 = vand.u32 2147483647, %v587
    %v758 = vand.u32 2147483647, %v592
    %v759 = vand.u32 2147483647, %v597
    %v760 = vand.u32 2147483647, %v602
    %v761 = vand.u32 2147483647, %v607
    %v762 = vand.u32 2147483647, %v612
    %v763 = vand.u32 2147483647, %v617
    %v764 = vand.u32 2147483647, %v622
    %v765 = vand.u32 2147483647, %v627
    %v766 = vand.u32 2147483647, %v632
    %v767 = vand.u32 2147483647, %v637
    %v768 = vand.u32 2147483647, %v642
    %v769 = vand.u32 2147483647, %v647
    %v770 = vand.u32 2147483647, %v652
    %v771 = vand.u32 2147483647, %v657
    %v772 = vand.u32 2147483647, %v662
    %v773 = vand.u32 2147483647, %v667
    %v774 = vand.u32 2147483647, %v672
    %v775 = vand.u32 2147483647, %v677
    %v776 = vand.u32 2147483647, %v682
    %v777 = vand.u32 2147483647, %v687
    %v778 = vand.u32 2147483647, %v692
    %v779 = vand.u32 2147483647, %v697
    %v780 = vand.u32 2147483647, %v702
    %v781 = vand.u32 2147483647, %v707
    %v782 = vand.u32 2147483647, %v712
    %v783 = vand.u32 2147483647, %v717
    %v784 = vsub.f32 0.0, %v752
    %v785 = vsub.f32 0.0, %v753
    %v786 = vsub.f32 0.0, %v754
    %v787 = vsub.f32 0.0, %v755
    %v788 = vsub.f32 0.0, %v756
    %v789 = vsub.f32 0.0, %v757
    %v790 = vsub.f32 0.0, %v758
    %v791 = vsub.f32 0.0, %v759
    %v792 = vsub.f32 0.0, %v760
    %v793 = vsub.f32 0.0, %v761
    %v794 = vsub.f32 0.0, %v762
    %v795 = vsub.f32 0.0, %v763
    %v796 = vsub.f32 0.0, %v764
    %v797 = vsub.f32 0.0, %v765
    %v798 = vsub.f32 0.0, %v766
    %v799 = vsub.f32 0.0, %v767
    %v800 = vsub.f32 0.0, %v768
    %v801 = vsub.f32 0.0, %v769
    %v802 = vsub.f32 0.0, %v770
    %v803 = vsub.f32 0.0, %v771
    %v804 = vsub.f32 0.0, %v772
    %v805 = vsub.f32 0.0, %v773
    %v806 = vsub.f32 0.0, %v774
    %v807 = vsub.f32 0.0, %v775
    %v808 = vsub.f32 0.0, %v776
    %v809 = vsub.f32 0.0, %v777
    %v810 = vsub.f32 0.0, %v778
    %v811 = vsub.f32 0.0, %v779
    %v812 = vsub.f32 0.0, %v780
    %v813 = vsub.f32 0.0, %v781
    %v814 = vsub.f32 0.0, %v782
    %v815 = vsub.f32 0.0, %v783
    %v816 = vmul.f32 %v784, 1.442695
    %v817 = vpow.pop %v816
    %v818 = vmul.f32 %v785, 1.442695
    %v819 = vpow.pop %v818
    %v820 = vmul.f32 %v786, 1.442695
    %v821 = vpow.pop %v820
    %v822 = vmul.f32 %v787, 1.442695
    %v823 = vpow.pop %v822
    %v824 = vmul.f32 %v788, 1.442695
    %v825 = vpow.pop %v824
    %v826 = vmul.f32 %v789, 1.442695
    %v827 = vpow.pop %v826
    %v828 = vmul.f32 %v790, 1.442695
    %v829 = vpow.pop %v828
    %v830 = vmul.f32 %v791, 1.442695
    %v831 = vpow.pop %v830
    %v832 = vmul.f32 %v792, 1.442695
    %v833 = vpow.pop %v832
    %v834 = vmul.f32 %v793, 1.442695
    %v835 = vpow.pop %v834
    %v836 = vmul.f32 %v794, 1.442695
    %v837 = vpow.pop %v836
    %v838 = vmul.f32 %v795, 1.442695
    %v839 = vpow.pop %v838
    %v840 = vmul.f32 %v796, 1.442695
    %v841 = vpow.pop %v840
    %v842 = vmul.f32 %v797, 1.442695
    %v843 = vpow.pop %v842
    %v844 = vmul.f32 %v798, 1.442695
    %v845 = vpow.pop %v844
    %v846 = vmul.f32 %v799, 1.442695
    %v847 = vpow.pop %v846
    %v848 = vmul.f32 %v800, 1.442695
    %v849 = vpow.pop %v848
    %v850 = vmul.f32 %v801, 1.442695
    %v851 = vpow.pop %v850
    %v852 = vmul.f32 %v802, 1.442695
    %v853 = vpow.pop %v852
    %v854 = vmul.f32 %v803, 1.442695
    %v855 = vpow.pop %v854
    %v856 = vmul.f32 %v804, 1.442695
    %v857 = vpow.pop %v856
    %v858 = vmul.f32 %v805, 1.442695
    %v859 = vpow.pop %v858
    %v860 = vmul.f32 %v806, 1.442695
    %v861 = vpow.pop %v860
    %v862 = vmul.f32 %v807, 1.442695
    %v863 = vpow.pop %v862
    %v864 = vmul.f32 %v808, 1.442695
    %v865 = vpow.pop %v864
    %v866 = vmul.f32 %v809, 1.442695
    %v867 = vpow.pop %v866
    %v868 = vmul.f32 %v810, 1.442695
    %v869 = vpow.pop %v868
    %v870 = vmul.f32 %v811, 1.442695
    %v871 = vpow.pop %v870
    %v872 = vmul.f32 %v812, 1.442695
    %v873 = vpow.pop %v872
    %v874 = vmul.f32 %v813, 1.442695
    %v875 = vpow.pop %v874
    %v876 = vmul.f32 %v814, 1.442695
    %v877 = vpow.pop %v876
    %v878 = vmul.f32 %v815, 1.442695
    %v879 = vpow.pop %v878
    %v880 = vadd.f32 %v817, 1.0
    %v881 = vlog2.pop %v880
    %v882 = vmul.f32 %v881, 0.6931472
    %v883 = vmul.f32 -0.5, %v817
    %v884 = vadd.f32 %v883, 1.0
    %v885 = vmul.f32 %v884, %v817
    %v886 = vand.u32 2147483647, %v817
    %vm887 = vcmp.lt.f32.partialorder %v886, 0.0004427343
    %v888 = vsel %vm887, %v885, %v882
    %v889 = vadd.f32 %v819, 1.0
    %v890 = vlog2.pop %v889
    %v891 = vmul.f32 %v890, 0.6931472
    %v892 = vmul.f32 -0.5, %v819
    %v893 = vadd.f32 %v892, 1.0
    %v894 = vmul.f32 %v893, %v819
    %v895 = vand.u32 2147483647, %v819
    %vm896 = vcmp.lt.f32.partialorder %v895, 0.0004427343
    %v897 = vsel %vm896, %v894, %v891
    %v898 = vadd.f32 %v821, 1.0
    %v899 = vlog2.pop %v898
    %v900 = vmul.f32 %v899, 0.6931472
    %v901 = vmul.f32 -0.5, %v821
    %v902 = vadd.f32 %v901, 1.0
    %v903 = vmul.f32 %v902, %v821
    %v904 = vand.u32 2147483647, %v821
    %vm905 = vcmp.lt.f32.partialorder %v904, 0.0004427343
    %v906 = vsel %vm905, %v903, %v900
    %v907 = vadd.f32 %v823, 1.0
    %v908 = vlog2.pop %v907
    %v909 = vmul.f32 %v908, 0.6931472
    %v910 = vmul.f32 -0.5, %v823
    %v911 = vadd.f32 %v910, 1.0
    %v912 = vmul.f32 %v911, %v823
    %v913 = vand.u32 2147483647, %v823
    %vm914 = vcmp.lt.f32.partialorder %v913, 0.0004427343
    %v915 = vsel %vm914, %v912, %v909
    %v916 = vadd.f32 %v825, 1.0
    %v917 = vlog2.pop %v916
    %v918 = vmul.f32 %v917, 0.6931472
    %v919 = vmul.f32 -0.5, %v825
    %v920 = vadd.f32 %v919, 1.0
    %v921 = vmul.f32 %v920, %v825
    %v922 = vand.u32 2147483647, %v825
    %vm923 = vcmp.lt.f32.partialorder %v922, 0.0004427343
    %v924 = vsel %vm923, %v921, %v918
    %v925 = vadd.f32 %v827, 1.0
    %v926 = vlog2.pop %v925
    %v927 = vmul.f32 %v926, 0.6931472
    %v928 = vmul.f32 -0.5, %v827
    %v929 = vadd.f32 %v928, 1.0
    %v930 = vmul.f32 %v929, %v827
    %v931 = vand.u32 2147483647, %v827
    %vm932 = vcmp.lt.f32.partialorder %v931, 0.0004427343
    %v933 = vsel %vm932, %v930, %v927
    %v934 = vadd.f32 %v829, 1.0
    %v935 = vlog2.pop %v934
    %v936 = vmul.f32 %v935, 0.6931472
    %v937 = vmul.f32 -0.5, %v829
    %v938 = vadd.f32 %v937, 1.0
    %v939 = vmul.f32 %v938, %v829
    %v940 = vand.u32 2147483647, %v829
    %vm941 = vcmp.lt.f32.partialorder %v940, 0.0004427343
    %v942 = vsel %vm941, %v939, %v936
    %v943 = vadd.f32 %v831, 1.0
    %v944 = vlog2.pop %v943
    %v945 = vmul.f32 %v944, 0.6931472
    %v946 = vmul.f32 -0.5, %v831
    %v947 = vadd.f32 %v946, 1.0
    %v948 = vmul.f32 %v947, %v831
    %v949 = vand.u32 2147483647, %v831
    %vm950 = vcmp.lt.f32.partialorder %v949, 0.0004427343
    %v951 = vsel %vm950, %v948, %v945
    %v952 = vadd.f32 %v833, 1.0
    %v953 = vlog2.pop %v952
    %v954 = vmul.f32 %v953, 0.6931472
    %v955 = vmul.f32 -0.5, %v833
    %v956 = vadd.f32 %v955, 1.0
    %v957 = vmul.f32 %v956, %v833
    %v958 = vand.u32 2147483647, %v833
    %vm959 = vcmp.lt.f32.partialorder %v958, 0.0004427343
    %v960 = vsel %vm959, %v957, %v954
    %v961 = vadd.f32 %v835, 1.0
    %v962 = vlog2.pop %v961
    %v963 = vmul.f32 %v962, 0.6931472
    %v964 = vmul.f32 -0.5, %v835
    %v965 = vadd.f32 %v964, 1.0
    %v966 = vmul.f32 %v965, %v835
    %v967 = vand.u32 2147483647, %v835
    %vm968 = vcmp.lt.f32.partialorder %v967, 0.0004427343
    %v969 = vsel %vm968, %v966, %v963
    %v970 = vadd.f32 %v837, 1.0
    %v971 = vlog2.pop %v970
    %v972 = vmul.f32 %v971, 0.6931472
    %v973 = vmul.f32 -0.5, %v837
    %v974 = vadd.f32 %v973, 1.0
    %v975 = vmul.f32 %v974, %v837
    %v976 = vand.u32 2147483647, %v837
    %vm977 = vcmp.lt.f32.partialorder %v976, 0.0004427343
    %v978 = vsel %vm977, %v975, %v972
    %v979 = vadd.f32 %v839, 1.0
    %v980 = vlog2.pop %v979
    %v981 = vmul.f32 %v980, 0.6931472
    %v982 = vmul.f32 -0.5, %v839
    %v983 = vadd.f32 %v982, 1.0
    %v984 = vmul.f32 %v983, %v839
    %v985 = vand.u32 2147483647, %v839
    %vm986 = vcmp.lt.f32.partialorder %v985, 0.0004427343
    %v987 = vsel %vm986, %v984, %v981
    %v988 = vadd.f32 %v841, 1.0
    %v989 = vlog2.pop %v988
    %v990 = vmul.f32 %v989, 0.6931472
    %v991 = vmul.f32 -0.5, %v841
    %v992 = vadd.f32 %v991, 1.0
    %v993 = vmul.f32 %v992, %v841
    %v994 = vand.u32 2147483647, %v841
    %vm995 = vcmp.lt.f32.partialorder %v994, 0.0004427343
    %v996 = vsel %vm995, %v993, %v990
    %v997 = vadd.f32 %v843, 1.0
    %v998 = vlog2.pop %v997
    %v999 = vmul.f32 %v998, 0.6931472
    %v1000 = vmul.f32 -0.5, %v843
    %v1001 = vadd.f32 %v1000, 1.0
    %v1002 = vmul.f32 %v1001, %v843
    %v1003 = vand.u32 2147483647, %v843
    %vm1004 = vcmp.lt.f32.partialorder %v1003, 0.0004427343
    %v1005 = vsel %vm1004, %v1002, %v999
    %v1006 = vadd.f32 %v845, 1.0
    %v1007 = vlog2.pop %v1006
    %v1008 = vmul.f32 %v1007, 0.6931472
    %v1009 = vmul.f32 -0.5, %v845
    %v1010 = vadd.f32 %v1009, 1.0
    %v1011 = vmul.f32 %v1010, %v845
    %v1012 = vand.u32 2147483647, %v845
    %vm1013 = vcmp.lt.f32.partialorder %v1012, 0.0004427343
    %v1014 = vsel %vm1013, %v1011, %v1008
    %v1015 = vadd.f32 %v847, 1.0
    %v1016 = vlog2.pop %v1015
    %v1017 = vmul.f32 %v1016, 0.6931472
    %v1018 = vmul.f32 -0.5, %v847
    %v1019 = vadd.f32 %v1018, 1.0
    %v1020 = vmul.f32 %v1019, %v847
    %v1021 = vand.u32 2147483647, %v847
    %vm1022 = vcmp.lt.f32.partialorder %v1021, 0.0004427343
    %v1023 = vsel %vm1022, %v1020, %v1017
    %v1024 = vadd.f32 %v849, 1.0
    %v1025 = vlog2.pop %v1024
    %v1026 = vmul.f32 %v1025, 0.6931472
    %v1027 = vmul.f32 -0.5, %v849
    %v1028 = vadd.f32 %v1027, 1.0
    %v1029 = vmul.f32 %v1028, %v849
    %v1030 = vand.u32 2147483647, %v849
    %vm1031 = vcmp.lt.f32.partialorder %v1030, 0.0004427343
    %v1032 = vsel %vm1031, %v1029, %v1026
    %v1033 = vadd.f32 %v851, 1.0
    %v1034 = vlog2.pop %v1033
    %v1035 = vmul.f32 %v1034, 0.6931472
    %v1036 = vmul.f32 -0.5, %v851
    %v1037 = vadd.f32 %v1036, 1.0
    %v1038 = vmul.f32 %v1037, %v851
    %v1039 = vand.u32 2147483647, %v851
    %vm1040 = vcmp.lt.f32.partialorder %v1039, 0.0004427343
    %v1041 = vsel %vm1040, %v1038, %v1035
    %v1042 = vadd.f32 %v853, 1.0
    %v1043 = vlog2.pop %v1042
    %v1044 = vmul.f32 %v1043, 0.6931472
    %v1045 = vmul.f32 -0.5, %v853
    %v1046 = vadd.f32 %v1045, 1.0
    %v1047 = vmul.f32 %v1046, %v853
    %v1048 = vand.u32 2147483647, %v853
    %vm1049 = vcmp.lt.f32.partialorder %v1048, 0.0004427343
    %v1050 = vsel %vm1049, %v1047, %v1044
    %v1051 = vadd.f32 %v855, 1.0
    %v1052 = vlog2.pop %v1051
    %v1053 = vmul.f32 %v1052, 0.6931472
    %v1054 = vmul.f32 -0.5, %v855
    %v1055 = vadd.f32 %v1054, 1.0
    %v1056 = vmul.f32 %v1055, %v855
    %v1057 = vand.u32 2147483647, %v855
    %vm1058 = vcmp.lt.f32.partialorder %v1057, 0.0004427343
    %v1059 = vsel %vm1058, %v1056, %v1053
    %v1060 = vadd.f32 %v857, 1.0
    %v1061 = vlog2.pop %v1060
    %v1062 = vmul.f32 %v1061, 0.6931472
    %v1063 = vmul.f32 -0.5, %v857
    %v1064 = vadd.f32 %v1063, 1.0
    %v1065 = vmul.f32 %v1064, %v857
    %v1066 = vand.u32 2147483647, %v857
    %vm1067 = vcmp.lt.f32.partialorder %v1066, 0.0004427343
    %v1068 = vsel %vm1067, %v1065, %v1062
    %v1069 = vadd.f32 %v859, 1.0
    %v1070 = vlog2.pop %v1069
    %v1071 = vmul.f32 %v1070, 0.6931472
    %v1072 = vmul.f32 -0.5, %v859
    %v1073 = vadd.f32 %v1072, 1.0
    %v1074 = vmul.f32 %v1073, %v859
    %v1075 = vand.u32 2147483647, %v859
    %vm1076 = vcmp.lt.f32.partialorder %v1075, 0.0004427343
    %v1077 = vsel %vm1076, %v1074, %v1071
    %v1078 = vadd.f32 %v861, 1.0
    %v1079 = vlog2.pop %v1078
    %v1080 = vmul.f32 %v1079, 0.6931472
    %v1081 = vmul.f32 -0.5, %v861
    %v1082 = vadd.f32 %v1081, 1.0
    %v1083 = vmul.f32 %v1082, %v861
    %v1084 = vand.u32 2147483647, %v861
    %vm1085 = vcmp.lt.f32.partialorder %v1084, 0.0004427343
    %v1086 = vsel %vm1085, %v1083, %v1080
    %v1087 = vadd.f32 %v863, 1.0
    %v1088 = vlog2.pop %v1087
    %v1089 = vmul.f32 %v1088, 0.6931472
    %v1090 = vmul.f32 -0.5, %v863
    %v1091 = vadd.f32 %v1090, 1.0
    %v1092 = vmul.f32 %v1091, %v863
    %v1093 = vand.u32 2147483647, %v863
    %vm1094 = vcmp.lt.f32.partialorder %v1093, 0.0004427343
    %v1095 = vsel %vm1094, %v1092, %v1089
    %v1096 = vadd.f32 %v865, 1.0
    %v1097 = vlog2.pop %v1096
    %v1098 = vmul.f32 %v1097, 0.6931472
    %v1099 = vmul.f32 -0.5, %v865
    %v1100 = vadd.f32 %v1099, 1.0
    %v1101 = vmul.f32 %v1100, %v865
    %v1102 = vand.u32 2147483647, %v865
    %vm1103 = vcmp.lt.f32.partialorder %v1102, 0.0004427343
    %v1104 = vsel %vm1103, %v1101, %v1098
    %v1105 = vadd.f32 %v867, 1.0
    %v1106 = vlog2.pop %v1105
    %v1107 = vmul.f32 %v1106, 0.6931472
    %v1108 = vmul.f32 -0.5, %v867
    %v1109 = vadd.f32 %v1108, 1.0
    %v1110 = vmul.f32 %v1109, %v867
    %v1111 = vand.u32 2147483647, %v867
    %vm1112 = vcmp.lt.f32.partialorder %v1111, 0.0004427343
    %v1113 = vsel %vm1112, %v1110, %v1107
    %v1114 = vadd.f32 %v869, 1.0
    %v1115 = vlog2.pop %v1114
    %v1116 = vmul.f32 %v1115, 0.6931472
    %v1117 = vmul.f32 -0.5, %v869
    %v1118 = vadd.f32 %v1117, 1.0
    %v1119 = vmul.f32 %v1118, %v869
    %v1120 = vand.u32 2147483647, %v869
    %vm1121 = vcmp.lt.f32.partialorder %v1120, 0.0004427343
    %v1122 = vsel %vm1121, %v1119, %v1116
    %v1123 = vadd.f32 %v871, 1.0
    %v1124 = vlog2.pop %v1123
    %v1125 = vmul.f32 %v1124, 0.6931472
    %v1126 = vmul.f32 -0.5, %v871
    %v1127 = vadd.f32 %v1126, 1.0
    %v1128 = vmul.f32 %v1127, %v871
    %v1129 = vand.u32 2147483647, %v871
    %vm1130 = vcmp.lt.f32.partialorder %v1129, 0.0004427343
    %v1131 = vsel %vm1130, %v1128, %v1125
    %v1132 = vadd.f32 %v873, 1.0
    %v1133 = vlog2.pop %v1132
    %v1134 = vmul.f32 %v1133, 0.6931472
    %v1135 = vmul.f32 -0.5, %v873
    %v1136 = vadd.f32 %v1135, 1.0
    %v1137 = vmul.f32 %v1136, %v873
    %v1138 = vand.u32 2147483647, %v873
    %vm1139 = vcmp.lt.f32.partialorder %v1138, 0.0004427343
    %v1140 = vsel %vm1139, %v1137, %v1134
    %v1141 = vadd.f32 %v875, 1.0
    %v1142 = vlog2.pop %v1141
    %v1143 = vmul.f32 %v1142, 0.6931472
    %v1144 = vmul.f32 -0.5, %v875
    %v1145 = vadd.f32 %v1144, 1.0
    %v1146 = vmul.f32 %v1145, %v875
    %v1147 = vand.u32 2147483647, %v875
    %vm1148 = vcmp.lt.f32.partialorder %v1147, 0.0004427343
    %v1149 = vsel %vm1148, %v1146, %v1143
    %v1150 = vadd.f32 %v877, 1.0
    %v1151 = vlog2.pop %v1150
    %v1152 = vmul.f32 %v1151, 0.6931472
    %v1153 = vmul.f32 -0.5, %v877
    %v1154 = vadd.f32 %v1153, 1.0
    %v1155 = vmul.f32 %v1154, %v877
    %v1156 = vand.u32 2147483647, %v877
    %vm1157 = vcmp.lt.f32.partialorder %v1156, 0.0004427343
    %v1158 = vsel %vm1157, %v1155, %v1152
    %v1159 = vadd.f32 %v879, 1.0
    %v1160 = vlog2.pop %v1159
    %v1161 = vmul.f32 %v1160, 0.6931472
    %v1162 = vmul.f32 -0.5, %v879
    %v1163 = vadd.f32 %v1162, 1.0
    %v1164 = vmul.f32 %v1163, %v879
    %v1165 = vand.u32 2147483647, %v879
    %vm1166 = vcmp.lt.f32.partialorder %v1165, 0.0004427343
    %v1167 = vsel %vm1166, %v1164, %v1161
    %v1168 = vadd.f32 %v720, %v888
    %v1169 = vadd.f32 %v721, %v897
    %v1170 = vadd.f32 %v722, %v906
    %v1171 = vadd.f32 %v723, %v915
    %v1172 = vadd.f32 %v724, %v924
    %v1173 = vadd.f32 %v725, %v933
    %v1174 = vadd.f32 %v726, %v942
    %v1175 = vadd.f32 %v727, %v951
    %v1176 = vadd.f32 %v728, %v960
    %v1177 = vadd.f32 %v729, %v969
    %v1178 = vadd.f32 %v730, %v978
    %v1179 = vadd.f32 %v731, %v987
    %v1180 = vadd.f32 %v732, %v996
    %v1181 = vadd.f32 %v733, %v1005
    %v1182 = vadd.f32 %v734, %v1014
    %v1183 = vadd.f32 %v735, %v1023
    %v1184 = vadd.f32 %v736, %v1032
    %v1185 = vadd.f32 %v737, %v1041
    %v1186 = vadd.f32 %v738, %v1050
    %v1187 = vadd.f32 %v739, %v1059
    %v1188 = vadd.f32 %v740, %v1068
    %v1189 = vadd.f32 %v741, %v1077
    %v1190 = vadd.f32 %v742, %v1086
    %v1191 = vadd.f32 %v743, %v1095
    %v1192 = vadd.f32 %v744, %v1104
    %v1193 = vadd.f32 %v745, %v1113
    %v1194 = vadd.f32 %v746, %v1122
    %v1195 = vadd.f32 %v747, %v1131
    %v1196 = vadd.f32 %v748, %v1140
    %v1197 = vadd.f32 %v749, %v1149
    %v1198 = vadd.f32 %v750, %v1158
    %v1199 = vadd.f32 %v751, %v1167
    %v1200 = vsub.f32 %v1168, 0.6931472
    %v1201 = vsub.f32 %v1169, 0.6931472
    %v1202 = vsub.f32 %v1170, 0.6931472
    %v1203 = vsub.f32 %v1171, 0.6931472
    %v1204 = vsub.f32 %v1172, 0.6931472
    %v1205 = vsub.f32 %v1173, 0.6931472
    %v1206 = vsub.f32 %v1174, 0.6931472
    %v1207 = vsub.f32 %v1175, 0.6931472
    %v1208 = vsub.f32 %v1176, 0.6931472
    %v1209 = vsub.f32 %v1177, 0.6931472
    %v1210 = vsub.f32 %v1178, 0.6931472
    %v1211 = vsub.f32 %v1179, 0.6931472
    %v1212 = vsub.f32 %v1180, 0.6931472
    %v1213 = vsub.f32 %v1181, 0.6931472
    %v1214 = vsub.f32 %v1182, 0.6931472
    %v1215 = vsub.f32 %v1183, 0.6931472
    %v1216 = vsub.f32 %v1184, 0.6931472
    %v1217 = vsub.f32 %v1185, 0.6931472
    %v1218 = vsub.f32 %v1186, 0.6931472
    %v1219 = vsub.f32 %v1187, 0.6931472
    %v1220 = vsub.f32 %v1188, 0.6931472
    %v1221 = vsub.f32 %v1189, 0.6931472
    %v1222 = vsub.f32 %v1190, 0.6931472
    %v1223 = vsub.f32 %v1191, 0.6931472
    %v1224 = vsub.f32 %v1192, 0.6931472
    %v1225 = vsub.f32 %v1193, 0.6931472
    %v1226 = vsub.f32 %v1194, 0.6931472
    %v1227 = vsub.f32 %v1195, 0.6931472
    %v1228 = vsub.f32 %v1196, 0.6931472
    %v1229 = vsub.f32 %v1197, 0.6931472
    %v1230 = vsub.f32 %v1198, 0.6931472
    %v1231 = vsub.f32 %v1199, 0.6931472
    %v1233 = vlaneseq
    %v1234 = vshrl.u32 %v1233, 7
    %v1235 = vsub.s32 0, %v1234
    %v1236 = vrot.slane %v484, %v1235
    %1238 = vmatprep.subr.mxu0 0.0
    %1239 = vmatpush1.msra.mxu0 %v415
    %1240 = vmatprep.subr.mxu0 0.0
    %1241 = vmatpush1.msra.mxu0 %v416
    %1242 = vmatprep.subr.mxu0 0.0
    %1243 = vmatpush1.msra.mxu0 %v417
    %1244 = vmatprep.subr.mxu0 0.0
    %1245 = vmatpush1.msra.mxu0 %v418
    %1246 = vmatprep.subr.mxu0 0.0
    %1247 = vmatpush1.msra.mxu0 %v419
    %1248 = vmatprep.subr.mxu0 0.0
    %1249 = vmatpush1.msra.mxu0 %v420
    %1250 = vmatprep.subr.mxu0 0.0
    %1251 = vmatpush1.msra.mxu0 %v421
    %1252 = vmatprep.subr.mxu0 0.0
    %1253 = vmatpush1.msra.mxu0 %v422
    %1254 = vmatprep.subr.mxu0 0.0
    %1255 = vmatpush1.msra.mxu0 %v423
    %1256 = vmatprep.subr.mxu0 0.0
    %1257 = vmatpush1.msra.mxu0 %v424
    %1258 = vmatprep.subr.mxu0 0.0
    %1259 = vmatpush1.msra.mxu0 %v425
    %1260 = vmatprep.subr.mxu0 0.0
    %1261 = vmatpush1.msra.mxu0 %v426
    %1262 = vmatprep.subr.mxu0 0.0
    %1263 = vmatpush1.msra.mxu0 %v427
    %1264 = vmatprep.subr.mxu0 0.0
    %1265 = vmatpush1.msra.mxu0 %v428
    %1266 = vmatprep.subr.mxu0 0.0
    %1267 = vmatpush1.msra.mxu0 %v429
    %1268 = vmatprep.subr.mxu0 0.0
    %1269 = vmatpush1.msra.mxu0 %v430
    %1270 = vmatprep.subr.mxu0 0.0
    %1271 = vmatpush1.msra.mxu0 0.0
    %1272 = vmatprep.subr.mxu0 0.0
    %1273 = vmatpush1.msra.mxu0 0.0
    %1274 = vmatprep.subr.mxu0 0.0
    %1275 = vmatpush1.msra.mxu0 0.0
    %1276 = vmatprep.subr.mxu0 0.0
    %1277 = vmatpush1.msra.mxu0 0.0
    %1278 = vmatprep.subr.mxu0 0.0
    %1279 = vmatpush1.msra.mxu0 0.0
    %1280 = vmatprep.subr.mxu0 0.0
    %1281 = vmatpush1.msra.mxu0 0.0
    %1282 = vmatprep.subr.mxu0 0.0
    %1283 = vmatpush1.msra.mxu0 0.0
    %1284 = vmatprep.subr.mxu0 0.0
    %1285 = vmatpush1.msra.mxu0 0.0
    %1286 = vmatprep.subr.mxu0 0.0
    %1287 = vmatpush1.msra.mxu0 0.0
    %1288 = vmatprep.subr.mxu0 0.0
    %1289 = vmatpush1.msra.mxu0 0.0
    %1290 = vmatprep.subr.mxu0 0.0
    %1291 = vmatpush1.msra.mxu0 0.0
    %1292 = vmatprep.subr.mxu0 0.0
    %1293 = vmatpush1.msra.mxu0 0.0
    %1294 = vmatprep.subr.mxu0 0.0
    %1295 = vmatpush1.msra.mxu0 0.0
    %1296 = vmatprep.subr.mxu0 0.0
    %1297 = vmatpush1.msra.mxu0 0.0
    %1298 = vmatprep.subr.mxu0 0.0
    %1299 = vmatpush1.msra.mxu0 0.0
    %1300 = vmatprep.subr.mxu0 0.0
    %1301 = vmatpush1.msra.mxu0 0.0
    %1302 = vmatprep.mubr.f32.mxu0 0.0
    %1303 = vmatmul.mubr.f32.gmra.mrb[0].mxu0 %v1200
    %v1304 = vpop.f32.mrb[0].mxu0
    %v1305 = vadd.f32 %v1236, %v1304
    %v1306 = vpop.f32.mrb[0].mxu0
    %1307 = vmatprep.mubr.f32.mxu0 0.0
    %1308 = vmatmul.mubr.f32.gmra.mrb[0].mxu0 %v1201
    %v1309 = vpop.f32.mrb[0].mxu0
    %v1310 = vadd.f32 %v1236, %v1309
    %v1311 = vpop.f32.mrb[0].mxu0
    %1312 = vmatprep.mubr.f32.mxu0 0.0
    %1313 = vmatmul.mubr.f32.gmra.mrb[0].mxu0 %v1202
    %v1314 = vpop.f32.mrb[0].mxu0
    %v1315 = vadd.f32 %v1236, %v1314
    %v1316 = vpop.f32.mrb[0].mxu0
    %1317 = vmatprep.mubr.f32.mxu0 0.0
    %1318 = vmatmul.mubr.f32.gmra.mrb[0].mxu0 %v1203
    %v1319 = vpop.f32.mrb[0].mxu0
    %v1320 = vadd.f32 %v1236, %v1319
    %v1321 = vpop.f32.mrb[0].mxu0
    %1322 = vmatprep.mubr.f32.mxu0 0.0
    %1323 = vmatmul.mubr.f32.gmra.mrb[0].mxu0 %v1204
    %v1324 = vpop.f32.mrb[0].mxu0
    %v1325 = vadd.f32 %v1236, %v1324
    %v1326 = vpop.f32.mrb[0].mxu0
    %1327 = vmatprep.mubr.f32.mxu0 0.0
    %1328 = vmatmul.mubr.f32.gmra.mrb[0].mxu0 %v1205
    %v1329 = vpop.f32.mrb[0].mxu0
    %v1330 = vadd.f32 %v1236, %v1329
    %v1331 = vpop.f32.mrb[0].mxu0
    %1332 = vmatprep.mubr.f32.mxu0 0.0
    %1333 = vmatmul.mubr.f32.gmra.mrb[0].mxu0 %v1206
    %v1334 = vpop.f32.mrb[0].mxu0
    %v1335 = vadd.f32 %v1236, %v1334
    %v1336 = vpop.f32.mrb[0].mxu0
    %1337 = vmatprep.mubr.f32.mxu0 0.0
    %1338 = vmatmul.mubr.f32.gmra.mrb[0].mxu0 %v1207
    %v1339 = vpop.f32.mrb[0].mxu0
    %v1340 = vadd.f32 %v1236, %v1339
    %v1341 = vpop.f32.mrb[0].mxu0
    %1342 = vmatprep.mubr.f32.mxu0 0.0
    %1343 = vmatmul.mubr.f32.gmra.mrb[0].mxu0 %v1208
    %v1344 = vpop.f32.mrb[0].mxu0
    %v1345 = vadd.f32 %v1236, %v1344
    %v1346 = vpop.f32.mrb[0].mxu0
    %1347 = vmatprep.mubr.f32.mxu0 0.0
    %1348 = vmatmul.mubr.f32.gmra.mrb[0].mxu0 %v1209
    %v1349 = vpop.f32.mrb[0].mxu0
    %v1350 = vadd.f32 %v1236, %v1349
    %v1351 = vpop.f32.mrb[0].mxu0
    %1352 = vmatprep.mubr.f32.mxu0 0.0
    %1353 = vmatmul.mubr.f32.gmra.mrb[0].mxu0 %v1210
    %v1354 = vpop.f32.mrb[0].mxu0
    %v1355 = vadd.f32 %v1236, %v1354
    %v1356 = vpop.f32.mrb[0].mxu0
    %1357 = vmatprep.mubr.f32.mxu0 0.0
    %1358 = vmatmul.mubr.f32.gmra.mrb[0].mxu0 %v1211
    %v1359 = vpop.f32.mrb[0].mxu0
    %v1360 = vadd.f32 %v1236, %v1359
    %v1361 = vpop.f32.mrb[0].mxu0
    %1362 = vmatprep.mubr.f32.mxu0 0.0
    %1363 = vmatmul.mubr.f32.gmra.mrb[0].mxu0 %v1212
    %v1364 = vpop.f32.mrb[0].mxu0
    %v1365 = vadd.f32 %v1236, %v1364
    %v1366 = vpop.f32.mrb[0].mxu0
    %1367 = vmatprep.mubr.f32.mxu0 0.0
    %1368 = vmatmul.mubr.f32.gmra.mrb[0].mxu0 %v1213
    %v1369 = vpop.f32.mrb[0].mxu0
    %v1370 = vadd.f32 %v1236, %v1369
    %v1371 = vpop.f32.mrb[0].mxu0
    %1372 = vmatprep.mubr.f32.mxu0 0.0
    %1373 = vmatmul.mubr.f32.gmra.mrb[0].mxu0 %v1214
    %v1374 = vpop.f32.mrb[0].mxu0
    %v1375 = vadd.f32 %v1236, %v1374
    %v1376 = vpop.f32.mrb[0].mxu0
    %1377 = vmatprep.mubr.f32.mxu0 0.0
    %1378 = vmatmul.mubr.f32.gmra.mrb[0].mxu0 %v1215
    %v1379 = vpop.f32.mrb[0].mxu0
    %v1380 = vadd.f32 %v1236, %v1379
    %v1381 = vpop.f32.mrb[0].mxu0
    %1382 = vmatprep.mubr.f32.mxu0 0.0
    %1383 = vmatmul.mubr.f32.gmra.mrb[0].mxu0 %v1216
    %v1384 = vpop.f32.mrb[0].mxu0
    %v1385 = vadd.f32 %v1236, %v1384
    %v1386 = vpop.f32.mrb[0].mxu0
    %1387 = vmatprep.mubr.f32.mxu0 0.0
    %1388 = vmatmul.mubr.f32.gmra.mrb[0].mxu0 %v1217
    %v1389 = vpop.f32.mrb[0].mxu0
    %v1390 = vadd.f32 %v1236, %v1389
    %v1391 = vpop.f32.mrb[0].mxu0
    %1392 = vmatprep.mubr.f32.mxu0 0.0
    %1393 = vmatmul.mubr.f32.gmra.mrb[0].mxu0 %v1218
    %v1394 = vpop.f32.mrb[0].mxu0
    %v1395 = vadd.f32 %v1236, %v1394
    %v1396 = vpop.f32.mrb[0].mxu0
    %1397 = vmatprep.mubr.f32.mxu0 0.0
    %1398 = vmatmul.mubr.f32.gmra.mrb[0].mxu0 %v1219
    %v1399 = vpop.f32.mrb[0].mxu0
    %v1400 = vadd.f32 %v1236, %v1399
    %v1401 = vpop.f32.mrb[0].mxu0
    %1402 = vmatprep.mubr.f32.mxu0 0.0
    %1403 = vmatmul.mubr.f32.gmra.mrb[0].mxu0 %v1220
    %v1404 = vpop.f32.mrb[0].mxu0
    %v1405 = vadd.f32 %v1236, %v1404
    %v1406 = vpop.f32.mrb[0].mxu0
    %1407 = vmatprep.mubr.f32.mxu0 0.0
    %1408 = vmatmul.mubr.f32.gmra.mrb[0].mxu0 %v1221
    %v1409 = vpop.f32.mrb[0].mxu0
    %v1410 = vadd.f32 %v1236, %v1409
    %v1411 = vpop.f32.mrb[0].mxu0
    %1412 = vmatprep.mubr.f32.mxu0 0.0
    %1413 = vmatmul.mubr.f32.gmra.mrb[0].mxu0 %v1222
    %v1414 = vpop.f32.mrb[0].mxu0
    %v1415 = vadd.f32 %v1236, %v1414
    %v1416 = vpop.f32.mrb[0].mxu0
    %1417 = vmatprep.mubr.f32.mxu0 0.0
    %1418 = vmatmul.mubr.f32.gmra.mrb[0].mxu0 %v1223
    %v1419 = vpop.f32.mrb[0].mxu0
    %v1420 = vadd.f32 %v1236, %v1419
    %v1421 = vpop.f32.mrb[0].mxu0
    %1422 = vmatprep.mubr.f32.mxu0 0.0
    %1423 = vmatmul.mubr.f32.gmra.mrb[0].mxu0 %v1224
    %v1424 = vpop.f32.mrb[0].mxu0
    %v1425 = vadd.f32 %v1236, %v1424
    %v1426 = vpop.f32.mrb[0].mxu0
    %1427 = vmatprep.mubr.f32.mxu0 0.0
    %1428 = vmatmul.mubr.f32.gmra.mrb[0].mxu0 %v1225
    %v1429 = vpop.f32.mrb[0].mxu0
    %v1430 = vadd.f32 %v1236, %v1429
    %v1431 = vpop.f32.mrb[0].mxu0
    %1432 = vmatprep.mubr.f32.mxu0 0.0
    %1433 = vmatmul.mubr.f32.gmra.mrb[0].mxu0 %v1226
    %v1434 = vpop.f32.mrb[0].mxu0
    %v1435 = vadd.f32 %v1236, %v1434
    %v1436 = vpop.f32.mrb[0].mxu0
    %1437 = vmatprep.mubr.f32.mxu0 0.0
    %1438 = vmatmul.mubr.f32.gmra.mrb[0].mxu0 %v1227
    %v1439 = vpop.f32.mrb[0].mxu0
    %v1440 = vadd.f32 %v1236, %v1439
    %v1441 = vpop.f32.mrb[0].mxu0
    %1442 = vmatprep.mubr.f32.mxu0 0.0
    %1443 = vmatmul.mubr.f32.gmra.mrb[0].mxu0 %v1228
    %v1444 = vpop.f32.mrb[0].mxu0
    %v1445 = vadd.f32 %v1236, %v1444
    %v1446 = vpop.f32.mrb[0].mxu0
    %1447 = vmatprep.mubr.f32.mxu0 0.0
    %1448 = vmatmul.mubr.f32.gmra.mrb[0].mxu0 %v1229
    %v1449 = vpop.f32.mrb[0].mxu0
    %v1450 = vadd.f32 %v1236, %v1449
    %v1451 = vpop.f32.mrb[0].mxu0
    %1452 = vmatprep.mubr.f32.mxu0 0.0
    %1453 = vmatmul.mubr.f32.gmra.mrb[0].mxu0 %v1230
    %v1454 = vpop.f32.mrb[0].mxu0
    %v1455 = vadd.f32 %v1236, %v1454
    %v1456 = vpop.f32.mrb[0].mxu0
    %1457 = vmatprep.mubr.f32.mxu0 0.0
    %1458 = vmatmul.mubr.f32.gmra.mrb[0].mxu0 %v1231
    %v1459 = vpop.f32.mrb[0].mxu0
    %v1460 = vadd.f32 %v1236, %v1459
    %v1461 = vpop.f32.mrb[0].mxu0
    %1462 = vdwg.mxu0
    %1463 = vset.pattern.permute.xlu0 1
    %1464 = vperm.xlu0 %1463, %v35
    %v1465 = vpop.permute.xlu0 %1464
    %1467 = vset.pattern.permute.xlu0 1
    %1468 = vperm.xlu0 %1467, %v36
    %v1469 = vpop.permute.xlu0 %1468
    %1471 = vset.pattern.permute.xlu0 1
    %1472 = vperm.xlu0 %1471, %v37
    %v1473 = vpop.permute.xlu0 %1472
    %1475 = vset.pattern.permute.xlu0 1
    %1476 = vperm.xlu0 %1475, %v38
    %v1477 = vpop.permute.xlu0 %1476
    %1479 = vset.pattern.permute.xlu0 1
    %1480 = vperm.xlu0 %1479, %v39
    %v1481 = vpop.permute.xlu0 %1480
    %1483 = vset.pattern.permute.xlu0 1
    %1484 = vperm.xlu0 %1483, %v40
    %v1485 = vpop.permute.xlu0 %1484
    %1487 = vset.pattern.permute.xlu0 1
    %1488 = vperm.xlu0 %1487, %v41
    %v1489 = vpop.permute.xlu0 %1488
    %1491 = vset.pattern.permute.xlu0 1
    %1492 = vperm.xlu0 %1491, %v42
    %v1493 = vpop.permute.xlu0 %1492
    %1495 = vset.pattern.permute.xlu0 1
    %1496 = vperm.xlu0 %1495, %v43
    %v1497 = vpop.permute.xlu0 %1496
    %1499 = vset.pattern.permute.xlu0 1
    %1500 = vperm.xlu0 %1499, %v44
    %v1501 = vpop.permute.xlu0 %1500
    %1503 = vset.pattern.permute.xlu0 1
    %1504 = vperm.xlu0 %1503, %v45
    %v1505 = vpop.permute.xlu0 %1504
    %1507 = vset.pattern.permute.xlu0 1
    %1508 = vperm.xlu0 %1507, %v46
    %v1509 = vpop.permute.xlu0 %1508
    %1511 = vset.pattern.permute.xlu0 1
    %1512 = vperm.xlu0 %1511, %v47
    %v1513 = vpop.permute.xlu0 %1512
    %1515 = vset.pattern.permute.xlu0 1
    %1516 = vperm.xlu0 %1515, %v48
    %v1517 = vpop.permute.xlu0 %1516
    %1519 = vset.pattern.permute.xlu0 1
    %1520 = vperm.xlu0 %1519, %v49
    %v1521 = vpop.permute.xlu0 %1520
    %1523 = vset.pattern.permute.xlu0 1
    %1524 = vperm.xlu0 %1523, %v50
    %v1525 = vpop.permute.xlu0 %1524
    %1527 = vset.pattern.permute.xlu0 1
    %1528 = vperm.xlu0 %1527, %v51
    %v1529 = vpop.permute.xlu0 %1528
    %1531 = vset.pattern.permute.xlu0 1
    %1532 = vperm.xlu0 %1531, %v52
    %v1533 = vpop.permute.xlu0 %1532
    %1535 = vset.pattern.permute.xlu0 1
    %1536 = vperm.xlu0 %1535, %v53
    %v1537 = vpop.permute.xlu0 %1536
    %1539 = vset.pattern.permute.xlu0 1
    %1540 = vperm.xlu0 %1539, %v54
    %v1541 = vpop.permute.xlu0 %1540
    %1543 = vset.pattern.permute.xlu0 1
    %1544 = vperm.xlu0 %1543, %v55
    %v1545 = vpop.permute.xlu0 %1544
    %1547 = vset.pattern.permute.xlu0 1
    %1548 = vperm.xlu0 %1547, %v56
    %v1549 = vpop.permute.xlu0 %1548
    %1551 = vset.pattern.permute.xlu0 1
    %1552 = vperm.xlu0 %1551, %v57
    %v1553 = vpop.permute.xlu0 %1552
    %1555 = vset.pattern.permute.xlu0 1
    %1556 = vperm.xlu0 %1555, %v58
    %v1557 = vpop.permute.xlu0 %1556
    %1559 = vset.pattern.permute.xlu0 1
    %1560 = vperm.xlu0 %1559, %v59
    %v1561 = vpop.permute.xlu0 %1560
    %1563 = vset.pattern.permute.xlu0 1
    %1564 = vperm.xlu0 %1563, %v60
    %v1565 = vpop.permute.xlu0 %1564
    %1567 = vset.pattern.permute.xlu0 1
    %1568 = vperm.xlu0 %1567, %v61
    %v1569 = vpop.permute.xlu0 %1568
    %1571 = vset.pattern.permute.xlu0 1
    %1572 = vperm.xlu0 %1571, %v62
    %v1573 = vpop.permute.xlu0 %1572
    %1575 = vset.pattern.permute.xlu0 1
    %1576 = vperm.xlu0 %1575, %v63
    %v1577 = vpop.permute.xlu0 %1576
    %1579 = vset.pattern.permute.xlu0 1
    %1580 = vperm.xlu0 %1579, %v64
    %v1581 = vpop.permute.xlu0 %1580
    %1583 = vset.pattern.permute.xlu0 1
    %1584 = vperm.xlu0 %1583, %v65
    %v1585 = vpop.permute.xlu0 %1584
    %1587 = vset.pattern.permute.xlu0 1
    %1588 = vperm.xlu0 %1587, %v66
    %v1589 = vpop.permute.xlu0 %1588
    %v1591 = vmul.f32 %v1305, %v1465
    %v1592 = vmul.f32 %v1310, %v1469
    %v1593 = vmul.f32 %v1315, %v1473
    %v1594 = vmul.f32 %v1320, %v1477
    %v1595 = vmul.f32 %v1325, %v1481
    %v1596 = vmul.f32 %v1330, %v1485
    %v1597 = vmul.f32 %v1335, %v1489
    %v1598 = vmul.f32 %v1340, %v1493
    %v1599 = vmul.f32 %v1345, %v1497
    %v1600 = vmul.f32 %v1350, %v1501
    %v1601 = vmul.f32 %v1355, %v1505
    %v1602 = vmul.f32 %v1360, %v1509
    %v1603 = vmul.f32 %v1365, %v1513
    %v1604 = vmul.f32 %v1370, %v1517
    %v1605 = vmul.f32 %v1375, %v1521
    %v1606 = vmul.f32 %v1380, %v1525
    %v1607 = vmul.f32 %v1385, %v1529
    %v1608 = vmul.f32 %v1390, %v1533
    %v1609 = vmul.f32 %v1395, %v1537
    %v1610 = vmul.f32 %v1400, %v1541
    %v1611 = vmul.f32 %v1405, %v1545
    %v1612 = vmul.f32 %v1410, %v1549
    %v1613 = vmul.f32 %v1415, %v1553
    %v1614 = vmul.f32 %v1420, %v1557
    %v1615 = vmul.f32 %v1425, %v1561
    %v1616 = vmul.f32 %v1430, %v1565
    %v1617 = vmul.f32 %v1435, %v1569
    %v1618 = vmul.f32 %v1440, %v1573
    %v1619 = vmul.f32 %v1445, %v1577
    %v1620 = vmul.f32 %v1450, %v1581
    %v1621 = vmul.f32 %v1455, %v1585
    %v1622 = vmul.f32 %v1460, %v1589
    %1623 = vmatprep.subr.mxu0 0.0
    %1624 = vmatpush1.msra.mxu0 %v432
    %1625 = vmatprep.subr.mxu0 0.0
    %1626 = vmatpush1.msra.mxu0 %v433
    %1627 = vmatprep.subr.mxu0 0.0
    %1628 = vmatpush1.msra.mxu0 %v434
    %1629 = vmatprep.subr.mxu0 0.0
    %1630 = vmatpush1.msra.mxu0 %v435
    %1631 = vmatprep.subr.mxu0 0.0
    %1632 = vmatpush1.msra.mxu0 %v436
    %1633 = vmatprep.subr.mxu0 0.0
    %1634 = vmatpush1.msra.mxu0 %v437
    %1635 = vmatprep.subr.mxu0 0.0
    %1636 = vmatpush1.msra.mxu0 %v438
    %1637 = vmatprep.subr.mxu0 0.0
    %1638 = vmatpush1.msra.mxu0 %v439
    %1639 = vmatprep.subr.mxu0 0.0
    %1640 = vmatpush1.msra.mxu0 %v440
    %1641 = vmatprep.subr.mxu0 0.0
    %1642 = vmatpush1.msra.mxu0 %v441
    %1643 = vmatprep.subr.mxu0 0.0
    %1644 = vmatpush1.msra.mxu0 %v442
    %1645 = vmatprep.subr.mxu0 0.0
    %1646 = vmatpush1.msra.mxu0 %v443
    %1647 = vmatprep.subr.mxu0 0.0
    %1648 = vmatpush1.msra.mxu0 %v444
    %1649 = vmatprep.subr.mxu0 0.0
    %1650 = vmatpush1.msra.mxu0 %v445
    %1651 = vmatprep.subr.mxu0 0.0
    %1652 = vmatpush1.msra.mxu0 %v446
    %1653 = vmatprep.subr.mxu0 0.0
    %1654 = vmatpush1.msra.mxu0 %v447
    %1655 = vmatprep.subr.mxu0 0.0
    %1656 = vmatpush1.msra.mxu0 0.0
    %1657 = vmatprep.subr.mxu0 0.0
    %1658 = vmatpush1.msra.mxu0 0.0
    %1659 = vmatprep.subr.mxu0 0.0
    %1660 = vmatpush1.msra.mxu0 0.0
    %1661 = vmatprep.subr.mxu0 0.0
    %1662 = vmatpush1.msra.mxu0 0.0
    %1663 = vmatprep.subr.mxu0 0.0
    %1664 = vmatpush1.msra.mxu0 0.0
    %1665 = vmatprep.subr.mxu0 0.0
    %1666 = vmatpush1.msra.mxu0 0.0
    %1667 = vmatprep.subr.mxu0 0.0
    %1668 = vmatpush1.msra.mxu0 0.0
    %1669 = vmatprep.subr.mxu0 0.0
    %1670 = vmatpush1.msra.mxu0 0.0
    %1671 = vmatprep.subr.mxu0 0.0
    %1672 = vmatpush1.msra.mxu0 0.0
    %1673 = vmatprep.subr.mxu0 0.0
    %1674 = vmatpush1.msra.mxu0 0.0
    %1675 = vmatprep.subr.mxu0 0.0
    %1676 = vmatpush1.msra.mxu0 0.0
    %1677 = vmatprep.subr.mxu0 0.0
    %1678 = vmatpush1.msra.mxu0 0.0
    %1679 = vmatprep.subr.mxu0 0.0
    %1680 = vmatpush1.msra.mxu0 0.0
    %1681 = vmatprep.subr.mxu0 0.0
    %1682 = vmatpush1.msra.mxu0 0.0
    %1683 = vmatprep.subr.mxu0 0.0
    %1684 = vmatpush1.msra.mxu0 0.0
    %1685 = vmatprep.subr.mxu0 0.0
    %1686 = vmatpush1.msra.mxu0 0.0
    %1687 = vmatprep.mubr.f32.mxu0 0.0
    %1688 = vmatmul.mubr.f32.gmra.mrb[0].mxu0 %v394
    %v1689 = vpop.f32.mrb[0].mxu0
    %v1690 = vadd.f32 0.0, %v1689
    %v1691 = vpop.f32.mrb[0].mxu0
    %1692 = vmatprep.mubr.f32.mxu0 0.0
    %1693 = vmatmul.mubr.f32.gmra.mrb[0].mxu0 %v395
    %v1694 = vpop.f32.mrb[0].mxu0
    %v1695 = vadd.f32 0.0, %v1694
    %v1696 = vpop.f32.mrb[0].mxu0
    %1697 = vmatprep.mubr.f32.mxu0 0.0
    %1698 = vmatmul.mubr.f32.gmra.mrb[0].mxu0 %v396
    %v1699 = vpop.f32.mrb[0].mxu0
    %v1700 = vadd.f32 0.0, %v1699
    %v1701 = vpop.f32.mrb[0].mxu0
    %1702 = vmatprep.mubr.f32.mxu0 0.0
    %1703 = vmatmul.mubr.f32.gmra.mrb[0].mxu0 %v397
    %v1704 = vpop.f32.mrb[0].mxu0
    %v1705 = vadd.f32 0.0, %v1704
    %v1706 = vpop.f32.mrb[0].mxu0
    %1707 = vdwg.mxu0
    %v1708 = vmul.f32 %v1591, %v1690
    %v1709 = vmul.f32 %v1592, %v1690
    %v1710 = vmul.f32 %v1593, %v1690
    %v1711 = vmul.f32 %v1594, %v1690
    %v1712 = vmul.f32 %v1595, %v1690
    %v1713 = vmul.f32 %v1596, %v1690
    %v1714 = vmul.f32 %v1597, %v1690
    %v1715 = vmul.f32 %v1598, %v1690
    %v1716 = vmul.f32 %v1599, %v1695
    %v1717 = vmul.f32 %v1600, %v1695
    %v1718 = vmul.f32 %v1601, %v1695
    %v1719 = vmul.f32 %v1602, %v1695
    %v1720 = vmul.f32 %v1603, %v1695
    %v1721 = vmul.f32 %v1604, %v1695
    %v1722 = vmul.f32 %v1605, %v1695
    %v1723 = vmul.f32 %v1606, %v1695
    %v1724 = vmul.f32 %v1607, %v1700
    %v1725 = vmul.f32 %v1608, %v1700
    %v1726 = vmul.f32 %v1609, %v1700
    %v1727 = vmul.f32 %v1610, %v1700
    %v1728 = vmul.f32 %v1611, %v1700
    %v1729 = vmul.f32 %v1612, %v1700
    %v1730 = vmul.f32 %v1613, %v1700
    %v1731 = vmul.f32 %v1614, %v1700
    %v1732 = vmul.f32 %v1615, %v1705
    %v1733 = vmul.f32 %v1616, %v1705
    %v1734 = vmul.f32 %v1617, %v1705
    %v1735 = vmul.f32 %v1618, %v1705
    %v1736 = vmul.f32 %v1619, %v1705
    %v1737 = vmul.f32 %v1620, %v1705
    %v1738 = vmul.f32 %v1621, %v1705
    %v1739 = vmul.f32 %v1622, %v1705
    %v1740 = vrot.slane %v1708, 4
    %v1741 = vadd.f32 %v1708, %v1740
    %v1742 = vrot.slane %v1741, 2
    %v1743 = vadd.f32 %v1741, %v1742
    %v1744 = vrot.slane %v1743, 1
    %v1745 = vadd.f32 %v1743, %v1744
    %v1746 = vrot.slane %v1709, 4
    %v1747 = vadd.f32 %v1709, %v1746
    %v1748 = vrot.slane %v1747, 2
    %v1749 = vadd.f32 %v1747, %v1748
    %v1750 = vrot.slane %v1749, 1
    %v1751 = vadd.f32 %v1749, %v1750
    %v1752 = vrot.slane %v1710, 4
    %v1753 = vadd.f32 %v1710, %v1752
    %v1754 = vrot.slane %v1753, 2
    %v1755 = vadd.f32 %v1753, %v1754
    %v1756 = vrot.slane %v1755, 1
    %v1757 = vadd.f32 %v1755, %v1756
    %v1758 = vrot.slane %v1711, 4
    %v1759 = vadd.f32 %v1711, %v1758
    %v1760 = vrot.slane %v1759, 2
    %v1761 = vadd.f32 %v1759, %v1760
    %v1762 = vrot.slane %v1761, 1
    %v1763 = vadd.f32 %v1761, %v1762
    %v1764 = vrot.slane %v1712, 4
    %v1765 = vadd.f32 %v1712, %v1764
    %v1766 = vrot.slane %v1765, 2
    %v1767 = vadd.f32 %v1765, %v1766
    %v1768 = vrot.slane %v1767, 1
    %v1769 = vadd.f32 %v1767, %v1768
    %v1770 = vrot.slane %v1713, 4
    %v1771 = vadd.f32 %v1713, %v1770
    %v1772 = vrot.slane %v1771, 2
    %v1773 = vadd.f32 %v1771, %v1772
    %v1774 = vrot.slane %v1773, 1
    %v1775 = vadd.f32 %v1773, %v1774
    %v1776 = vrot.slane %v1714, 4
    %v1777 = vadd.f32 %v1714, %v1776
    %v1778 = vrot.slane %v1777, 2
    %v1779 = vadd.f32 %v1777, %v1778
    %v1780 = vrot.slane %v1779, 1
    %v1781 = vadd.f32 %v1779, %v1780
    %v1782 = vrot.slane %v1715, 4
    %v1783 = vadd.f32 %v1715, %v1782
    %v1784 = vrot.slane %v1783, 2
    %v1785 = vadd.f32 %v1783, %v1784
    %v1786 = vrot.slane %v1785, 1
    %v1787 = vadd.f32 %v1785, %v1786
    %v1788 = vrot.slane %v1716, 4
    %v1789 = vadd.f32 %v1716, %v1788
    %v1790 = vrot.slane %v1789, 2
    %v1791 = vadd.f32 %v1789, %v1790
    %v1792 = vrot.slane %v1791, 1
    %v1793 = vadd.f32 %v1791, %v1792
    %v1794 = vrot.slane %v1717, 4
    %v1795 = vadd.f32 %v1717, %v1794
    %v1796 = vrot.slane %v1795, 2
    %v1797 = vadd.f32 %v1795, %v1796
    %v1798 = vrot.slane %v1797, 1
    %v1799 = vadd.f32 %v1797, %v1798
    %v1800 = vrot.slane %v1718, 4
    %v1801 = vadd.f32 %v1718, %v1800
    %v1802 = vrot.slane %v1801, 2
    %v1803 = vadd.f32 %v1801, %v1802
    %v1804 = vrot.slane %v1803, 1
    %v1805 = vadd.f32 %v1803, %v1804
    %v1806 = vrot.slane %v1719, 4
    %v1807 = vadd.f32 %v1719, %v1806
    %v1808 = vrot.slane %v1807, 2
    %v1809 = vadd.f32 %v1807, %v1808
    %v1810 = vrot.slane %v1809, 1
    %v1811 = vadd.f32 %v1809, %v1810
    %v1812 = vrot.slane %v1720, 4
    %v1813 = vadd.f32 %v1720, %v1812
    %v1814 = vrot.slane %v1813, 2
    %v1815 = vadd.f32 %v1813, %v1814
    %v1816 = vrot.slane %v1815, 1
    %v1817 = vadd.f32 %v1815, %v1816
    %v1818 = vrot.slane %v1721, 4
    %v1819 = vadd.f32 %v1721, %v1818
    %v1820 = vrot.slane %v1819, 2
    %v1821 = vadd.f32 %v1819, %v1820
    %v1822 = vrot.slane %v1821, 1
    %v1823 = vadd.f32 %v1821, %v1822
    %v1824 = vrot.slane %v1722, 4
    %v1825 = vadd.f32 %v1722, %v1824
    %v1826 = vrot.slane %v1825, 2
    %v1827 = vadd.f32 %v1825, %v1826
    %v1828 = vrot.slane %v1827, 1
    %v1829 = vadd.f32 %v1827, %v1828
    %v1830 = vrot.slane %v1723, 4
    %v1831 = vadd.f32 %v1723, %v1830
    %v1832 = vrot.slane %v1831, 2
    %v1833 = vadd.f32 %v1831, %v1832
    %v1834 = vrot.slane %v1833, 1
    %v1835 = vadd.f32 %v1833, %v1834
    %v1836 = vrot.slane %v1724, 4
    %v1837 = vadd.f32 %v1724, %v1836
    %v1838 = vrot.slane %v1837, 2
    %v1839 = vadd.f32 %v1837, %v1838
    %v1840 = vrot.slane %v1839, 1
    %v1841 = vadd.f32 %v1839, %v1840
    %v1842 = vrot.slane %v1725, 4
    %v1843 = vadd.f32 %v1725, %v1842
    %v1844 = vrot.slane %v1843, 2
    %v1845 = vadd.f32 %v1843, %v1844
    %v1846 = vrot.slane %v1845, 1
    %v1847 = vadd.f32 %v1845, %v1846
    %v1848 = vrot.slane %v1726, 4
    %v1849 = vadd.f32 %v1726, %v1848
    %v1850 = vrot.slane %v1849, 2
    %v1851 = vadd.f32 %v1849, %v1850
    %v1852 = vrot.slane %v1851, 1
    %v1853 = vadd.f32 %v1851, %v1852
    %v1854 = vrot.slane %v1727, 4
    %v1855 = vadd.f32 %v1727, %v1854
    %v1856 = vrot.slane %v1855, 2
    %v1857 = vadd.f32 %v1855, %v1856
    %v1858 = vrot.slane %v1857, 1
    %v1859 = vadd.f32 %v1857, %v1858
    %v1860 = vrot.slane %v1728, 4
    %v1861 = vadd.f32 %v1728, %v1860
    %v1862 = vrot.slane %v1861, 2
    %v1863 = vadd.f32 %v1861, %v1862
    %v1864 = vrot.slane %v1863, 1
    %v1865 = vadd.f32 %v1863, %v1864
    %v1866 = vrot.slane %v1729, 4
    %v1867 = vadd.f32 %v1729, %v1866
    %v1868 = vrot.slane %v1867, 2
    %v1869 = vadd.f32 %v1867, %v1868
    %v1870 = vrot.slane %v1869, 1
    %v1871 = vadd.f32 %v1869, %v1870
    %v1872 = vrot.slane %v1730, 4
    %v1873 = vadd.f32 %v1730, %v1872
    %v1874 = vrot.slane %v1873, 2
    %v1875 = vadd.f32 %v1873, %v1874
    %v1876 = vrot.slane %v1875, 1
    %v1877 = vadd.f32 %v1875, %v1876
    %v1878 = vrot.slane %v1731, 4
    %v1879 = vadd.f32 %v1731, %v1878
    %v1880 = vrot.slane %v1879, 2
    %v1881 = vadd.f32 %v1879, %v1880
    %v1882 = vrot.slane %v1881, 1
    %v1883 = vadd.f32 %v1881, %v1882
    %v1884 = vrot.slane %v1732, 4
    %v1885 = vadd.f32 %v1732, %v1884
    %v1886 = vrot.slane %v1885, 2
    %v1887 = vadd.f32 %v1885, %v1886
    %v1888 = vrot.slane %v1887, 1
    %v1889 = vadd.f32 %v1887, %v1888
    %v1890 = vrot.slane %v1733, 4
    %v1891 = vadd.f32 %v1733, %v1890
    %v1892 = vrot.slane %v1891, 2
    %v1893 = vadd.f32 %v1891, %v1892
    %v1894 = vrot.slane %v1893, 1
    %v1895 = vadd.f32 %v1893, %v1894
    %v1896 = vrot.slane %v1734, 4
    %v1897 = vadd.f32 %v1734, %v1896
    %v1898 = vrot.slane %v1897, 2
    %v1899 = vadd.f32 %v1897, %v1898
    %v1900 = vrot.slane %v1899, 1
    %v1901 = vadd.f32 %v1899, %v1900
    %v1902 = vrot.slane %v1735, 4
    %v1903 = vadd.f32 %v1735, %v1902
    %v1904 = vrot.slane %v1903, 2
    %v1905 = vadd.f32 %v1903, %v1904
    %v1906 = vrot.slane %v1905, 1
    %v1907 = vadd.f32 %v1905, %v1906
    %v1908 = vrot.slane %v1736, 4
    %v1909 = vadd.f32 %v1736, %v1908
    %v1910 = vrot.slane %v1909, 2
    %v1911 = vadd.f32 %v1909, %v1910
    %v1912 = vrot.slane %v1911, 1
    %v1913 = vadd.f32 %v1911, %v1912
    %v1914 = vrot.slane %v1737, 4
    %v1915 = vadd.f32 %v1737, %v1914
    %v1916 = vrot.slane %v1915, 2
    %v1917 = vadd.f32 %v1915, %v1916
    %v1918 = vrot.slane %v1917, 1
    %v1919 = vadd.f32 %v1917, %v1918
    %v1920 = vrot.slane %v1738, 4
    %v1921 = vadd.f32 %v1738, %v1920
    %v1922 = vrot.slane %v1921, 2
    %v1923 = vadd.f32 %v1921, %v1922
    %v1924 = vrot.slane %v1923, 1
    %v1925 = vadd.f32 %v1923, %v1924
    %v1926 = vrot.slane %v1739, 4
    %v1927 = vadd.f32 %v1739, %v1926
    %v1928 = vrot.slane %v1927, 2
    %v1929 = vadd.f32 %v1927, %v1928
    %v1930 = vrot.slane %v1929, 1
    %v1931 = vadd.f32 %v1929, %v1930
    %v1933 = vlaneseq
    %v1934 = vshrl.u32 %v1933, 7
    %v1935 = vsub.s32 0, %v1934
    %v1936 = vrot.slane %v486, %v1935
    %vm1970 = vcmask 1041409
    %v1971 = vsel %vm1970, %v1751, %v1745
    %vm1972 = vcmask 1042434
    %v1973 = vsel %vm1972, %v1757, %v1971
    %vm1974 = vcmask 1043459
    %v1975 = vsel %vm1974, %v1763, %v1973
    %vm1976 = vcmask 1044484
    %v1977 = vsel %vm1976, %v1769, %v1975
    %vm1978 = vcmask 1045509
    %v1979 = vsel %vm1978, %v1775, %v1977
    %vm1980 = vcmask 1046534
    %v1981 = vsel %vm1980, %v1781, %v1979
    %vm1982 = vcmask 1047559
    %v1983 = vsel %vm1982, %v1787, %v1981
    %v1984 = vsel %vm1970, %v1799, %v1793
    %v1985 = vsel %vm1972, %v1805, %v1984
    %v1986 = vsel %vm1974, %v1811, %v1985
    %v1987 = vsel %vm1976, %v1817, %v1986
    %v1988 = vsel %vm1978, %v1823, %v1987
    %v1989 = vsel %vm1980, %v1829, %v1988
    %v1990 = vsel %vm1982, %v1835, %v1989
    %v1991 = vsel %vm1970, %v1847, %v1841
    %v1992 = vsel %vm1972, %v1853, %v1991
    %v1993 = vsel %vm1974, %v1859, %v1992
    %v1994 = vsel %vm1976, %v1865, %v1993
    %v1995 = vsel %vm1978, %v1871, %v1994
    %v1996 = vsel %vm1980, %v1877, %v1995
    %v1997 = vsel %vm1982, %v1883, %v1996
    %v1998 = vsel %vm1970, %v1895, %v1889
    %v1999 = vsel %vm1972, %v1901, %v1998
    %v2000 = vsel %vm1974, %v1907, %v1999
    %v2001 = vsel %vm1976, %v1913, %v2000
    %v2002 = vsel %vm1978, %v1919, %v2001
    %v2003 = vsel %vm1980, %v1925, %v2002
    %v2004 = vsel %vm1982, %v1931, %v2003
    %2009 = vmatprep.subr.mxu0 0.0
    %2010 = vmatpush1.msra.mxu0 %v449
    %2011 = vmatprep.subr.mxu0 0.0
    %2012 = vmatpush1.msra.mxu0 %v450
    %2013 = vmatprep.subr.mxu0 0.0
    %2014 = vmatpush1.msra.mxu0 %v451
    %2015 = vmatprep.subr.mxu0 0.0
    %2016 = vmatpush1.msra.mxu0 %v452
    %2017 = vmatprep.subr.mxu0 0.0
    %2018 = vmatpush1.msra.mxu0 %v453
    %2019 = vmatprep.subr.mxu0 0.0
    %2020 = vmatpush1.msra.mxu0 %v454
    %2021 = vmatprep.subr.mxu0 0.0
    %2022 = vmatpush1.msra.mxu0 %v455
    %2023 = vmatprep.subr.mxu0 0.0
    %2024 = vmatpush1.msra.mxu0 %v456
    %2025 = vmatprep.subr.mxu0 0.0
    %2026 = vmatpush1.msra.mxu0 %v457
    %2027 = vmatprep.subr.mxu0 0.0
    %2028 = vmatpush1.msra.mxu0 %v458
    %2029 = vmatprep.subr.mxu0 0.0
    %2030 = vmatpush1.msra.mxu0 %v459
    %2031 = vmatprep.subr.mxu0 0.0
    %2032 = vmatpush1.msra.mxu0 %v460
    %2033 = vmatprep.subr.mxu0 0.0
    %2034 = vmatpush1.msra.mxu0 %v461
    %2035 = vmatprep.subr.mxu0 0.0
    %2036 = vmatpush1.msra.mxu0 %v462
    %2037 = vmatprep.subr.mxu0 0.0
    %2038 = vmatpush1.msra.mxu0 %v463
    %2039 = vmatprep.subr.mxu0 0.0
    %2040 = vmatpush1.msra.mxu0 %v464
    %2041 = vmatprep.subr.mxu0 0.0
    %2042 = vmatpush1.msra.mxu0 0.0
    %2043 = vmatprep.subr.mxu0 0.0
    %2044 = vmatpush1.msra.mxu0 0.0
    %2045 = vmatprep.subr.mxu0 0.0
    %2046 = vmatpush1.msra.mxu0 0.0
    %2047 = vmatprep.subr.mxu0 0.0
    %2048 = vmatpush1.msra.mxu0 0.0
    %2049 = vmatprep.subr.mxu0 0.0
    %2050 = vmatpush1.msra.mxu0 0.0
    %2051 = vmatprep.subr.mxu0 0.0
    %2052 = vmatpush1.msra.mxu0 0.0
    %2053 = vmatprep.subr.mxu0 0.0
    %2054 = vmatpush1.msra.mxu0 0.0
    %2055 = vmatprep.subr.mxu0 0.0
    %2056 = vmatpush1.msra.mxu0 0.0
    %2057 = vmatprep.subr.mxu0 0.0
    %2058 = vmatpush1.msra.mxu0 0.0
    %2059 = vmatprep.subr.mxu0 0.0
    %2060 = vmatpush1.msra.mxu0 0.0
    %2061 = vmatprep.subr.mxu0 0.0
    %2062 = vmatpush1.msra.mxu0 0.0
    %2063 = vmatprep.subr.mxu0 0.0
    %2064 = vmatpush1.msra.mxu0 0.0
    %2065 = vmatprep.subr.mxu0 0.0
    %2066 = vmatpush1.msra.mxu0 0.0
    %2067 = vmatprep.subr.mxu0 0.0
    %2068 = vmatpush1.msra.mxu0 0.0
    %2069 = vmatprep.subr.mxu0 0.0
    %2070 = vmatpush1.msra.mxu0 0.0
    %2071 = vmatprep.subr.mxu0 0.0
    %2072 = vmatpush1.msra.mxu0 0.0
    %2073 = vmatprep.mubr.f32.mxu0 0.0
    %2074 = vmatmul.mubr.f32.gmra.mrb[0].mxu0 %v1983
    %v2075 = vpop.f32.mrb[0].mxu0
    %v2076 = vadd.f32 %v1936, %v2075
    %v2077 = vpop.f32.mrb[0].mxu0
    %2078 = vmatprep.mubr.f32.mxu0 0.0
    %2079 = vmatmul.mubr.f32.gmra.mrb[0].mxu0 %v1990
    %v2080 = vpop.f32.mrb[0].mxu0
    %v2081 = vadd.f32 %v1936, %v2080
    %v2082 = vpop.f32.mrb[0].mxu0
    %2083 = vmatprep.mubr.f32.mxu0 0.0
    %2084 = vmatmul.mubr.f32.gmra.mrb[0].mxu0 %v1997
    %v2085 = vpop.f32.mrb[0].mxu0
    %v2086 = vadd.f32 %v1936, %v2085
    %v2087 = vpop.f32.mrb[0].mxu0
    %2088 = vmatprep.mubr.f32.mxu0 0.0
    %2089 = vmatmul.mubr.f32.gmra.mrb[0].mxu0 %v2004
    %v2090 = vpop.f32.mrb[0].mxu0
    %v2091 = vadd.f32 %v1936, %v2090
    %v2092 = vpop.f32.mrb[0].mxu0
    %2093 = vdwg.mxu0
    %v2094 = vmax.f32 %v2076, 0.0
    %v2095 = vmax.f32 %v2081, 0.0
    %v2096 = vmax.f32 %v2086, 0.0
    %v2097 = vmax.f32 %v2091, 0.0
    %v2098 = vand.u32 2147483647, %v2076
    %v2099 = vand.u32 2147483647, %v2081
    %v2100 = vand.u32 2147483647, %v2086
    %v2101 = vand.u32 2147483647, %v2091
    %v2102 = vsub.f32 0.0, %v2098
    %v2103 = vsub.f32 0.0, %v2099
    %v2104 = vsub.f32 0.0, %v2100
    %v2105 = vsub.f32 0.0, %v2101
    %v2106 = vmul.f32 %v2102, 1.442695
    %v2107 = vpow.pop %v2106
    %v2108 = vmul.f32 %v2103, 1.442695
    %v2109 = vpow.pop %v2108
    %v2110 = vmul.f32 %v2104, 1.442695
    %v2111 = vpow.pop %v2110
    %v2112 = vmul.f32 %v2105, 1.442695
    %v2113 = vpow.pop %v2112
    %v2114 = vadd.f32 %v2107, 1.0
    %v2115 = vlog2.pop %v2114
    %v2116 = vmul.f32 %v2115, 0.6931472
    %v2117 = vmul.f32 -0.5, %v2107
    %v2118 = vadd.f32 %v2117, 1.0
    %v2119 = vmul.f32 %v2118, %v2107
    %v2120 = vand.u32 2147483647, %v2107
    %vm2121 = vcmp.lt.f32.partialorder %v2120, 0.0004427343
    %v2122 = vsel %vm2121, %v2119, %v2116
    %v2123 = vadd.f32 %v2109, 1.0
    %v2124 = vlog2.pop %v2123
    %v2125 = vmul.f32 %v2124, 0.6931472
    %v2126 = vmul.f32 -0.5, %v2109
    %v2127 = vadd.f32 %v2126, 1.0
    %v2128 = vmul.f32 %v2127, %v2109
    %v2129 = vand.u32 2147483647, %v2109
    %vm2130 = vcmp.lt.f32.partialorder %v2129, 0.0004427343
    %v2131 = vsel %vm2130, %v2128, %v2125
    %v2132 = vadd.f32 %v2111, 1.0
    %v2133 = vlog2.pop %v2132
    %v2134 = vmul.f32 %v2133, 0.6931472
    %v2135 = vmul.f32 -0.5, %v2111
    %v2136 = vadd.f32 %v2135, 1.0
    %v2137 = vmul.f32 %v2136, %v2111
    %v2138 = vand.u32 2147483647, %v2111
    %vm2139 = vcmp.lt.f32.partialorder %v2138, 0.0004427343
    %v2140 = vsel %vm2139, %v2137, %v2134
    %v2141 = vadd.f32 %v2113, 1.0
    %v2142 = vlog2.pop %v2141
    %v2143 = vmul.f32 %v2142, 0.6931472
    %v2144 = vmul.f32 -0.5, %v2113
    %v2145 = vadd.f32 %v2144, 1.0
    %v2146 = vmul.f32 %v2145, %v2113
    %v2147 = vand.u32 2147483647, %v2113
    %vm2148 = vcmp.lt.f32.partialorder %v2147, 0.0004427343
    %v2149 = vsel %vm2148, %v2146, %v2143
    %v2150 = vadd.f32 %v2094, %v2122
    %v2151 = vadd.f32 %v2095, %v2131
    %v2152 = vadd.f32 %v2096, %v2140
    %v2153 = vadd.f32 %v2097, %v2149
    %v2154 = vsub.f32 %v2150, 0.6931472
    %v2155 = vsub.f32 %v2151, 0.6931472
    %v2156 = vsub.f32 %v2152, 0.6931472
    %v2157 = vsub.f32 %v2153, 0.6931472
    %v2159 = vlaneseq
    %v2160 = vshrl.u32 %v2159, 7
    %v2161 = vsub.s32 0, %v2160
    %v2162 = vrot.slane %v488, %v2161
    %2164 = vmatprep.subr.mxu0 0.0
    %2165 = vmatpush1.msra.mxu0 %v466
    %2166 = vmatprep.subr.mxu0 0.0
    %2167 = vmatpush1.msra.mxu0 %v467
    %2168 = vmatprep.subr.mxu0 0.0
    %2169 = vmatpush1.msra.mxu0 %v468
    %2170 = vmatprep.subr.mxu0 0.0
    %2171 = vmatpush1.msra.mxu0 %v469
    %2172 = vmatprep.subr.mxu0 0.0
    %2173 = vmatpush1.msra.mxu0 %v470
    %2174 = vmatprep.subr.mxu0 0.0
    %2175 = vmatpush1.msra.mxu0 %v471
    %2176 = vmatprep.subr.mxu0 0.0
    %2177 = vmatpush1.msra.mxu0 %v472
    %2178 = vmatprep.subr.mxu0 0.0
    %2179 = vmatpush1.msra.mxu0 %v473
    %2180 = vmatprep.subr.mxu0 0.0
    %2181 = vmatpush1.msra.mxu0 %v474
    %2182 = vmatprep.subr.mxu0 0.0
    %2183 = vmatpush1.msra.mxu0 %v475
    %2184 = vmatprep.subr.mxu0 0.0
    %2185 = vmatpush1.msra.mxu0 %v476
    %2186 = vmatprep.subr.mxu0 0.0
    %2187 = vmatpush1.msra.mxu0 %v477
    %2188 = vmatprep.subr.mxu0 0.0
    %2189 = vmatpush1.msra.mxu0 %v478
    %2190 = vmatprep.subr.mxu0 0.0
    %2191 = vmatpush1.msra.mxu0 %v479
    %2192 = vmatprep.subr.mxu0 0.0
    %2193 = vmatpush1.msra.mxu0 %v480
    %2194 = vmatprep.subr.mxu0 0.0
    %2195 = vmatpush1.msra.mxu0 %v481
    %2196 = vmatprep.subr.mxu0 0.0
    %2197 = vmatpush1.msra.mxu0 0.0
    %2198 = vmatprep.subr.mxu0 0.0
    %2199 = vmatpush1.msra.mxu0 0.0
    %2200 = vmatprep.subr.mxu0 0.0
    %2201 = vmatpush1.msra.mxu0 0.0
    %2202 = vmatprep.subr.mxu0 0.0
    %2203 = vmatpush1.msra.mxu0 0.0
    %2204 = vmatprep.subr.mxu0 0.0
    %2205 = vmatpush1.msra.mxu0 0.0
    %2206 = vmatprep.subr.mxu0 0.0
    %2207 = vmatpush1.msra.mxu0 0.0
    %2208 = vmatprep.subr.mxu0 0.0
    %2209 = vmatpush1.msra.mxu0 0.0
    %2210 = vmatprep.subr.mxu0 0.0
    %2211 = vmatpush1.msra.mxu0 0.0
    %2212 = vmatprep.subr.mxu0 0.0
    %2213 = vmatpush1.msra.mxu0 0.0
    %2214 = vmatprep.subr.mxu0 0.0
    %2215 = vmatpush1.msra.mxu0 0.0
    %2216 = vmatprep.subr.mxu0 0.0
    %2217 = vmatpush1.msra.mxu0 0.0
    %2218 = vmatprep.subr.mxu0 0.0
    %2219 = vmatpush1.msra.mxu0 0.0
    %2220 = vmatprep.subr.mxu0 0.0
    %2221 = vmatpush1.msra.mxu0 0.0
    %2222 = vmatprep.subr.mxu0 0.0
    %2223 = vmatpush1.msra.mxu0 0.0
    %2224 = vmatprep.subr.mxu0 0.0
    %2225 = vmatpush1.msra.mxu0 0.0
    %2226 = vmatprep.subr.mxu0 0.0
    %2227 = vmatpush1.msra.mxu0 0.0
    %2228 = vmatprep.mubr.f32.mxu0 0.0
    %2229 = vmatmul.mubr.f32.gmra.mrb[0].mxu0 %v2154
    %v2230 = vpop.f32.mrb[0].mxu0
    %v2231 = vadd.f32 %v2162, %v2230
    %v2232 = vpop.f32.mrb[0].mxu0
    %2233 = vmatprep.mubr.f32.mxu0 0.0
    %2234 = vmatmul.mubr.f32.gmra.mrb[0].mxu0 %v2155
    %v2235 = vpop.f32.mrb[0].mxu0
    %v2236 = vadd.f32 %v2162, %v2235
    %v2237 = vpop.f32.mrb[0].mxu0
    %2238 = vmatprep.mubr.f32.mxu0 0.0
    %2239 = vmatmul.mubr.f32.gmra.mrb[0].mxu0 %v2156
    %v2240 = vpop.f32.mrb[0].mxu0
    %v2241 = vadd.f32 %v2162, %v2240
    %v2242 = vpop.f32.mrb[0].mxu0
    %2243 = vmatprep.mubr.f32.mxu0 0.0
    %2244 = vmatmul.mubr.f32.gmra.mrb[0].mxu0 %v2157
    %v2245 = vpop.f32.mrb[0].mxu0
    %v2246 = vadd.f32 %v2162, %v2245
    %v2247 = vpop.f32.mrb[0].mxu0
    %2248 = vdwg.mxu0
    %v2249 = vadd.f32 %v394, %v2231
    %v2250 = vadd.f32 %v395, %v2236
    %v2251 = vadd.f32 %v396, %v2241
    %v2252 = vadd.f32 %v397, %v2246
    %s2253 = scalar_lea.vmem [#allocation2], 640
    %v2254 = vld [vmem:[%s2253] sm:$0xff]
    %v2255 = vld [vmem:[%s2253 + $0x8] sm:$0xff]
    %v2256 = vld [vmem:[%s2253 + $0x10] sm:$0xff]
    %v2257 = vld [vmem:[%s2253 + $0x18] sm:$0xff]
    %v2258 = vld [vmem:[%s2253 + $0x20] sm:$0xff]
    %v2259 = vld [vmem:[%s2253 + $0x28] sm:$0xff]
    %v2260 = vld [vmem:[%s2253 + $0x30] sm:$0xff]
    %v2261 = vld [vmem:[%s2253 + $0x38] sm:$0xff]
    %v2262 = vld [vmem:[%s2253 + $0x40] sm:$0xff]
    %v2263 = vld [vmem:[%s2253 + $0x48] sm:$0xff]
    %v2264 = vld [vmem:[%s2253 + $0x50] sm:$0xff]
    %v2265 = vld [vmem:[%s2253 + $0x58] sm:$0xff]
    %v2266 = vld [vmem:[%s2253 + $0x60] sm:$0xff]
    %v2267 = vld [vmem:[%s2253 + $0x68] sm:$0xff]
    %v2268 = vld [vmem:[%s2253 + $0x70] sm:$0xff]
    %v2269 = vld [vmem:[%s2253 + $0x78] sm:$0xff]
    %s2270 = scalar_lea.vmem [#allocation2], 768
    %v2271 = vld [vmem:[%s2270] sm:$0xff]
    %v2272 = vld [vmem:[%s2270 + $0x8] sm:$0xff]
    %v2273 = vld [vmem:[%s2270 + $0x10] sm:$0xff]
    %v2274 = vld [vmem:[%s2270 + $0x18] sm:$0xff]
    %v2275 = vld [vmem:[%s2270 + $0x20] sm:$0xff]
    %v2276 = vld [vmem:[%s2270 + $0x28] sm:$0xff]
    %v2277 = vld [vmem:[%s2270 + $0x30] sm:$0xff]
    %v2278 = vld [vmem:[%s2270 + $0x38] sm:$0xff]
    %v2279 = vld [vmem:[%s2270 + $0x40] sm:$0xff]
    %v2280 = vld [vmem:[%s2270 + $0x48] sm:$0xff]
    %v2281 = vld [vmem:[%s2270 + $0x50] sm:$0xff]
    %v2282 = vld [vmem:[%s2270 + $0x58] sm:$0xff]
    %v2283 = vld [vmem:[%s2270 + $0x60] sm:$0xff]
    %v2284 = vld [vmem:[%s2270 + $0x68] sm:$0xff]
    %v2285 = vld [vmem:[%s2270 + $0x70] sm:$0xff]
    %v2286 = vld [vmem:[%s2270 + $0x78] sm:$0xff]
    %s2287 = scalar_lea.vmem [#allocation2], 896
    %v2288 = vld [vmem:[%s2287] sm:$0xff]
    %v2289 = vld [vmem:[%s2287 + $0x8] sm:$0xff]
    %v2290 = vld [vmem:[%s2287 + $0x10] sm:$0xff]
    %v2291 = vld [vmem:[%s2287 + $0x18] sm:$0xff]
    %v2292 = vld [vmem:[%s2287 + $0x20] sm:$0xff]
    %v2293 = vld [vmem:[%s2287 + $0x28] sm:$0xff]
    %v2294 = vld [vmem:[%s2287 + $0x30] sm:$0xff]
    %v2295 = vld [vmem:[%s2287 + $0x38] sm:$0xff]
    %v2296 = vld [vmem:[%s2287 + $0x40] sm:$0xff]
    %v2297 = vld [vmem:[%s2287 + $0x48] sm:$0xff]
    %v2298 = vld [vmem:[%s2287 + $0x50] sm:$0xff]
    %v2299 = vld [vmem:[%s2287 + $0x58] sm:$0xff]
    %v2300 = vld [vmem:[%s2287 + $0x60] sm:$0xff]
    %v2301 = vld [vmem:[%s2287 + $0x68] sm:$0xff]
    %v2302 = vld [vmem:[%s2287 + $0x70] sm:$0xff]
    %v2303 = vld [vmem:[%s2287 + $0x78] sm:$0xff]
    %s2304 = scalar_lea.vmem [#allocation2], 1024
    %v2305 = vld [vmem:[%s2304] sm:$0xff]
    %v2306 = vld [vmem:[%s2304 + $0x8] sm:$0xff]
    %v2307 = vld [vmem:[%s2304 + $0x10] sm:$0xff]
    %v2308 = vld [vmem:[%s2304 + $0x18] sm:$0xff]
    %v2309 = vld [vmem:[%s2304 + $0x20] sm:$0xff]
    %v2310 = vld [vmem:[%s2304 + $0x28] sm:$0xff]
    %v2311 = vld [vmem:[%s2304 + $0x30] sm:$0xff]
    %v2312 = vld [vmem:[%s2304 + $0x38] sm:$0xff]
    %v2313 = vld [vmem:[%s2304 + $0x40] sm:$0xff]
    %v2314 = vld [vmem:[%s2304 + $0x48] sm:$0xff]
    %v2315 = vld [vmem:[%s2304 + $0x50] sm:$0xff]
    %v2316 = vld [vmem:[%s2304 + $0x58] sm:$0xff]
    %v2317 = vld [vmem:[%s2304 + $0x60] sm:$0xff]
    %v2318 = vld [vmem:[%s2304 + $0x68] sm:$0xff]
    %v2319 = vld [vmem:[%s2304 + $0x70] sm:$0xff]
    %v2320 = vld [vmem:[%s2304 + $0x78] sm:$0xff]
    %s2321 = scalar_lea.vmem [#allocation2], 1152
    %v2322 = vld [vmem:[%s2321] sm:$0xff]
    %v2323 = vld [vmem:[%s2321 + $0x8] sm:$0xff]
    %v2324 = vld [vmem:[%s2321 + $0x10] sm:$0xff]
    %v2325 = vld [vmem:[%s2321 + $0x18] sm:$0xff]
    %v2326 = vld [vmem:[%s2321 + $0x20] sm:$0xff]
    %v2327 = vld [vmem:[%s2321 + $0x28] sm:$0xff]
    %v2328 = vld [vmem:[%s2321 + $0x30] sm:$0xff]
    %v2329 = vld [vmem:[%s2321 + $0x38] sm:$0xff]
    %v2330 = vld [vmem:[%s2321 + $0x40] sm:$0xff]
    %v2331 = vld [vmem:[%s2321 + $0x48] sm:$0xff]
    %v2332 = vld [vmem:[%s2321 + $0x50] sm:$0xff]
    %v2333 = vld [vmem:[%s2321 + $0x58] sm:$0xff]
    %v2334 = vld [vmem:[%s2321 + $0x60] sm:$0xff]
    %v2335 = vld [vmem:[%s2321 + $0x68] sm:$0xff]
    %v2336 = vld [vmem:[%s2321 + $0x70] sm:$0xff]
    %v2337 = vld [vmem:[%s2321 + $0x78] sm:$0xff]
    %s2338 = scalar_lea.vmem %s4, 4
    %v2339 = vld [vmem:[%s2338] sm:$0x1]
    %s2340 = scalar_lea.vmem %s4, 5
    %v2341 = vld [vmem:[%s2340] sm:$0x1]
    %s2342 = scalar_lea.vmem %s4, 6
    %v2343 = vld [vmem:[%s2342] sm:$0x1]
    %s2344 = scalar_lea.vmem %s4, 7
    %v2345 = vld [vmem:[%s2344] sm:$0x1]
    %v2347 = vlaneseq
    %v2348 = vshrl.u32 %v2347, 7
    %v2349 = vsub.s32 0, %v2348
    %v2350 = vrot.slane %v2339, %v2349
    %2352 = vmatprep.subr.mxu0 0.0
    %2353 = vmatpush1.msra.mxu0 %v2254
    %2354 = vmatprep.subr.mxu0 0.0
    %2355 = vmatpush1.msra.mxu0 %v2255
    %2356 = vmatprep.subr.mxu0 0.0
    %2357 = vmatpush1.msra.mxu0 %v2256
    %2358 = vmatprep.subr.mxu0 0.0
    %2359 = vmatpush1.msra.mxu0 %v2257
    %2360 = vmatprep.subr.mxu0 0.0
    %2361 = vmatpush1.msra.mxu0 %v2258
    %2362 = vmatprep.subr.mxu0 0.0
    %2363 = vmatpush1.msra.mxu0 %v2259
    %2364 = vmatprep.subr.mxu0 0.0
    %2365 = vmatpush1.msra.mxu0 %v2260
    %2366 = vmatprep.subr.mxu0 0.0
    %2367 = vmatpush1.msra.mxu0 %v2261
    %2368 = vmatprep.subr.mxu0 0.0
    %2369 = vmatpush1.msra.mxu0 %v2262
    %2370 = vmatprep.subr.mxu0 0.0
    %2371 = vmatpush1.msra.mxu0 %v2263
    %2372 = vmatprep.subr.mxu0 0.0
    %2373 = vmatpush1.msra.mxu0 %v2264
    %2374 = vmatprep.subr.mxu0 0.0
    %2375 = vmatpush1.msra.mxu0 %v2265
    %2376 = vmatprep.subr.mxu0 0.0
    %2377 = vmatpush1.msra.mxu0 %v2266
    %2378 = vmatprep.subr.mxu0 0.0
    %2379 = vmatpush1.msra.mxu0 %v2267
    %2380 = vmatprep.subr.mxu0 0.0
    %2381 = vmatpush1.msra.mxu0 %v2268
    %2382 = vmatprep.subr.mxu0 0.0
    %2383 = vmatpush1.msra.mxu0 %v2269
    %2384 = vmatprep.subr.mxu0 0.0
    %2385 = vmatpush1.msra.mxu0 0.0
    %2386 = vmatprep.subr.mxu0 0.0
    %2387 = vmatpush1.msra.mxu0 0.0
    %2388 = vmatprep.subr.mxu0 0.0
    %2389 = vmatpush1.msra.mxu0 0.0
    %2390 = vmatprep.subr.mxu0 0.0
    %2391 = vmatpush1.msra.mxu0 0.0
    %2392 = vmatprep.subr.mxu0 0.0
    %2393 = vmatpush1.msra.mxu0 0.0
    %2394 = vmatprep.subr.mxu0 0.0
    %2395 = vmatpush1.msra.mxu0 0.0
    %2396 = vmatprep.subr.mxu0 0.0
    %2397 = vmatpush1.msra.mxu0 0.0
    %2398 = vmatprep.subr.mxu0 0.0
    %2399 = vmatpush1.msra.mxu0 0.0
    %2400 = vmatprep.subr.mxu0 0.0
    %2401 = vmatpush1.msra.mxu0 0.0
    %2402 = vmatprep.subr.mxu0 0.0
    %2403 = vmatpush1.msra.mxu0 0.0
    %2404 = vmatprep.subr.mxu0 0.0
    %2405 = vmatpush1.msra.mxu0 0.0
    %2406 = vmatprep.subr.mxu0 0.0
    %2407 = vmatpush1.msra.mxu0 0.0
    %2408 = vmatprep.subr.mxu0 0.0
    %2409 = vmatpush1.msra.mxu0 0.0
    %2410 = vmatprep.subr.mxu0 0.0
    %2411 = vmatpush1.msra.mxu0 0.0
    %2412 = vmatprep.subr.mxu0 0.0
    %2413 = vmatpush1.msra.mxu0 0.0
    %2414 = vmatprep.subr.mxu0 0.0
    %2415 = vmatpush1.msra.mxu0 0.0
    %2416 = vmatprep.mubr.f32.mxu0 0.0
    %2417 = vmatmul.mubr.f32.gmra.mrb[0].mxu0 %v331
    %v2418 = vpop.f32.mrb[0].mxu0
    %v2419 = vadd.f32 %v2350, %v2418
    %v2420 = vpop.f32.mrb[0].mxu0
    %2421 = vmatprep.mubr.f32.mxu0 0.0
    %2422 = vmatmul.mubr.f32.gmra.mrb[0].mxu0 %v333
    %v2423 = vpop.f32.mrb[0].mxu0
    %v2424 = vadd.f32 %v2350, %v2423
    %v2425 = vpop.f32.mrb[0].mxu0
    %2426 = vmatprep.mubr.f32.mxu0 0.0
    %2427 = vmatmul.mubr.f32.gmra.mrb[0].mxu0 %v335
    %v2428 = vpop.f32.mrb[0].mxu0
    %v2429 = vadd.f32 %v2350, %v2428
    %v2430 = vpop.f32.mrb[0].mxu0
    %2431 = vmatprep.mubr.f32.mxu0 0.0
    %2432 = vmatmul.mubr.f32.gmra.mrb[0].mxu0 %v337
    %v2433 = vpop.f32.mrb[0].mxu0
    %v2434 = vadd.f32 %v2350, %v2433
    %v2435 = vpop.f32.mrb[0].mxu0
    %2436 = vmatprep.mubr.f32.mxu0 0.0
    %2437 = vmatmul.mubr.f32.gmra.mrb[0].mxu0 %v339
    %v2438 = vpop.f32.mrb[0].mxu0
    %v2439 = vadd.f32 %v2350, %v2438
    %v2440 = vpop.f32.mrb[0].mxu0
    %2441 = vmatprep.mubr.f32.mxu0 0.0
    %2442 = vmatmul.mubr.f32.gmra.mrb[0].mxu0 %v341
    %v2443 = vpop.f32.mrb[0].mxu0
    %v2444 = vadd.f32 %v2350, %v2443
    %v2445 = vpop.f32.mrb[0].mxu0
    %2446 = vmatprep.mubr.f32.mxu0 0.0
    %2447 = vmatmul.mubr.f32.gmra.mrb[0].mxu0 %v343
    %v2448 = vpop.f32.mrb[0].mxu0
    %v2449 = vadd.f32 %v2350, %v2448
    %v2450 = vpop.f32.mrb[0].mxu0
    %2451 = vmatprep.mubr.f32.mxu0 0.0
    %2452 = vmatmul.mubr.f32.gmra.mrb[0].mxu0 %v345
    %v2453 = vpop.f32.mrb[0].mxu0
    %v2454 = vadd.f32 %v2350, %v2453
    %v2455 = vpop.f32.mrb[0].mxu0
    %2456 = vmatprep.mubr.f32.mxu0 0.0
    %2457 = vmatmul.mubr.f32.gmra.mrb[0].mxu0 %v347
    %v2458 = vpop.f32.mrb[0].mxu0
    %v2459 = vadd.f32 %v2350, %v2458
    %v2460 = vpop.f32.mrb[0].mxu0
    %2461 = vmatprep.mubr.f32.mxu0 0.0
    %2462 = vmatmul.mubr.f32.gmra.mrb[0].mxu0 %v349
    %v2463 = vpop.f32.mrb[0].mxu0
    %v2464 = vadd.f32 %v2350, %v2463
    %v2465 = vpop.f32.mrb[0].mxu0
    %2466 = vmatprep.mubr.f32.mxu0 0.0
    %2467 = vmatmul.mubr.f32.gmra.mrb[0].mxu0 %v351
    %v2468 = vpop.f32.mrb[0].mxu0
    %v2469 = vadd.f32 %v2350, %v2468
    %v2470 = vpop.f32.mrb[0].mxu0
    %2471 = vmatprep.mubr.f32.mxu0 0.0
    %2472 = vmatmul.mubr.f32.gmra.mrb[0].mxu0 %v353
    %v2473 = vpop.f32.mrb[0].mxu0
    %v2474 = vadd.f32 %v2350, %v2473
    %v2475 = vpop.f32.mrb[0].mxu0
    %2476 = vmatprep.mubr.f32.mxu0 0.0
    %2477 = vmatmul.mubr.f32.gmra.mrb[0].mxu0 %v355
    %v2478 = vpop.f32.mrb[0].mxu0
    %v2479 = vadd.f32 %v2350, %v2478
    %v2480 = vpop.f32.mrb[0].mxu0
    %2481 = vmatprep.mubr.f32.mxu0 0.0
    %2482 = vmatmul.mubr.f32.gmra.mrb[0].mxu0 %v357
    %v2483 = vpop.f32.mrb[0].mxu0
    %v2484 = vadd.f32 %v2350, %v2483
    %v2485 = vpop.f32.mrb[0].mxu0
    %2486 = vmatprep.mubr.f32.mxu0 0.0
    %2487 = vmatmul.mubr.f32.gmra.mrb[0].mxu0 %v359
    %v2488 = vpop.f32.mrb[0].mxu0
    %v2489 = vadd.f32 %v2350, %v2488
    %v2490 = vpop.f32.mrb[0].mxu0
    %2491 = vmatprep.mubr.f32.mxu0 0.0
    %2492 = vmatmul.mubr.f32.gmra.mrb[0].mxu0 %v361
    %v2493 = vpop.f32.mrb[0].mxu0
    %v2494 = vadd.f32 %v2350, %v2493
    %v2495 = vpop.f32.mrb[0].mxu0
    %2496 = vmatprep.mubr.f32.mxu0 0.0
    %2497 = vmatmul.mubr.f32.gmra.mrb[0].mxu0 %v363
    %v2498 = vpop.f32.mrb[0].mxu0
    %v2499 = vadd.f32 %v2350, %v2498
    %v2500 = vpop.f32.mrb[0].mxu0
    %2501 = vmatprep.mubr.f32.mxu0 0.0
    %2502 = vmatmul.mubr.f32.gmra.mrb[0].mxu0 %v365
    %v2503 = vpop.f32.mrb[0].mxu0
    %v2504 = vadd.f32 %v2350, %v2503
    %v2505 = vpop.f32.mrb[0].mxu0
    %2506 = vmatprep.mubr.f32.mxu0 0.0
    %2507 = vmatmul.mubr.f32.gmra.mrb[0].mxu0 %v367
    %v2508 = vpop.f32.mrb[0].mxu0
    %v2509 = vadd.f32 %v2350, %v2508
    %v2510 = vpop.f32.mrb[0].mxu0
    %2511 = vmatprep.mubr.f32.mxu0 0.0
    %2512 = vmatmul.mubr.f32.gmra.mrb[0].mxu0 %v369
    %v2513 = vpop.f32.mrb[0].mxu0
    %v2514 = vadd.f32 %v2350, %v2513
    %v2515 = vpop.f32.mrb[0].mxu0
    %2516 = vmatprep.mubr.f32.mxu0 0.0
    %2517 = vmatmul.mubr.f32.gmra.mrb[0].mxu0 %v371
    %v2518 = vpop.f32.mrb[0].mxu0
    %v2519 = vadd.f32 %v2350, %v2518
    %v2520 = vpop.f32.mrb[0].mxu0
    %2521 = vmatprep.mubr.f32.mxu0 0.0
    %2522 = vmatmul.mubr.f32.gmra.mrb[0].mxu0 %v373
    %v2523 = vpop.f32.mrb[0].mxu0
    %v2524 = vadd.f32 %v2350, %v2523
    %v2525 = vpop.f32.mrb[0].mxu0
    %2526 = vmatprep.mubr.f32.mxu0 0.0
    %2527 = vmatmul.mubr.f32.gmra.mrb[0].mxu0 %v375
    %v2528 = vpop.f32.mrb[0].mxu0
    %v2529 = vadd.f32 %v2350, %v2528
    %v2530 = vpop.f32.mrb[0].mxu0
    %2531 = vmatprep.mubr.f32.mxu0 0.0
    %2532 = vmatmul.mubr.f32.gmra.mrb[0].mxu0 %v377
    %v2533 = vpop.f32.mrb[0].mxu0
    %v2534 = vadd.f32 %v2350, %v2533
    %v2535 = vpop.f32.mrb[0].mxu0
    %2536 = vmatprep.mubr.f32.mxu0 0.0
    %2537 = vmatmul.mubr.f32.gmra.mrb[0].mxu0 %v379
    %v2538 = vpop.f32.mrb[0].mxu0
    %v2539 = vadd.f32 %v2350, %v2538
    %v2540 = vpop.f32.mrb[0].mxu0
    %2541 = vmatprep.mubr.f32.mxu0 0.0
    %2542 = vmatmul.mubr.f32.gmra.mrb[0].mxu0 %v381
    %v2543 = vpop.f32.mrb[0].mxu0
    %v2544 = vadd.f32 %v2350, %v2543
    %v2545 = vpop.f32.mrb[0].mxu0
    %2546 = vmatprep.mubr.f32.mxu0 0.0
    %2547 = vmatmul.mubr.f32.gmra.mrb[0].mxu0 %v383
    %v2548 = vpop.f32.mrb[0].mxu0
    %v2549 = vadd.f32 %v2350, %v2548
    %v2550 = vpop.f32.mrb[0].mxu0
    %2551 = vmatprep.mubr.f32.mxu0 0.0
    %2552 = vmatmul.mubr.f32.gmra.mrb[0].mxu0 %v385
    %v2553 = vpop.f32.mrb[0].mxu0
    %v2554 = vadd.f32 %v2350, %v2553
    %v2555 = vpop.f32.mrb[0].mxu0
    %2556 = vmatprep.mubr.f32.mxu0 0.0
    %2557 = vmatmul.mubr.f32.gmra.mrb[0].mxu0 %v387
    %v2558 = vpop.f32.mrb[0].mxu0
    %v2559 = vadd.f32 %v2350, %v2558
    %v2560 = vpop.f32.mrb[0].mxu0
    %2561 = vmatprep.mubr.f32.mxu0 0.0
    %2562 = vmatmul.mubr.f32.gmra.mrb[0].mxu0 %v389
    %v2563 = vpop.f32.mrb[0].mxu0
    %v2564 = vadd.f32 %v2350, %v2563
    %v2565 = vpop.f32.mrb[0].mxu0
    %2566 = vmatprep.mubr.f32.mxu0 0.0
    %2567 = vmatmul.mubr.f32.gmra.mrb[0].mxu0 %v391
    %v2568 = vpop.f32.mrb[0].mxu0
    %v2569 = vadd.f32 %v2350, %v2568
    %v2570 = vpop.f32.mrb[0].mxu0
    %2571 = vmatprep.mubr.f32.mxu0 0.0
    %2572 = vmatmul.mubr.f32.gmra.mrb[0].mxu0 %v393
    %v2573 = vpop.f32.mrb[0].mxu0
    %v2574 = vadd.f32 %v2350, %v2573
    %v2575 = vpop.f32.mrb[0].mxu0
    %2576 = vdwg.mxu0
    %v2577 = vmax.f32 %v2419, 0.0
    %v2578 = vmax.f32 %v2424, 0.0
    %v2579 = vmax.f32 %v2429, 0.0
    %v2580 = vmax.f32 %v2434, 0.0
    %v2581 = vmax.f32 %v2439, 0.0
    %v2582 = vmax.f32 %v2444, 0.0
    %v2583 = vmax.f32 %v2449, 0.0
    %v2584 = vmax.f32 %v2454, 0.0
    %v2585 = vmax.f32 %v2459, 0.0
    %v2586 = vmax.f32 %v2464, 0.0
    %v2587 = vmax.f32 %v2469, 0.0
    %v2588 = vmax.f32 %v2474, 0.0
    %v2589 = vmax.f32 %v2479, 0.0
    %v2590 = vmax.f32 %v2484, 0.0
    %v2591 = vmax.f32 %v2489, 0.0
    %v2592 = vmax.f32 %v2494, 0.0
    %v2593 = vmax.f32 %v2499, 0.0
    %v2594 = vmax.f32 %v2504, 0.0
    %v2595 = vmax.f32 %v2509, 0.0
    %v2596 = vmax.f32 %v2514, 0.0
    %v2597 = vmax.f32 %v2519, 0.0
    %v2598 = vmax.f32 %v2524, 0.0
    %v2599 = vmax.f32 %v2529, 0.0
    %v2600 = vmax.f32 %v2534, 0.0
    %v2601 = vmax.f32 %v2539, 0.0
    %v2602 = vmax.f32 %v2544, 0.0
    %v2603 = vmax.f32 %v2549, 0.0
    %v2604 = vmax.f32 %v2554, 0.0
    %v2605 = vmax.f32 %v2559, 0.0
    %v2606 = vmax.f32 %v2564, 0.0
    %v2607 = vmax.f32 %v2569, 0.0
    %v2608 = vmax.f32 %v2574, 0.0
    %v2609 = vand.u32 2147483647, %v2419
    %v2610 = vand.u32 2147483647, %v2424
    %v2611 = vand.u32 2147483647, %v2429
    %v2612 = vand.u32 2147483647, %v2434
    %v2613 = vand.u32 2147483647, %v2439
    %v2614 = vand.u32 2147483647, %v2444
    %v2615 = vand.u32 2147483647, %v2449
    %v2616 = vand.u32 2147483647, %v2454
    %v2617 = vand.u32 2147483647, %v2459
    %v2618 = vand.u32 2147483647, %v2464
    %v2619 = vand.u32 2147483647, %v2469
    %v2620 = vand.u32 2147483647, %v2474
    %v2621 = vand.u32 2147483647, %v2479
    %v2622 = vand.u32 2147483647, %v2484
    %v2623 = vand.u32 2147483647, %v2489
    %v2624 = vand.u32 2147483647, %v2494
    %v2625 = vand.u32 2147483647, %v2499
    %v2626 = vand.u32 2147483647, %v2504
    %v2627 = vand.u32 2147483647, %v2509
    %v2628 = vand.u32 2147483647, %v2514
    %v2629 = vand.u32 2147483647, %v2519
    %v2630 = vand.u32 2147483647, %v2524
    %v2631 = vand.u32 2147483647, %v2529
    %v2632 = vand.u32 2147483647, %v2534
    %v2633 = vand.u32 2147483647, %v2539
    %v2634 = vand.u32 2147483647, %v2544
    %v2635 = vand.u32 2147483647, %v2549
    %v2636 = vand.u32 2147483647, %v2554
    %v2637 = vand.u32 2147483647, %v2559
    %v2638 = vand.u32 2147483647, %v2564
    %v2639 = vand.u32 2147483647, %v2569
    %v2640 = vand.u32 2147483647, %v2574
    %v2641 = vsub.f32 0.0, %v2609
    %v2642 = vsub.f32 0.0, %v2610
    %v2643 = vsub.f32 0.0, %v2611
    %v2644 = vsub.f32 0.0, %v2612
    %v2645 = vsub.f32 0.0, %v2613
    %v2646 = vsub.f32 0.0, %v2614
    %v2647 = vsub.f32 0.0, %v2615
    %v2648 = vsub.f32 0.0, %v2616
    %v2649 = vsub.f32 0.0, %v2617
    %v2650 = vsub.f32 0.0, %v2618
    %v2651 = vsub.f32 0.0, %v2619
    %v2652 = vsub.f32 0.0, %v2620
    %v2653 = vsub.f32 0.0, %v2621
    %v2654 = vsub.f32 0.0, %v2622
    %v2655 = vsub.f32 0.0, %v2623
    %v2656 = vsub.f32 0.0, %v2624
    %v2657 = vsub.f32 0.0, %v2625
    %v2658 = vsub.f32 0.0, %v2626
    %v2659 = vsub.f32 0.0, %v2627
    %v2660 = vsub.f32 0.0, %v2628
    %v2661 = vsub.f32 0.0, %v2629
    %v2662 = vsub.f32 0.0, %v2630
    %v2663 = vsub.f32 0.0, %v2631
    %v2664 = vsub.f32 0.0, %v2632
    %v2665 = vsub.f32 0.0, %v2633
    %v2666 = vsub.f32 0.0, %v2634
    %v2667 = vsub.f32 0.0, %v2635
    %v2668 = vsub.f32 0.0, %v2636
    %v2669 = vsub.f32 0.0, %v2637
    %v2670 = vsub.f32 0.0, %v2638
    %v2671 = vsub.f32 0.0, %v2639
    %v2672 = vsub.f32 0.0, %v2640
    %v2673 = vmul.f32 %v2641, 1.442695
    %v2674 = vpow.pop %v2673
    %v2675 = vmul.f32 %v2642, 1.442695
    %v2676 = vpow.pop %v2675
    %v2677 = vmul.f32 %v2643, 1.442695
    %v2678 = vpow.pop %v2677
    %v2679 = vmul.f32 %v2644, 1.442695
    %v2680 = vpow.pop %v2679
    %v2681 = vmul.f32 %v2645, 1.442695
    %v2682 = vpow.pop %v2681
    %v2683 = vmul.f32 %v2646, 1.442695
    %v2684 = vpow.pop %v2683
    %v2685 = vmul.f32 %v2647, 1.442695
    %v2686 = vpow.pop %v2685
    %v2687 = vmul.f32 %v2648, 1.442695
    %v2688 = vpow.pop %v2687
    %v2689 = vmul.f32 %v2649, 1.442695
    %v2690 = vpow.pop %v2689
    %v2691 = vmul.f32 %v2650, 1.442695
    %v2692 = vpow.pop %v2691
    %v2693 = vmul.f32 %v2651, 1.442695
    %v2694 = vpow.pop %v2693
    %v2695 = vmul.f32 %v2652, 1.442695
    %v2696 = vpow.pop %v2695
    %v2697 = vmul.f32 %v2653, 1.442695
    %v2698 = vpow.pop %v2697
    %v2699 = vmul.f32 %v2654, 1.442695
    %v2700 = vpow.pop %v2699
    %v2701 = vmul.f32 %v2655, 1.442695
    %v2702 = vpow.pop %v2701
    %v2703 = vmul.f32 %v2656, 1.442695
    %v2704 = vpow.pop %v2703
    %v2705 = vmul.f32 %v2657, 1.442695
    %v2706 = vpow.pop %v2705
    %v2707 = vmul.f32 %v2658, 1.442695
    %v2708 = vpow.pop %v2707
    %v2709 = vmul.f32 %v2659, 1.442695
    %v2710 = vpow.pop %v2709
    %v2711 = vmul.f32 %v2660, 1.442695
    %v2712 = vpow.pop %v2711
    %v2713 = vmul.f32 %v2661, 1.442695
    %v2714 = vpow.pop %v2713
    %v2715 = vmul.f32 %v2662, 1.442695
    %v2716 = vpow.pop %v2715
    %v2717 = vmul.f32 %v2663, 1.442695
    %v2718 = vpow.pop %v2717
    %v2719 = vmul.f32 %v2664, 1.442695
    %v2720 = vpow.pop %v2719
    %v2721 = vmul.f32 %v2665, 1.442695
    %v2722 = vpow.pop %v2721
    %v2723 = vmul.f32 %v2666, 1.442695
    %v2724 = vpow.pop %v2723
    %v2725 = vmul.f32 %v2667, 1.442695
    %v2726 = vpow.pop %v2725
    %v2727 = vmul.f32 %v2668, 1.442695
    %v2728 = vpow.pop %v2727
    %v2729 = vmul.f32 %v2669, 1.442695
    %v2730 = vpow.pop %v2729
    %v2731 = vmul.f32 %v2670, 1.442695
    %v2732 = vpow.pop %v2731
    %v2733 = vmul.f32 %v2671, 1.442695
    %v2734 = vpow.pop %v2733
    %v2735 = vmul.f32 %v2672, 1.442695
    %v2736 = vpow.pop %v2735
    %v2737 = vadd.f32 %v2674, 1.0
    %v2738 = vlog2.pop %v2737
    %v2739 = vmul.f32 %v2738, 0.6931472
    %v2740 = vmul.f32 -0.5, %v2674
    %v2741 = vadd.f32 %v2740, 1.0
    %v2742 = vmul.f32 %v2741, %v2674
    %v2743 = vand.u32 2147483647, %v2674
    %vm2744 = vcmp.lt.f32.partialorder %v2743, 0.0004427343
    %v2745 = vsel %vm2744, %v2742, %v2739
    %v2746 = vadd.f32 %v2676, 1.0
    %v2747 = vlog2.pop %v2746
    %v2748 = vmul.f32 %v2747, 0.6931472
    %v2749 = vmul.f32 -0.5, %v2676
    %v2750 = vadd.f32 %v2749, 1.0
    %v2751 = vmul.f32 %v2750, %v2676
    %v2752 = vand.u32 2147483647, %v2676
    %vm2753 = vcmp.lt.f32.partialorder %v2752, 0.0004427343
    %v2754 = vsel %vm2753, %v2751, %v2748
    %v2755 = vadd.f32 %v2678, 1.0
    %v2756 = vlog2.pop %v2755
    %v2757 = vmul.f32 %v2756, 0.6931472
    %v2758 = vmul.f32 -0.5, %v2678
    %v2759 = vadd.f32 %v2758, 1.0
    %v2760 = vmul.f32 %v2759, %v2678
    %v2761 = vand.u32 2147483647, %v2678
    %vm2762 = vcmp.lt.f32.partialorder %v2761, 0.0004427343
    %v2763 = vsel %vm2762, %v2760, %v2757
    %v2764 = vadd.f32 %v2680, 1.0
    %v2765 = vlog2.pop %v2764
    %v2766 = vmul.f32 %v2765, 0.6931472
    %v2767 = vmul.f32 -0.5, %v2680
    %v2768 = vadd.f32 %v2767, 1.0
    %v2769 = vmul.f32 %v2768, %v2680
    %v2770 = vand.u32 2147483647, %v2680
    %vm2771 = vcmp.lt.f32.partialorder %v2770, 0.0004427343
    %v2772 = vsel %vm2771, %v2769, %v2766
    %v2773 = vadd.f32 %v2682, 1.0
    %v2774 = vlog2.pop %v2773
    %v2775 = vmul.f32 %v2774, 0.6931472
    %v2776 = vmul.f32 -0.5, %v2682
    %v2777 = vadd.f32 %v2776, 1.0
    %v2778 = vmul.f32 %v2777, %v2682
    %v2779 = vand.u32 2147483647, %v2682
    %vm2780 = vcmp.lt.f32.partialorder %v2779, 0.0004427343
    %v2781 = vsel %vm2780, %v2778, %v2775
    %v2782 = vadd.f32 %v2684, 1.0
    %v2783 = vlog2.pop %v2782
    %v2784 = vmul.f32 %v2783, 0.6931472
    %v2785 = vmul.f32 -0.5, %v2684
    %v2786 = vadd.f32 %v2785, 1.0
    %v2787 = vmul.f32 %v2786, %v2684
    %v2788 = vand.u32 2147483647, %v2684
    %vm2789 = vcmp.lt.f32.partialorder %v2788, 0.0004427343
    %v2790 = vsel %vm2789, %v2787, %v2784
    %v2791 = vadd.f32 %v2686, 1.0
    %v2792 = vlog2.pop %v2791
    %v2793 = vmul.f32 %v2792, 0.6931472
    %v2794 = vmul.f32 -0.5, %v2686
    %v2795 = vadd.f32 %v2794, 1.0
    %v2796 = vmul.f32 %v2795, %v2686
    %v2797 = vand.u32 2147483647, %v2686
    %vm2798 = vcmp.lt.f32.partialorder %v2797, 0.0004427343
    %v2799 = vsel %vm2798, %v2796, %v2793
    %v2800 = vadd.f32 %v2688, 1.0
    %v2801 = vlog2.pop %v2800
    %v2802 = vmul.f32 %v2801, 0.6931472
    %v2803 = vmul.f32 -0.5, %v2688
    %v2804 = vadd.f32 %v2803, 1.0
    %v2805 = vmul.f32 %v2804, %v2688
    %v2806 = vand.u32 2147483647, %v2688
    %vm2807 = vcmp.lt.f32.partialorder %v2806, 0.0004427343
    %v2808 = vsel %vm2807, %v2805, %v2802
    %v2809 = vadd.f32 %v2690, 1.0
    %v2810 = vlog2.pop %v2809
    %v2811 = vmul.f32 %v2810, 0.6931472
    %v2812 = vmul.f32 -0.5, %v2690
    %v2813 = vadd.f32 %v2812, 1.0
    %v2814 = vmul.f32 %v2813, %v2690
    %v2815 = vand.u32 2147483647, %v2690
    %vm2816 = vcmp.lt.f32.partialorder %v2815, 0.0004427343
    %v2817 = vsel %vm2816, %v2814, %v2811
    %v2818 = vadd.f32 %v2692, 1.0
    %v2819 = vlog2.pop %v2818
    %v2820 = vmul.f32 %v2819, 0.6931472
    %v2821 = vmul.f32 -0.5, %v2692
    %v2822 = vadd.f32 %v2821, 1.0
    %v2823 = vmul.f32 %v2822, %v2692
    %v2824 = vand.u32 2147483647, %v2692
    %vm2825 = vcmp.lt.f32.partialorder %v2824, 0.0004427343
    %v2826 = vsel %vm2825, %v2823, %v2820
    %v2827 = vadd.f32 %v2694, 1.0
    %v2828 = vlog2.pop %v2827
    %v2829 = vmul.f32 %v2828, 0.6931472
    %v2830 = vmul.f32 -0.5, %v2694
    %v2831 = vadd.f32 %v2830, 1.0
    %v2832 = vmul.f32 %v2831, %v2694
    %v2833 = vand.u32 2147483647, %v2694
    %vm2834 = vcmp.lt.f32.partialorder %v2833, 0.0004427343
    %v2835 = vsel %vm2834, %v2832, %v2829
    %v2836 = vadd.f32 %v2696, 1.0
    %v2837 = vlog2.pop %v2836
    %v2838 = vmul.f32 %v2837, 0.6931472
    %v2839 = vmul.f32 -0.5, %v2696
    %v2840 = vadd.f32 %v2839, 1.0
    %v2841 = vmul.f32 %v2840, %v2696
    %v2842 = vand.u32 2147483647, %v2696
    %vm2843 = vcmp.lt.f32.partialorder %v2842, 0.0004427343
    %v2844 = vsel %vm2843, %v2841, %v2838
    %v2845 = vadd.f32 %v2698, 1.0
    %v2846 = vlog2.pop %v2845
    %v2847 = vmul.f32 %v2846, 0.6931472
    %v2848 = vmul.f32 -0.5, %v2698
    %v2849 = vadd.f32 %v2848, 1.0
    %v2850 = vmul.f32 %v2849, %v2698
    %v2851 = vand.u32 2147483647, %v2698
    %vm2852 = vcmp.lt.f32.partialorder %v2851, 0.0004427343
    %v2853 = vsel %vm2852, %v2850, %v2847
    %v2854 = vadd.f32 %v2700, 1.0
    %v2855 = vlog2.pop %v2854
    %v2856 = vmul.f32 %v2855, 0.6931472
    %v2857 = vmul.f32 -0.5, %v2700
    %v2858 = vadd.f32 %v2857, 1.0
    %v2859 = vmul.f32 %v2858, %v2700
    %v2860 = vand.u32 2147483647, %v2700
    %vm2861 = vcmp.lt.f32.partialorder %v2860, 0.0004427343
    %v2862 = vsel %vm2861, %v2859, %v2856
    %v2863 = vadd.f32 %v2702, 1.0
    %v2864 = vlog2.pop %v2863
    %v2865 = vmul.f32 %v2864, 0.6931472
    %v2866 = vmul.f32 -0.5, %v2702
    %v2867 = vadd.f32 %v2866, 1.0
    %v2868 = vmul.f32 %v2867, %v2702
    %v2869 = vand.u32 2147483647, %v2702
    %vm2870 = vcmp.lt.f32.partialorder %v2869, 0.0004427343
    %v2871 = vsel %vm2870, %v2868, %v2865
    %v2872 = vadd.f32 %v2704, 1.0
    %v2873 = vlog2.pop %v2872
    %v2874 = vmul.f32 %v2873, 0.6931472
    %v2875 = vmul.f32 -0.5, %v2704
    %v2876 = vadd.f32 %v2875, 1.0
    %v2877 = vmul.f32 %v2876, %v2704
    %v2878 = vand.u32 2147483647, %v2704
    %vm2879 = vcmp.lt.f32.partialorder %v2878, 0.0004427343
    %v2880 = vsel %vm2879, %v2877, %v2874
    %v2881 = vadd.f32 %v2706, 1.0
    %v2882 = vlog2.pop %v2881
    %v2883 = vmul.f32 %v2882, 0.6931472
    %v2884 = vmul.f32 -0.5, %v2706
    %v2885 = vadd.f32 %v2884, 1.0
    %v2886 = vmul.f32 %v2885, %v2706
    %v2887 = vand.u32 2147483647, %v2706
    %vm2888 = vcmp.lt.f32.partialorder %v2887, 0.0004427343
    %v2889 = vsel %vm2888, %v2886, %v2883
    %v2890 = vadd.f32 %v2708, 1.0
    %v2891 = vlog2.pop %v2890
    %v2892 = vmul.f32 %v2891, 0.6931472
    %v2893 = vmul.f32 -0.5, %v2708
    %v2894 = vadd.f32 %v2893, 1.0
    %v2895 = vmul.f32 %v2894, %v2708
    %v2896 = vand.u32 2147483647, %v2708
    %vm2897 = vcmp.lt.f32.partialorder %v2896, 0.0004427343
    %v2898 = vsel %vm2897, %v2895, %v2892
    %v2899 = vadd.f32 %v2710, 1.0
    %v2900 = vlog2.pop %v2899
    %v2901 = vmul.f32 %v2900, 0.6931472
    %v2902 = vmul.f32 -0.5, %v2710
    %v2903 = vadd.f32 %v2902, 1.0
    %v2904 = vmul.f32 %v2903, %v2710
    %v2905 = vand.u32 2147483647, %v2710
    %vm2906 = vcmp.lt.f32.partialorder %v2905, 0.0004427343
    %v2907 = vsel %vm2906, %v2904, %v2901
    %v2908 = vadd.f32 %v2712, 1.0
    %v2909 = vlog2.pop %v2908
    %v2910 = vmul.f32 %v2909, 0.6931472
    %v2911 = vmul.f32 -0.5, %v2712
    %v2912 = vadd.f32 %v2911, 1.0
    %v2913 = vmul.f32 %v2912, %v2712
    %v2914 = vand.u32 2147483647, %v2712
    %vm2915 = vcmp.lt.f32.partialorder %v2914, 0.0004427343
    %v2916 = vsel %vm2915, %v2913, %v2910
    %v2917 = vadd.f32 %v2714, 1.0
    %v2918 = vlog2.pop %v2917
    %v2919 = vmul.f32 %v2918, 0.6931472
    %v2920 = vmul.f32 -0.5, %v2714
    %v2921 = vadd.f32 %v2920, 1.0
    %v2922 = vmul.f32 %v2921, %v2714
    %v2923 = vand.u32 2147483647, %v2714
    %vm2924 = vcmp.lt.f32.partialorder %v2923, 0.0004427343
    %v2925 = vsel %vm2924, %v2922, %v2919
    %v2926 = vadd.f32 %v2716, 1.0
    %v2927 = vlog2.pop %v2926
    %v2928 = vmul.f32 %v2927, 0.6931472
    %v2929 = vmul.f32 -0.5, %v2716
    %v2930 = vadd.f32 %v2929, 1.0
    %v2931 = vmul.f32 %v2930, %v2716
    %v2932 = vand.u32 2147483647, %v2716
    %vm2933 = vcmp.lt.f32.partialorder %v2932, 0.0004427343
    %v2934 = vsel %vm2933, %v2931, %v2928
    %v2935 = vadd.f32 %v2718, 1.0
    %v2936 = vlog2.pop %v2935
    %v2937 = vmul.f32 %v2936, 0.6931472
    %v2938 = vmul.f32 -0.5, %v2718
    %v2939 = vadd.f32 %v2938, 1.0
    %v2940 = vmul.f32 %v2939, %v2718
    %v2941 = vand.u32 2147483647, %v2718
    %vm2942 = vcmp.lt.f32.partialorder %v2941, 0.0004427343
    %v2943 = vsel %vm2942, %v2940, %v2937
    %v2944 = vadd.f32 %v2720, 1.0
    %v2945 = vlog2.pop %v2944
    %v2946 = vmul.f32 %v2945, 0.6931472
    %v2947 = vmul.f32 -0.5, %v2720
    %v2948 = vadd.f32 %v2947, 1.0
    %v2949 = vmul.f32 %v2948, %v2720
    %v2950 = vand.u32 2147483647, %v2720
    %vm2951 = vcmp.lt.f32.partialorder %v2950, 0.0004427343
    %v2952 = vsel %vm2951, %v2949, %v2946
    %v2953 = vadd.f32 %v2722, 1.0
    %v2954 = vlog2.pop %v2953
    %v2955 = vmul.f32 %v2954, 0.6931472
    %v2956 = vmul.f32 -0.5, %v2722
    %v2957 = vadd.f32 %v2956, 1.0
    %v2958 = vmul.f32 %v2957, %v2722
    %v2959 = vand.u32 2147483647, %v2722
    %vm2960 = vcmp.lt.f32.partialorder %v2959, 0.0004427343
    %v2961 = vsel %vm2960, %v2958, %v2955
    %v2962 = vadd.f32 %v2724, 1.0
    %v2963 = vlog2.pop %v2962
    %v2964 = vmul.f32 %v2963, 0.6931472
    %v2965 = vmul.f32 -0.5, %v2724
    %v2966 = vadd.f32 %v2965, 1.0
    %v2967 = vmul.f32 %v2966, %v2724
    %v2968 = vand.u32 2147483647, %v2724
    %vm2969 = vcmp.lt.f32.partialorder %v2968, 0.0004427343
    %v2970 = vsel %vm2969, %v2967, %v2964
    %v2971 = vadd.f32 %v2726, 1.0
    %v2972 = vlog2.pop %v2971
    %v2973 = vmul.f32 %v2972, 0.6931472
    %v2974 = vmul.f32 -0.5, %v2726
    %v2975 = vadd.f32 %v2974, 1.0
    %v2976 = vmul.f32 %v2975, %v2726
    %v2977 = vand.u32 2147483647, %v2726
    %vm2978 = vcmp.lt.f32.partialorder %v2977, 0.0004427343
    %v2979 = vsel %vm2978, %v2976, %v2973
    %v2980 = vadd.f32 %v2728, 1.0
    %v2981 = vlog2.pop %v2980
    %v2982 = vmul.f32 %v2981, 0.6931472
    %v2983 = vmul.f32 -0.5, %v2728
    %v2984 = vadd.f32 %v2983, 1.0
    %v2985 = vmul.f32 %v2984, %v2728
    %v2986 = vand.u32 2147483647, %v2728
    %vm2987 = vcmp.lt.f32.partialorder %v2986, 0.0004427343
    %v2988 = vsel %vm2987, %v2985, %v2982
    %v2989 = vadd.f32 %v2730, 1.0
    %v2990 = vlog2.pop %v2989
    %v2991 = vmul.f32 %v2990, 0.6931472
    %v2992 = vmul.f32 -0.5, %v2730
    %v2993 = vadd.f32 %v2992, 1.0
    %v2994 = vmul.f32 %v2993, %v2730
    %v2995 = vand.u32 2147483647, %v2730
    %vm2996 = vcmp.lt.f32.partialorder %v2995, 0.0004427343
    %v2997 = vsel %vm2996, %v2994, %v2991
    %v2998 = vadd.f32 %v2732, 1.0
    %v2999 = vlog2.pop %v2998
    %v3000 = vmul.f32 %v2999, 0.6931472
    %v3001 = vmul.f32 -0.5, %v2732
    %v3002 = vadd.f32 %v3001, 1.0
    %v3003 = vmul.f32 %v3002, %v2732
    %v3004 = vand.u32 2147483647, %v2732
    %vm3005 = vcmp.lt.f32.partialorder %v3004, 0.0004427343
    %v3006 = vsel %vm3005, %v3003, %v3000
    %v3007 = vadd.f32 %v2734, 1.0
    %v3008 = vlog2.pop %v3007
    %v3009 = vmul.f32 %v3008, 0.6931472
    %v3010 = vmul.f32 -0.5, %v2734
    %v3011 = vadd.f32 %v3010, 1.0
    %v3012 = vmul.f32 %v3011, %v2734
    %v3013 = vand.u32 2147483647, %v2734
    %vm3014 = vcmp.lt.f32.partialorder %v3013, 0.0004427343
    %v3015 = vsel %vm3014, %v3012, %v3009
    %v3016 = vadd.f32 %v2736, 1.0
    %v3017 = vlog2.pop %v3016
    %v3018 = vmul.f32 %v3017, 0.6931472
    %v3019 = vmul.f32 -0.5, %v2736
    %v3020 = vadd.f32 %v3019, 1.0
    %v3021 = vmul.f32 %v3020, %v2736
    %v3022 = vand.u32 2147483647, %v2736
    %vm3023 = vcmp.lt.f32.partialorder %v3022, 0.0004427343
    %v3024 = vsel %vm3023, %v3021, %v3018
    %v3025 = vadd.f32 %v2577, %v2745
    %v3026 = vadd.f32 %v2578, %v2754
    %v3027 = vadd.f32 %v2579, %v2763
    %v3028 = vadd.f32 %v2580, %v2772
    %v3029 = vadd.f32 %v2581, %v2781
    %v3030 = vadd.f32 %v2582, %v2790
    %v3031 = vadd.f32 %v2583, %v2799
    %v3032 = vadd.f32 %v2584, %v2808
    %v3033 = vadd.f32 %v2585, %v2817
    %v3034 = vadd.f32 %v2586, %v2826
    %v3035 = vadd.f32 %v2587, %v2835
    %v3036 = vadd.f32 %v2588, %v2844
    %v3037 = vadd.f32 %v2589, %v2853
    %v3038 = vadd.f32 %v2590, %v2862
    %v3039 = vadd.f32 %v2591, %v2871
    %v3040 = vadd.f32 %v2592, %v2880
    %v3041 = vadd.f32 %v2593, %v2889
    %v3042 = vadd.f32 %v2594, %v2898
    %v3043 = vadd.f32 %v2595, %v2907
    %v3044 = vadd.f32 %v2596, %v2916
    %v3045 = vadd.f32 %v2597, %v2925
    %v3046 = vadd.f32 %v2598, %v2934
    %v3047 = vadd.f32 %v2599, %v2943
    %v3048 = vadd.f32 %v2600, %v2952
    %v3049 = vadd.f32 %v2601, %v2961
    %v3050 = vadd.f32 %v2602, %v2970
    %v3051 = vadd.f32 %v2603, %v2979
    %v3052 = vadd.f32 %v2604, %v2988
    %v3053 = vadd.f32 %v2605, %v2997
    %v3054 = vadd.f32 %v2606, %v3006
    %v3055 = vadd.f32 %v2607, %v3015
    %v3056 = vadd.f32 %v2608, %v3024
    %v3057 = vsub.f32 %v3025, 0.6931472
    %v3058 = vsub.f32 %v3026, 0.6931472
    %v3059 = vsub.f32 %v3027, 0.6931472
    %v3060 = vsub.f32 %v3028, 0.6931472
    %v3061 = vsub.f32 %v3029, 0.6931472
    %v3062 = vsub.f32 %v3030, 0.6931472
    %v3063 = vsub.f32 %v3031, 0.6931472
    %v3064 = vsub.f32 %v3032, 0.6931472
    %v3065 = vsub.f32 %v3033, 0.6931472
    %v3066 = vsub.f32 %v3034, 0.6931472
    %v3067 = vsub.f32 %v3035, 0.6931472
    %v3068 = vsub.f32 %v3036, 0.6931472
    %v3069 = vsub.f32 %v3037, 0.6931472
    %v3070 = vsub.f32 %v3038, 0.6931472
    %v3071 = vsub.f32 %v3039, 0.6931472
    %v3072 = vsub.f32 %v3040, 0.6931472
    %v3073 = vsub.f32 %v3041, 0.6931472
    %v3074 = vsub.f32 %v3042, 0.6931472
    %v3075 = vsub.f32 %v3043, 0.6931472
    %v3076 = vsub.f32 %v3044, 0.6931472
    %v3077 = vsub.f32 %v3045, 0.6931472
    %v3078 = vsub.f32 %v3046, 0.6931472
    %v3079 = vsub.f32 %v3047, 0.6931472
    %v3080 = vsub.f32 %v3048, 0.6931472
    %v3081 = vsub.f32 %v3049, 0.6931472
    %v3082 = vsub.f32 %v3050, 0.6931472
    %v3083 = vsub.f32 %v3051, 0.6931472
    %v3084 = vsub.f32 %v3052, 0.6931472
    %v3085 = vsub.f32 %v3053, 0.6931472
    %v3086 = vsub.f32 %v3054, 0.6931472
    %v3087 = vsub.f32 %v3055, 0.6931472
    %v3088 = vsub.f32 %v3056, 0.6931472
    %v3090 = vlaneseq
    %v3091 = vshrl.u32 %v3090, 7
    %v3092 = vsub.s32 0, %v3091
    %v3093 = vrot.slane %v2341, %v3092
    %3095 = vmatprep.subr.mxu0 0.0
    %3096 = vmatpush1.msra.mxu0 %v2271
    %3097 = vmatprep.subr.mxu0 0.0
    %3098 = vmatpush1.msra.mxu0 %v2272
    %3099 = vmatprep.subr.mxu0 0.0
    %3100 = vmatpush1.msra.mxu0 %v2273
    %3101 = vmatprep.subr.mxu0 0.0
    %3102 = vmatpush1.msra.mxu0 %v2274
    %3103 = vmatprep.subr.mxu0 0.0
    %3104 = vmatpush1.msra.mxu0 %v2275
    %3105 = vmatprep.subr.mxu0 0.0
    %3106 = vmatpush1.msra.mxu0 %v2276
    %3107 = vmatprep.subr.mxu0 0.0
    %3108 = vmatpush1.msra.mxu0 %v2277
    %3109 = vmatprep.subr.mxu0 0.0
    %3110 = vmatpush1.msra.mxu0 %v2278
    %3111 = vmatprep.subr.mxu0 0.0
    %3112 = vmatpush1.msra.mxu0 %v2279
    %3113 = vmatprep.subr.mxu0 0.0
    %3114 = vmatpush1.msra.mxu0 %v2280
    %3115 = vmatprep.subr.mxu0 0.0
    %3116 = vmatpush1.msra.mxu0 %v2281
    %3117 = vmatprep.subr.mxu0 0.0
    %3118 = vmatpush1.msra.mxu0 %v2282
    %3119 = vmatprep.subr.mxu0 0.0
    %3120 = vmatpush1.msra.mxu0 %v2283
    %3121 = vmatprep.subr.mxu0 0.0
    %3122 = vmatpush1.msra.mxu0 %v2284
    %3123 = vmatprep.subr.mxu0 0.0
    %3124 = vmatpush1.msra.mxu0 %v2285
    %3125 = vmatprep.subr.mxu0 0.0
    %3126 = vmatpush1.msra.mxu0 %v2286
    %3127 = vmatprep.subr.mxu0 0.0
    %3128 = vmatpush1.msra.mxu0 0.0
    %3129 = vmatprep.subr.mxu0 0.0
    %3130 = vmatpush1.msra.mxu0 0.0
    %3131 = vmatprep.subr.mxu0 0.0
    %3132 = vmatpush1.msra.mxu0 0.0
    %3133 = vmatprep.subr.mxu0 0.0
    %3134 = vmatpush1.msra.mxu0 0.0
    %3135 = vmatprep.subr.mxu0 0.0
    %3136 = vmatpush1.msra.mxu0 0.0
    %3137 = vmatprep.subr.mxu0 0.0
    %3138 = vmatpush1.msra.mxu0 0.0
    %3139 = vmatprep.subr.mxu0 0.0
    %3140 = vmatpush1.msra.mxu0 0.0
    %3141 = vmatprep.subr.mxu0 0.0
    %3142 = vmatpush1.msra.mxu0 0.0
    %3143 = vmatprep.subr.mxu0 0.0
    %3144 = vmatpush1.msra.mxu0 0.0
    %3145 = vmatprep.subr.mxu0 0.0
    %3146 = vmatpush1.msra.mxu0 0.0
    %3147 = vmatprep.subr.mxu0 0.0
    %3148 = vmatpush1.msra.mxu0 0.0
    %3149 = vmatprep.subr.mxu0 0.0
    %3150 = vmatpush1.msra.mxu0 0.0
    %3151 = vmatprep.subr.mxu0 0.0
    %3152 = vmatpush1.msra.mxu0 0.0
    %3153 = vmatprep.subr.mxu0 0.0
    %3154 = vmatpush1.msra.mxu0 0.0
    %3155 = vmatprep.subr.mxu0 0.0
    %3156 = vmatpush1.msra.mxu0 0.0
    %3157 = vmatprep.subr.mxu0 0.0
    %3158 = vmatpush1.msra.mxu0 0.0
    %3159 = vmatprep.mubr.f32.mxu0 0.0
    %3160 = vmatmul.mubr.f32.gmra.mrb[0].mxu0 %v3057
    %v3161 = vpop.f32.mrb[0].mxu0
    %v3162 = vadd.f32 %v3093, %v3161
    %v3163 = vpop.f32.mrb[0].mxu0
    %3164 = vmatprep.mubr.f32.mxu0 0.0
    %3165 = vmatmul.mubr.f32.gmra.mrb[0].mxu0 %v3058
    %v3166 = vpop.f32.mrb[0].mxu0
    %v3167 = vadd.f32 %v3093, %v3166
    %v3168 = vpop.f32.mrb[0].mxu0
    %3169 = vmatprep.mubr.f32.mxu0 0.0
    %3170 = vmatmul.mubr.f32.gmra.mrb[0].mxu0 %v3059
    %v3171 = vpop.f32.mrb[0].mxu0
    %v3172 = vadd.f32 %v3093, %v3171
    %v3173 = vpop.f32.mrb[0].mxu0
    %3174 = vmatprep.mubr.f32.mxu0 0.0
    %3175 = vmatmul.mubr.f32.gmra.mrb[0].mxu0 %v3060
    %v3176 = vpop.f32.mrb[0].mxu0
    %v3177 = vadd.f32 %v3093, %v3176
    %v3178 = vpop.f32.mrb[0].mxu0
    %3179 = vmatprep.mubr.f32.mxu0 0.0
    %3180 = vmatmul.mubr.f32.gmra.mrb[0].mxu0 %v3061
    %v3181 = vpop.f32.mrb[0].mxu0
    %v3182 = vadd.f32 %v3093, %v3181
    %v3183 = vpop.f32.mrb[0].mxu0
    %3184 = vmatprep.mubr.f32.mxu0 0.0
    %3185 = vmatmul.mubr.f32.gmra.mrb[0].mxu0 %v3062
    %v3186 = vpop.f32.mrb[0].mxu0
    %v3187 = vadd.f32 %v3093, %v3186
    %v3188 = vpop.f32.mrb[0].mxu0
    %3189 = vmatprep.mubr.f32.mxu0 0.0
    %3190 = vmatmul.mubr.f32.gmra.mrb[0].mxu0 %v3063
    %v3191 = vpop.f32.mrb[0].mxu0
    %v3192 = vadd.f32 %v3093, %v3191
    %v3193 = vpop.f32.mrb[0].mxu0
    %3194 = vmatprep.mubr.f32.mxu0 0.0
    %3195 = vmatmul.mubr.f32.gmra.mrb[0].mxu0 %v3064
    %v3196 = vpop.f32.mrb[0].mxu0
    %v3197 = vadd.f32 %v3093, %v3196
    %v3198 = vpop.f32.mrb[0].mxu0
    %3199 = vmatprep.mubr.f32.mxu0 0.0
    %3200 = vmatmul.mubr.f32.gmra.mrb[0].mxu0 %v3065
    %v3201 = vpop.f32.mrb[0].mxu0
    %v3202 = vadd.f32 %v3093, %v3201
    %v3203 = vpop.f32.mrb[0].mxu0
    %3204 = vmatprep.mubr.f32.mxu0 0.0
    %3205 = vmatmul.mubr.f32.gmra.mrb[0].mxu0 %v3066
    %v3206 = vpop.f32.mrb[0].mxu0
    %v3207 = vadd.f32 %v3093, %v3206
    %v3208 = vpop.f32.mrb[0].mxu0
    %3209 = vmatprep.mubr.f32.mxu0 0.0
    %3210 = vmatmul.mubr.f32.gmra.mrb[0].mxu0 %v3067
    %v3211 = vpop.f32.mrb[0].mxu0
    %v3212 = vadd.f32 %v3093, %v3211
    %v3213 = vpop.f32.mrb[0].mxu0
    %3214 = vmatprep.mubr.f32.mxu0 0.0
    %3215 = vmatmul.mubr.f32.gmra.mrb[0].mxu0 %v3068
    %v3216 = vpop.f32.mrb[0].mxu0
    %v3217 = vadd.f32 %v3093, %v3216
    %v3218 = vpop.f32.mrb[0].mxu0
    %3219 = vmatprep.mubr.f32.mxu0 0.0
    %3220 = vmatmul.mubr.f32.gmra.mrb[0].mxu0 %v3069
    %v3221 = vpop.f32.mrb[0].mxu0
    %v3222 = vadd.f32 %v3093, %v3221
    %v3223 = vpop.f32.mrb[0].mxu0
    %3224 = vmatprep.mubr.f32.mxu0 0.0
    %3225 = vmatmul.mubr.f32.gmra.mrb[0].mxu0 %v3070
    %v3226 = vpop.f32.mrb[0].mxu0
    %v3227 = vadd.f32 %v3093, %v3226
    %v3228 = vpop.f32.mrb[0].mxu0
    %3229 = vmatprep.mubr.f32.mxu0 0.0
    %3230 = vmatmul.mubr.f32.gmra.mrb[0].mxu0 %v3071
    %v3231 = vpop.f32.mrb[0].mxu0
    %v3232 = vadd.f32 %v3093, %v3231
    %v3233 = vpop.f32.mrb[0].mxu0
    %3234 = vmatprep.mubr.f32.mxu0 0.0
    %3235 = vmatmul.mubr.f32.gmra.mrb[0].mxu0 %v3072
    %v3236 = vpop.f32.mrb[0].mxu0
    %v3237 = vadd.f32 %v3093, %v3236
    %v3238 = vpop.f32.mrb[0].mxu0
    %3239 = vmatprep.mubr.f32.mxu0 0.0
    %3240 = vmatmul.mubr.f32.gmra.mrb[0].mxu0 %v3073
    %v3241 = vpop.f32.mrb[0].mxu0
    %v3242 = vadd.f32 %v3093, %v3241
    %v3243 = vpop.f32.mrb[0].mxu0
    %3244 = vmatprep.mubr.f32.mxu0 0.0
    %3245 = vmatmul.mubr.f32.gmra.mrb[0].mxu0 %v3074
    %v3246 = vpop.f32.mrb[0].mxu0
    %v3247 = vadd.f32 %v3093, %v3246
    %v3248 = vpop.f32.mrb[0].mxu0
    %3249 = vmatprep.mubr.f32.mxu0 0.0
    %3250 = vmatmul.mubr.f32.gmra.mrb[0].mxu0 %v3075
    %v3251 = vpop.f32.mrb[0].mxu0
    %v3252 = vadd.f32 %v3093, %v3251
    %v3253 = vpop.f32.mrb[0].mxu0
    %3254 = vmatprep.mubr.f32.mxu0 0.0
    %3255 = vmatmul.mubr.f32.gmra.mrb[0].mxu0 %v3076
    %v3256 = vpop.f32.mrb[0].mxu0
    %v3257 = vadd.f32 %v3093, %v3256
    %v3258 = vpop.f32.mrb[0].mxu0
    %3259 = vmatprep.mubr.f32.mxu0 0.0
    %3260 = vmatmul.mubr.f32.gmra.mrb[0].mxu0 %v3077
    %v3261 = vpop.f32.mrb[0].mxu0
    %v3262 = vadd.f32 %v3093, %v3261
    %v3263 = vpop.f32.mrb[0].mxu0
    %3264 = vmatprep.mubr.f32.mxu0 0.0
    %3265 = vmatmul.mubr.f32.gmra.mrb[0].mxu0 %v3078
    %v3266 = vpop.f32.mrb[0].mxu0
    %v3267 = vadd.f32 %v3093, %v3266
    %v3268 = vpop.f32.mrb[0].mxu0
    %3269 = vmatprep.mubr.f32.mxu0 0.0
    %3270 = vmatmul.mubr.f32.gmra.mrb[0].mxu0 %v3079
    %v3271 = vpop.f32.mrb[0].mxu0
    %v3272 = vadd.f32 %v3093, %v3271
    %v3273 = vpop.f32.mrb[0].mxu0
    %3274 = vmatprep.mubr.f32.mxu0 0.0
    %3275 = vmatmul.mubr.f32.gmra.mrb[0].mxu0 %v3080
    %v3276 = vpop.f32.mrb[0].mxu0
    %v3277 = vadd.f32 %v3093, %v3276
    %v3278 = vpop.f32.mrb[0].mxu0
    %3279 = vmatprep.mubr.f32.mxu0 0.0
    %3280 = vmatmul.mubr.f32.gmra.mrb[0].mxu0 %v3081
    %v3281 = vpop.f32.mrb[0].mxu0
    %v3282 = vadd.f32 %v3093, %v3281
    %v3283 = vpop.f32.mrb[0].mxu0
    %3284 = vmatprep.mubr.f32.mxu0 0.0
    %3285 = vmatmul.mubr.f32.gmra.mrb[0].mxu0 %v3082
    %v3286 = vpop.f32.mrb[0].mxu0
    %v3287 = vadd.f32 %v3093, %v3286
    %v3288 = vpop.f32.mrb[0].mxu0
    %3289 = vmatprep.mubr.f32.mxu0 0.0
    %3290 = vmatmul.mubr.f32.gmra.mrb[0].mxu0 %v3083
    %v3291 = vpop.f32.mrb[0].mxu0
    %v3292 = vadd.f32 %v3093, %v3291
    %v3293 = vpop.f32.mrb[0].mxu0
    %3294 = vmatprep.mubr.f32.mxu0 0.0
    %3295 = vmatmul.mubr.f32.gmra.mrb[0].mxu0 %v3084
    %v3296 = vpop.f32.mrb[0].mxu0
    %v3297 = vadd.f32 %v3093, %v3296
    %v3298 = vpop.f32.mrb[0].mxu0
    %3299 = vmatprep.mubr.f32.mxu0 0.0
    %3300 = vmatmul.mubr.f32.gmra.mrb[0].mxu0 %v3085
    %v3301 = vpop.f32.mrb[0].mxu0
    %v3302 = vadd.f32 %v3093, %v3301
    %v3303 = vpop.f32.mrb[0].mxu0
    %3304 = vmatprep.mubr.f32.mxu0 0.0
    %3305 = vmatmul.mubr.f32.gmra.mrb[0].mxu0 %v3086
    %v3306 = vpop.f32.mrb[0].mxu0
    %v3307 = vadd.f32 %v3093, %v3306
    %v3308 = vpop.f32.mrb[0].mxu0
    %3309 = vmatprep.mubr.f32.mxu0 0.0
    %3310 = vmatmul.mubr.f32.gmra.mrb[0].mxu0 %v3087
    %v3311 = vpop.f32.mrb[0].mxu0
    %v3312 = vadd.f32 %v3093, %v3311
    %v3313 = vpop.f32.mrb[0].mxu0
    %3314 = vmatprep.mubr.f32.mxu0 0.0
    %3315 = vmatmul.mubr.f32.gmra.mrb[0].mxu0 %v3088
    %v3316 = vpop.f32.mrb[0].mxu0
    %v3317 = vadd.f32 %v3093, %v3316
    %v3318 = vpop.f32.mrb[0].mxu0
    %3319 = vdwg.mxu0
    %v3320 = vmul.f32 %v3162, %v1465
    %v3321 = vmul.f32 %v3167, %v1469
    %v3322 = vmul.f32 %v3172, %v1473
    %v3323 = vmul.f32 %v3177, %v1477
    %v3324 = vmul.f32 %v3182, %v1481
    %v3325 = vmul.f32 %v3187, %v1485
    %v3326 = vmul.f32 %v3192, %v1489
    %v3327 = vmul.f32 %v3197, %v1493
    %v3328 = vmul.f32 %v3202, %v1497
    %v3329 = vmul.f32 %v3207, %v1501
    %v3330 = vmul.f32 %v3212, %v1505
    %v3331 = vmul.f32 %v3217, %v1509
    %v3332 = vmul.f32 %v3222, %v1513
    %v3333 = vmul.f32 %v3227, %v1517
    %v3334 = vmul.f32 %v3232, %v1521
    %v3335 = vmul.f32 %v3237, %v1525
    %v3336 = vmul.f32 %v3242, %v1529
    %v3337 = vmul.f32 %v3247, %v1533
    %v3338 = vmul.f32 %v3252, %v1537
    %v3339 = vmul.f32 %v3257, %v1541
    %v3340 = vmul.f32 %v3262, %v1545
    %v3341 = vmul.f32 %v3267, %v1549
    %v3342 = vmul.f32 %v3272, %v1553
    %v3343 = vmul.f32 %v3277, %v1557
    %v3344 = vmul.f32 %v3282, %v1561
    %v3345 = vmul.f32 %v3287, %v1565
    %v3346 = vmul.f32 %v3292, %v1569
    %v3347 = vmul.f32 %v3297, %v1573
    %v3348 = vmul.f32 %v3302, %v1577
    %v3349 = vmul.f32 %v3307, %v1581
    %v3350 = vmul.f32 %v3312, %v1585
    %v3351 = vmul.f32 %v3317, %v1589
    %3352 = vmatprep.subr.mxu0 0.0
    %3353 = vmatpush1.msra.mxu0 %v2288
    %3354 = vmatprep.subr.mxu0 0.0
    %3355 = vmatpush1.msra.mxu0 %v2289
    %3356 = vmatprep.subr.mxu0 0.0
    %3357 = vmatpush1.msra.mxu0 %v2290
    %3358 = vmatprep.subr.mxu0 0.0
    %3359 = vmatpush1.msra.mxu0 %v2291
    %3360 = vmatprep.subr.mxu0 0.0
    %3361 = vmatpush1.msra.mxu0 %v2292
    %3362 = vmatprep.subr.mxu0 0.0
    %3363 = vmatpush1.msra.mxu0 %v2293
    %3364 = vmatprep.subr.mxu0 0.0
    %3365 = vmatpush1.msra.mxu0 %v2294
    %3366 = vmatprep.subr.mxu0 0.0
    %3367 = vmatpush1.msra.mxu0 %v2295
    %3368 = vmatprep.subr.mxu0 0.0
    %3369 = vmatpush1.msra.mxu0 %v2296
    %3370 = vmatprep.subr.mxu0 0.0
    %3371 = vmatpush1.msra.mxu0 %v2297
    %3372 = vmatprep.subr.mxu0 0.0
    %3373 = vmatpush1.msra.mxu0 %v2298
    %3374 = vmatprep.subr.mxu0 0.0
    %3375 = vmatpush1.msra.mxu0 %v2299
    %3376 = vmatprep.subr.mxu0 0.0
    %3377 = vmatpush1.msra.mxu0 %v2300
    %3378 = vmatprep.subr.mxu0 0.0
    %3379 = vmatpush1.msra.mxu0 %v2301
    %3380 = vmatprep.subr.mxu0 0.0
    %3381 = vmatpush1.msra.mxu0 %v2302
    %3382 = vmatprep.subr.mxu0 0.0
    %3383 = vmatpush1.msra.mxu0 %v2303
    %3384 = vmatprep.subr.mxu0 0.0
    %3385 = vmatpush1.msra.mxu0 0.0
    %3386 = vmatprep.subr.mxu0 0.0
    %3387 = vmatpush1.msra.mxu0 0.0
    %3388 = vmatprep.subr.mxu0 0.0
    %3389 = vmatpush1.msra.mxu0 0.0
    %3390 = vmatprep.subr.mxu0 0.0
    %3391 = vmatpush1.msra.mxu0 0.0
    %3392 = vmatprep.subr.mxu0 0.0
    %3393 = vmatpush1.msra.mxu0 0.0
    %3394 = vmatprep.subr.mxu0 0.0
    %3395 = vmatpush1.msra.mxu0 0.0
    %3396 = vmatprep.subr.mxu0 0.0
    %3397 = vmatpush1.msra.mxu0 0.0
    %3398 = vmatprep.subr.mxu0 0.0
    %3399 = vmatpush1.msra.mxu0 0.0
    %3400 = vmatprep.subr.mxu0 0.0
    %3401 = vmatpush1.msra.mxu0 0.0
    %3402 = vmatprep.subr.mxu0 0.0
    %3403 = vmatpush1.msra.mxu0 0.0
    %3404 = vmatprep.subr.mxu0 0.0
    %3405 = vmatpush1.msra.mxu0 0.0
    %3406 = vmatprep.subr.mxu0 0.0
    %3407 = vmatpush1.msra.mxu0 0.0
    %3408 = vmatprep.subr.mxu0 0.0
    %3409 = vmatpush1.msra.mxu0 0.0
    %3410 = vmatprep.subr.mxu0 0.0
    %3411 = vmatpush1.msra.mxu0 0.0
    %3412 = vmatprep.subr.mxu0 0.0
    %3413 = vmatpush1.msra.mxu0 0.0
    %3414 = vmatprep.subr.mxu0 0.0
    %3415 = vmatpush1.msra.mxu0 0.0
    %3416 = vmatprep.mubr.f32.mxu0 0.0
    %3417 = vmatmul.mubr.f32.gmra.mrb[0].mxu0 %v2249
    %v3418 = vpop.f32.mrb[0].mxu0
    %v3419 = vadd.f32 0.0, %v3418
    %v3420 = vpop.f32.mrb[0].mxu0
    %3421 = vmatprep.mubr.f32.mxu0 0.0
    %3422 = vmatmul.mubr.f32.gmra.mrb[0].mxu0 %v2250
    %v3423 = vpop.f32.mrb[0].mxu0
    %v3424 = vadd.f32 0.0, %v3423
    %v3425 = vpop.f32.mrb[0].mxu0
    %3426 = vmatprep.mubr.f32.mxu0 0.0
    %3427 = vmatmul.mubr.f32.gmra.mrb[0].mxu0 %v2251
    %v3428 = vpop.f32.mrb[0].mxu0
    %v3429 = vadd.f32 0.0, %v3428
    %v3430 = vpop.f32.mrb[0].mxu0
    %3431 = vmatprep.mubr.f32.mxu0 0.0
    %3432 = vmatmul.mubr.f32.gmra.mrb[0].mxu0 %v2252
    %v3433 = vpop.f32.mrb[0].mxu0
    %v3434 = vadd.f32 0.0, %v3433
    %v3435 = vpop.f32.mrb[0].mxu0
    %3436 = vdwg.mxu0
    %v3437 = vmul.f32 %v3320, %v3419
    %v3438 = vmul.f32 %v3321, %v3419
    %v3439 = vmul.f32 %v3322, %v3419
    %v3440 = vmul.f32 %v3323, %v3419
    %v3441 = vmul.f32 %v3324, %v3419
    %v3442 = vmul.f32 %v3325, %v3419
    %v3443 = vmul.f32 %v3326, %v3419
    %v3444 = vmul.f32 %v3327, %v3419
    %v3445 = vmul.f32 %v3328, %v3424
    %v3446 = vmul.f32 %v3329, %v3424
    %v3447 = vmul.f32 %v3330, %v3424
    %v3448 = vmul.f32 %v3331, %v3424
    %v3449 = vmul.f32 %v3332, %v3424
    %v3450 = vmul.f32 %v3333, %v3424
    %v3451 = vmul.f32 %v3334, %v3424
    %v3452 = vmul.f32 %v3335, %v3424
    %v3453 = vmul.f32 %v3336, %v3429
    %v3454 = vmul.f32 %v3337, %v3429
    %v3455 = vmul.f32 %v3338, %v3429
    %v3456 = vmul.f32 %v3339, %v3429
    %v3457 = vmul.f32 %v3340, %v3429
    %v3458 = vmul.f32 %v3341, %v3429
    %v3459 = vmul.f32 %v3342, %v3429
    %v3460 = vmul.f32 %v3343, %v3429
    %v3461 = vmul.f32 %v3344, %v3434
    %v3462 = vmul.f32 %v3345, %v3434
    %v3463 = vmul.f32 %v3346, %v3434
    %v3464 = vmul.f32 %v3347, %v3434
    %v3465 = vmul.f32 %v3348, %v3434
    %v3466 = vmul.f32 %v3349, %v3434
    %v3467 = vmul.f32 %v3350, %v3434
    %v3468 = vmul.f32 %v3351, %v3434
    %v3469 = vrot.slane %v3437, 4
    %v3470 = vadd.f32 %v3437, %v3469
    %v3471 = vrot.slane %v3470, 2
    %v3472 = vadd.f32 %v3470, %v3471
    %v3473 = vrot.slane %v3472, 1
    %v3474 = vadd.f32 %v3472, %v3473
    %v3475 = vrot.slane %v3438, 4
    %v3476 = vadd.f32 %v3438, %v3475
    %v3477 = vrot.slane %v3476, 2
    %v3478 = vadd.f32 %v3476, %v3477
    %v3479 = vrot.slane %v3478, 1
    %v3480 = vadd.f32 %v3478, %v3479
    %v3481 = vrot.slane %v3439, 4
    %v3482 = vadd.f32 %v3439, %v3481
    %v3483 = vrot.slane %v3482, 2
    %v3484 = vadd.f32 %v3482, %v3483
    %v3485 = vrot.slane %v3484, 1
    %v3486 = vadd.f32 %v3484, %v3485
    %v3487 = vrot.slane %v3440, 4
    %v3488 = vadd.f32 %v3440, %v3487
    %v3489 = vrot.slane %v3488, 2
    %v3490 = vadd.f32 %v3488, %v3489
    %v3491 = vrot.slane %v3490, 1
    %v3492 = vadd.f32 %v3490, %v3491
    %v3493 = vrot.slane %v3441, 4
    %v3494 = vadd.f32 %v3441, %v3493
    %v3495 = vrot.slane %v3494, 2
    %v3496 = vadd.f32 %v3494, %v3495
    %v3497 = vrot.slane %v3496, 1
    %v3498 = vadd.f32 %v3496, %v3497
    %v3499 = vrot.slane %v3442, 4
    %v3500 = vadd.f32 %v3442, %v3499
    %v3501 = vrot.slane %v3500, 2
    %v3502 = vadd.f32 %v3500, %v3501
    %v3503 = vrot.slane %v3502, 1
    %v3504 = vadd.f32 %v3502, %v3503
    %v3505 = vrot.slane %v3443, 4
    %v3506 = vadd.f32 %v3443, %v3505
    %v3507 = vrot.slane %v3506, 2
    %v3508 = vadd.f32 %v3506, %v3507
    %v3509 = vrot.slane %v3508, 1
    %v3510 = vadd.f32 %v3508, %v3509
    %v3511 = vrot.slane %v3444, 4
    %v3512 = vadd.f32 %v3444, %v3511
    %v3513 = vrot.slane %v3512, 2
    %v3514 = vadd.f32 %v3512, %v3513
    %v3515 = vrot.slane %v3514, 1
    %v3516 = vadd.f32 %v3514, %v3515
    %v3517 = vrot.slane %v3445, 4
    %v3518 = vadd.f32 %v3445, %v3517
    %v3519 = vrot.slane %v3518, 2
    %v3520 = vadd.f32 %v3518, %v3519
    %v3521 = vrot.slane %v3520, 1
    %v3522 = vadd.f32 %v3520, %v3521
    %v3523 = vrot.slane %v3446, 4
    %v3524 = vadd.f32 %v3446, %v3523
    %v3525 = vrot.slane %v3524, 2
    %v3526 = vadd.f32 %v3524, %v3525
    %v3527 = vrot.slane %v3526, 1
    %v3528 = vadd.f32 %v3526, %v3527
    %v3529 = vrot.slane %v3447, 4
    %v3530 = vadd.f32 %v3447, %v3529
    %v3531 = vrot.slane %v3530, 2
    %v3532 = vadd.f32 %v3530, %v3531
    %v3533 = vrot.slane %v3532, 1
    %v3534 = vadd.f32 %v3532, %v3533
    %v3535 = vrot.slane %v3448, 4
    %v3536 = vadd.f32 %v3448, %v3535
    %v3537 = vrot.slane %v3536, 2
    %v3538 = vadd.f32 %v3536, %v3537
    %v3539 = vrot.slane %v3538, 1
    %v3540 = vadd.f32 %v3538, %v3539
    %v3541 = vrot.slane %v3449, 4
    %v3542 = vadd.f32 %v3449, %v3541
    %v3543 = vrot.slane %v3542, 2
    %v3544 = vadd.f32 %v3542, %v3543
    %v3545 = vrot.slane %v3544, 1
    %v3546 = vadd.f32 %v3544, %v3545
    %v3547 = vrot.slane %v3450, 4
    %v3548 = vadd.f32 %v3450, %v3547
    %v3549 = vrot.slane %v3548, 2
    %v3550 = vadd.f32 %v3548, %v3549
    %v3551 = vrot.slane %v3550, 1
    %v3552 = vadd.f32 %v3550, %v3551
    %v3553 = vrot.slane %v3451, 4
    %v3554 = vadd.f32 %v3451, %v3553
    %v3555 = vrot.slane %v3554, 2
    %v3556 = vadd.f32 %v3554, %v3555
    %v3557 = vrot.slane %v3556, 1
    %v3558 = vadd.f32 %v3556, %v3557
    %v3559 = vrot.slane %v3452, 4
    %v3560 = vadd.f32 %v3452, %v3559
    %v3561 = vrot.slane %v3560, 2
    %v3562 = vadd.f32 %v3560, %v3561
    %v3563 = vrot.slane %v3562, 1
    %v3564 = vadd.f32 %v3562, %v3563
    %v3565 = vrot.slane %v3453, 4
    %v3566 = vadd.f32 %v3453, %v3565
    %v3567 = vrot.slane %v3566, 2
    %v3568 = vadd.f32 %v3566, %v3567
    %v3569 = vrot.slane %v3568, 1
    %v3570 = vadd.f32 %v3568, %v3569
    %v3571 = vrot.slane %v3454, 4
    %v3572 = vadd.f32 %v3454, %v3571
    %v3573 = vrot.slane %v3572, 2
    %v3574 = vadd.f32 %v3572, %v3573
    %v3575 = vrot.slane %v3574, 1
    %v3576 = vadd.f32 %v3574, %v3575
    %v3577 = vrot.slane %v3455, 4
    %v3578 = vadd.f32 %v3455, %v3577
    %v3579 = vrot.slane %v3578, 2
    %v3580 = vadd.f32 %v3578, %v3579
    %v3581 = vrot.slane %v3580, 1
    %v3582 = vadd.f32 %v3580, %v3581
    %v3583 = vrot.slane %v3456, 4
    %v3584 = vadd.f32 %v3456, %v3583
    %v3585 = vrot.slane %v3584, 2
    %v3586 = vadd.f32 %v3584, %v3585
    %v3587 = vrot.slane %v3586, 1
    %v3588 = vadd.f32 %v3586, %v3587
    %v3589 = vrot.slane %v3457, 4
    %v3590 = vadd.f32 %v3457, %v3589
    %v3591 = vrot.slane %v3590, 2
    %v3592 = vadd.f32 %v3590, %v3591
    %v3593 = vrot.slane %v3592, 1
    %v3594 = vadd.f32 %v3592, %v3593
    %v3595 = vrot.slane %v3458, 4
    %v3596 = vadd.f32 %v3458, %v3595
    %v3597 = vrot.slane %v3596, 2
    %v3598 = vadd.f32 %v3596, %v3597
    %v3599 = vrot.slane %v3598, 1
    %v3600 = vadd.f32 %v3598, %v3599
    %v3601 = vrot.slane %v3459, 4
    %v3602 = vadd.f32 %v3459, %v3601
    %v3603 = vrot.slane %v3602, 2
    %v3604 = vadd.f32 %v3602, %v3603
    %v3605 = vrot.slane %v3604, 1
    %v3606 = vadd.f32 %v3604, %v3605
    %v3607 = vrot.slane %v3460, 4
    %v3608 = vadd.f32 %v3460, %v3607
    %v3609 = vrot.slane %v3608, 2
    %v3610 = vadd.f32 %v3608, %v3609
    %v3611 = vrot.slane %v3610, 1
    %v3612 = vadd.f32 %v3610, %v3611
    %v3613 = vrot.slane %v3461, 4
    %v3614 = vadd.f32 %v3461, %v3613
    %v3615 = vrot.slane %v3614, 2
    %v3616 = vadd.f32 %v3614, %v3615
    %v3617 = vrot.slane %v3616, 1
    %v3618 = vadd.f32 %v3616, %v3617
    %v3619 = vrot.slane %v3462, 4
    %v3620 = vadd.f32 %v3462, %v3619
    %v3621 = vrot.slane %v3620, 2
    %v3622 = vadd.f32 %v3620, %v3621
    %v3623 = vrot.slane %v3622, 1
    %v3624 = vadd.f32 %v3622, %v3623
    %v3625 = vrot.slane %v3463, 4
    %v3626 = vadd.f32 %v3463, %v3625
    %v3627 = vrot.slane %v3626, 2
    %v3628 = vadd.f32 %v3626, %v3627
    %v3629 = vrot.slane %v3628, 1
    %v3630 = vadd.f32 %v3628, %v3629
    %v3631 = vrot.slane %v3464, 4
    %v3632 = vadd.f32 %v3464, %v3631
    %v3633 = vrot.slane %v3632, 2
    %v3634 = vadd.f32 %v3632, %v3633
    %v3635 = vrot.slane %v3634, 1
    %v3636 = vadd.f32 %v3634, %v3635
    %v3637 = vrot.slane %v3465, 4
    %v3638 = vadd.f32 %v3465, %v3637
    %v3639 = vrot.slane %v3638, 2
    %v3640 = vadd.f32 %v3638, %v3639
    %v3641 = vrot.slane %v3640, 1
    %v3642 = vadd.f32 %v3640, %v3641
    %v3643 = vrot.slane %v3466, 4
    %v3644 = vadd.f32 %v3466, %v3643
    %v3645 = vrot.slane %v3644, 2
    %v3646 = vadd.f32 %v3644, %v3645
    %v3647 = vrot.slane %v3646, 1
    %v3648 = vadd.f32 %v3646, %v3647
    %v3649 = vrot.slane %v3467, 4
    %v3650 = vadd.f32 %v3467, %v3649
    %v3651 = vrot.slane %v3650, 2
    %v3652 = vadd.f32 %v3650, %v3651
    %v3653 = vrot.slane %v3652, 1
    %v3654 = vadd.f32 %v3652, %v3653
    %v3655 = vrot.slane %v3468, 4
    %v3656 = vadd.f32 %v3468, %v3655
    %v3657 = vrot.slane %v3656, 2
    %v3658 = vadd.f32 %v3656, %v3657
    %v3659 = vrot.slane %v3658, 1
    %v3660 = vadd.f32 %v3658, %v3659
    %v3662 = vlaneseq
    %v3663 = vshrl.u32 %v3662, 7
    %v3664 = vsub.s32 0, %v3663
    %v3665 = vrot.slane %v2343, %v3664
    %v3699 = vsel %vm1970, %v3480, %v3474
    %v3700 = vsel %vm1972, %v3486, %v3699
    %v3701 = vsel %vm1974, %v3492, %v3700
    %v3702 = vsel %vm1976, %v3498, %v3701
    %v3703 = vsel %vm1978, %v3504, %v3702
    %v3704 = vsel %vm1980, %v3510, %v3703
    %v3705 = vsel %vm1982, %v3516, %v3704
    %v3706 = vsel %vm1970, %v3528, %v3522
    %v3707 = vsel %vm1972, %v3534, %v3706
    %v3708 = vsel %vm1974, %v3540, %v3707
    %v3709 = vsel %vm1976, %v3546, %v3708
    %v3710 = vsel %vm1978, %v3552, %v3709
    %v3711 = vsel %vm1980, %v3558, %v3710
    %v3712 = vsel %vm1982, %v3564, %v3711
    %v3713 = vsel %vm1970, %v3576, %v3570
    %v3714 = vsel %vm1972, %v3582, %v3713
    %v3715 = vsel %vm1974, %v3588, %v3714
    %v3716 = vsel %vm1976, %v3594, %v3715
    %v3717 = vsel %vm1978, %v3600, %v3716
    %v3718 = vsel %vm1980, %v3606, %v3717
    %v3719 = vsel %vm1982, %v3612, %v3718
    %v3720 = vsel %vm1970, %v3624, %v3618
    %v3721 = vsel %vm1972, %v3630, %v3720
    %v3722 = vsel %vm1974, %v3636, %v3721
    %v3723 = vsel %vm1976, %v3642, %v3722
    %v3724 = vsel %vm1978, %v3648, %v3723
    %v3725 = vsel %vm1980, %v3654, %v3724
    %v3726 = vsel %vm1982, %v3660, %v3725
    %3731 = vmatprep.subr.mxu0 0.0
    %3732 = vmatpush1.msra.mxu0 %v2305
    %3733 = vmatprep.subr.mxu0 0.0
    %3734 = vmatpush1.msra.mxu0 %v2306
    %3735 = vmatprep.subr.mxu0 0.0
    %3736 = vmatpush1.msra.mxu0 %v2307
    %3737 = vmatprep.subr.mxu0 0.0
    %3738 = vmatpush1.msra.mxu0 %v2308
    %3739 = vmatprep.subr.mxu0 0.0
    %3740 = vmatpush1.msra.mxu0 %v2309
    %3741 = vmatprep.subr.mxu0 0.0
    %3742 = vmatpush1.msra.mxu0 %v2310
    %3743 = vmatprep.subr.mxu0 0.0
    %3744 = vmatpush1.msra.mxu0 %v2311
    %3745 = vmatprep.subr.mxu0 0.0
    %3746 = vmatpush1.msra.mxu0 %v2312
    %3747 = vmatprep.subr.mxu0 0.0
    %3748 = vmatpush1.msra.mxu0 %v2313
    %3749 = vmatprep.subr.mxu0 0.0
    %3750 = vmatpush1.msra.mxu0 %v2314
    %3751 = vmatprep.subr.mxu0 0.0
    %3752 = vmatpush1.msra.mxu0 %v2315
    %3753 = vmatprep.subr.mxu0 0.0
    %3754 = vmatpush1.msra.mxu0 %v2316
    %3755 = vmatprep.subr.mxu0 0.0
    %3756 = vmatpush1.msra.mxu0 %v2317
    %3757 = vmatprep.subr.mxu0 0.0
    %3758 = vmatpush1.msra.mxu0 %v2318
    %3759 = vmatprep.subr.mxu0 0.0
    %3760 = vmatpush1.msra.mxu0 %v2319
    %3761 = vmatprep.subr.mxu0 0.0
    %3762 = vmatpush1.msra.mxu0 %v2320
    %3763 = vmatprep.subr.mxu0 0.0
    %3764 = vmatpush1.msra.mxu0 0.0
    %3765 = vmatprep.subr.mxu0 0.0
    %3766 = vmatpush1.msra.mxu0 0.0
    %3767 = vmatprep.subr.mxu0 0.0
    %3768 = vmatpush1.msra.mxu0 0.0
    %3769 = vmatprep.subr.mxu0 0.0
    %3770 = vmatpush1.msra.mxu0 0.0
    %3771 = vmatprep.subr.mxu0 0.0
    %3772 = vmatpush1.msra.mxu0 0.0
    %3773 = vmatprep.subr.mxu0 0.0
    %3774 = vmatpush1.msra.mxu0 0.0
    %3775 = vmatprep.subr.mxu0 0.0
    %3776 = vmatpush1.msra.mxu0 0.0
    %3777 = vmatprep.subr.mxu0 0.0
    %3778 = vmatpush1.msra.mxu0 0.0
    %3779 = vmatprep.subr.mxu0 0.0
    %3780 = vmatpush1.msra.mxu0 0.0
    %3781 = vmatprep.subr.mxu0 0.0
    %3782 = vmatpush1.msra.mxu0 0.0
    %3783 = vmatprep.subr.mxu0 0.0
    %3784 = vmatpush1.msra.mxu0 0.0
    %3785 = vmatprep.subr.mxu0 0.0
    %3786 = vmatpush1.msra.mxu0 0.0
    %3787 = vmatprep.subr.mxu0 0.0
    %3788 = vmatpush1.msra.mxu0 0.0
    %3789 = vmatprep.subr.mxu0 0.0
    %3790 = vmatpush1.msra.mxu0 0.0
    %3791 = vmatprep.subr.mxu0 0.0
    %3792 = vmatpush1.msra.mxu0 0.0
    %3793 = vmatprep.subr.mxu0 0.0
    %3794 = vmatpush1.msra.mxu0 0.0
    %3795 = vmatprep.mubr.f32.mxu0 0.0
    %3796 = vmatmul.mubr.f32.gmra.mrb[0].mxu0 %v3705
    %v3797 = vpop.f32.mrb[0].mxu0
    %v3798 = vadd.f32 %v3665, %v3797
    %v3799 = vpop.f32.mrb[0].mxu0
    %3800 = vmatprep.mubr.f32.mxu0 0.0
    %3801 = vmatmul.mubr.f32.gmra.mrb[0].mxu0 %v3712
    %v3802 = vpop.f32.mrb[0].mxu0
    %v3803 = vadd.f32 %v3665, %v3802
    %v3804 = vpop.f32.mrb[0].mxu0
    %3805 = vmatprep.mubr.f32.mxu0 0.0
    %3806 = vmatmul.mubr.f32.gmra.mrb[0].mxu0 %v3719
    %v3807 = vpop.f32.mrb[0].mxu0
    %v3808 = vadd.f32 %v3665, %v3807
    %v3809 = vpop.f32.mrb[0].mxu0
    %3810 = vmatprep.mubr.f32.mxu0 0.0
    %3811 = vmatmul.mubr.f32.gmra.mrb[0].mxu0 %v3726
    %v3812 = vpop.f32.mrb[0].mxu0
    %v3813 = vadd.f32 %v3665, %v3812
    %v3814 = vpop.f32.mrb[0].mxu0
    %3815 = vdwg.mxu0
    %v3816 = vmax.f32 %v3798, 0.0
    %v3817 = vmax.f32 %v3803, 0.0
    %v3818 = vmax.f32 %v3808, 0.0
    %v3819 = vmax.f32 %v3813, 0.0
    %v3820 = vand.u32 2147483647, %v3798
    %v3821 = vand.u32 2147483647, %v3803
    %v3822 = vand.u32 2147483647, %v3808
    %v3823 = vand.u32 2147483647, %v3813
    %v3824 = vsub.f32 0.0, %v3820
    %v3825 = vsub.f32 0.0, %v3821
    %v3826 = vsub.f32 0.0, %v3822
    %v3827 = vsub.f32 0.0, %v3823
    %v3828 = vmul.f32 %v3824, 1.442695
    %v3829 = vpow.pop %v3828
    %v3830 = vmul.f32 %v3825, 1.442695
    %v3831 = vpow.pop %v3830
    %v3832 = vmul.f32 %v3826, 1.442695
    %v3833 = vpow.pop %v3832
    %v3834 = vmul.f32 %v3827, 1.442695
    %v3835 = vpow.pop %v3834
    %v3836 = vadd.f32 %v3829, 1.0
    %v3837 = vlog2.pop %v3836
    %v3838 = vmul.f32 %v3837, 0.6931472
    %v3839 = vmul.f32 -0.5, %v3829
    %v3840 = vadd.f32 %v3839, 1.0
    %v3841 = vmul.f32 %v3840, %v3829
    %v3842 = vand.u32 2147483647, %v3829
    %vm3843 = vcmp.lt.f32.partialorder %v3842, 0.0004427343
    %v3844 = vsel %vm3843, %v3841, %v3838
    %v3845 = vadd.f32 %v3831, 1.0
    %v3846 = vlog2.pop %v3845
    %v3847 = vmul.f32 %v3846, 0.6931472
    %v3848 = vmul.f32 -0.5, %v3831
    %v3849 = vadd.f32 %v3848, 1.0
    %v3850 = vmul.f32 %v3849, %v3831
    %v3851 = vand.u32 2147483647, %v3831
    %vm3852 = vcmp.lt.f32.partialorder %v3851, 0.0004427343
    %v3853 = vsel %vm3852, %v3850, %v3847
    %v3854 = vadd.f32 %v3833, 1.0
    %v3855 = vlog2.pop %v3854
    %v3856 = vmul.f32 %v3855, 0.6931472
    %v3857 = vmul.f32 -0.5, %v3833
    %v3858 = vadd.f32 %v3857, 1.0
    %v3859 = vmul.f32 %v3858, %v3833
    %v3860 = vand.u32 2147483647, %v3833
    %vm3861 = vcmp.lt.f32.partialorder %v3860, 0.0004427343
    %v3862 = vsel %vm3861, %v3859, %v3856
    %v3863 = vadd.f32 %v3835, 1.0
    %v3864 = vlog2.pop %v3863
    %v3865 = vmul.f32 %v3864, 0.6931472
    %v3866 = vmul.f32 -0.5, %v3835
    %v3867 = vadd.f32 %v3866, 1.0
    %v3868 = vmul.f32 %v3867, %v3835
    %v3869 = vand.u32 2147483647, %v3835
    %vm3870 = vcmp.lt.f32.partialorder %v3869, 0.0004427343
    %v3871 = vsel %vm3870, %v3868, %v3865
    %v3872 = vadd.f32 %v3816, %v3844
    %v3873 = vadd.f32 %v3817, %v3853
    %v3874 = vadd.f32 %v3818, %v3862
    %v3875 = vadd.f32 %v3819, %v3871
    %v3876 = vsub.f32 %v3872, 0.6931472
    %v3877 = vsub.f32 %v3873, 0.6931472
    %v3878 = vsub.f32 %v3874, 0.6931472
    %v3879 = vsub.f32 %v3875, 0.6931472
    %v3881 = vlaneseq
    %v3882 = vshrl.u32 %v3881, 7
    %v3883 = vsub.s32 0, %v3882
    %v3884 = vrot.slane %v2345, %v3883
    %3886 = vmatprep.subr.mxu0 0.0
    %3887 = vmatpush1.msra.mxu0 %v2322
    %3888 = vmatprep.subr.mxu0 0.0
    %3889 = vmatpush1.msra.mxu0 %v2323
    %3890 = vmatprep.subr.mxu0 0.0
    %3891 = vmatpush1.msra.mxu0 %v2324
    %3892 = vmatprep.subr.mxu0 0.0
    %3893 = vmatpush1.msra.mxu0 %v2325
    %3894 = vmatprep.subr.mxu0 0.0
    %3895 = vmatpush1.msra.mxu0 %v2326
    %3896 = vmatprep.subr.mxu0 0.0
    %3897 = vmatpush1.msra.mxu0 %v2327
    %3898 = vmatprep.subr.mxu0 0.0
    %3899 = vmatpush1.msra.mxu0 %v2328
    %3900 = vmatprep.subr.mxu0 0.0
    %3901 = vmatpush1.msra.mxu0 %v2329
    %3902 = vmatprep.subr.mxu0 0.0
    %3903 = vmatpush1.msra.mxu0 %v2330
    %3904 = vmatprep.subr.mxu0 0.0
    %3905 = vmatpush1.msra.mxu0 %v2331
    %3906 = vmatprep.subr.mxu0 0.0
    %3907 = vmatpush1.msra.mxu0 %v2332
    %3908 = vmatprep.subr.mxu0 0.0
    %3909 = vmatpush1.msra.mxu0 %v2333
    %3910 = vmatprep.subr.mxu0 0.0
    %3911 = vmatpush1.msra.mxu0 %v2334
    %3912 = vmatprep.subr.mxu0 0.0
    %3913 = vmatpush1.msra.mxu0 %v2335
    %3914 = vmatprep.subr.mxu0 0.0
    %3915 = vmatpush1.msra.mxu0 %v2336
    %3916 = vmatprep.subr.mxu0 0.0
    %3917 = vmatpush1.msra.mxu0 %v2337
    %3918 = vmatprep.subr.mxu0 0.0
    %3919 = vmatpush1.msra.mxu0 0.0
    %3920 = vmatprep.subr.mxu0 0.0
    %3921 = vmatpush1.msra.mxu0 0.0
    %3922 = vmatprep.subr.mxu0 0.0
    %3923 = vmatpush1.msra.mxu0 0.0
    %3924 = vmatprep.subr.mxu0 0.0
    %3925 = vmatpush1.msra.mxu0 0.0
    %3926 = vmatprep.subr.mxu0 0.0
    %3927 = vmatpush1.msra.mxu0 0.0
    %3928 = vmatprep.subr.mxu0 0.0
    %3929 = vmatpush1.msra.mxu0 0.0
    %3930 = vmatprep.subr.mxu0 0.0
    %3931 = vmatpush1.msra.mxu0 0.0
    %3932 = vmatprep.subr.mxu0 0.0
    %3933 = vmatpush1.msra.mxu0 0.0
    %3934 = vmatprep.subr.mxu0 0.0
    %3935 = vmatpush1.msra.mxu0 0.0
    %3936 = vmatprep.subr.mxu0 0.0
    %3937 = vmatpush1.msra.mxu0 0.0
    %3938 = vmatprep.subr.mxu0 0.0
    %3939 = vmatpush1.msra.mxu0 0.0
    %3940 = vmatprep.subr.mxu0 0.0
    %3941 = vmatpush1.msra.mxu0 0.0
    %3942 = vmatprep.subr.mxu0 0.0
    %3943 = vmatpush1.msra.mxu0 0.0
    %3944 = vmatprep.subr.mxu0 0.0
    %3945 = vmatpush1.msra.mxu0 0.0
    %3946 = vmatprep.subr.mxu0 0.0
    %3947 = vmatpush1.msra.mxu0 0.0
    %3948 = vmatprep.subr.mxu0 0.0
    %3949 = vmatpush1.msra.mxu0 0.0
    %3950 = vmatprep.mubr.f32.mxu0 0.0
    %3951 = vmatmul.mubr.f32.gmra.mrb[0].mxu0 %v3876
    %v3952 = vpop.f32.mrb[0].mxu0
    %v3953 = vadd.f32 %v3884, %v3952
    %v3954 = vpop.f32.mrb[0].mxu0
    %3955 = vmatprep.mubr.f32.mxu0 0.0
    %3956 = vmatmul.mubr.f32.gmra.mrb[0].mxu0 %v3877
    %v3957 = vpop.f32.mrb[0].mxu0
    %v3958 = vadd.f32 %v3884, %v3957
    %v3959 = vpop.f32.mrb[0].mxu0
    %3960 = vmatprep.mubr.f32.mxu0 0.0
    %3961 = vmatmul.mubr.f32.gmra.mrb[0].mxu0 %v3878
    %v3962 = vpop.f32.mrb[0].mxu0
    %v3963 = vadd.f32 %v3884, %v3962
    %v3964 = vpop.f32.mrb[0].mxu0
    %3965 = vmatprep.mubr.f32.mxu0 0.0
    %3966 = vmatmul.mubr.f32.gmra.mrb[0].mxu0 %v3879
    %v3967 = vpop.f32.mrb[0].mxu0
    %v3968 = vadd.f32 %v3884, %v3967
    %v3969 = vpop.f32.mrb[0].mxu0
    %3970 = vdwg.mxu0
    %v3971 = vadd.f32 %v2249, %v3953
    %v3972 = vadd.f32 %v2250, %v3958
    %v3973 = vadd.f32 %v2251, %v3963
    %v3974 = vadd.f32 %v2252, %v3968
    %s3975 = scalar_lea.vmem [#allocation2], 1280
    %v3976 = vld [vmem:[%s3975] sm:$0xff]
    %v3977 = vld [vmem:[%s3975 + $0x8] sm:$0xff]
    %v3978 = vld [vmem:[%s3975 + $0x10] sm:$0xff]
    %v3979 = vld [vmem:[%s3975 + $0x18] sm:$0xff]
    %v3980 = vld [vmem:[%s3975 + $0x20] sm:$0xff]
    %v3981 = vld [vmem:[%s3975 + $0x28] sm:$0xff]
    %v3982 = vld [vmem:[%s3975 + $0x30] sm:$0xff]
    %v3983 = vld [vmem:[%s3975 + $0x38] sm:$0xff]
    %v3984 = vld [vmem:[%s3975 + $0x40] sm:$0xff]
    %v3985 = vld [vmem:[%s3975 + $0x48] sm:$0xff]
    %v3986 = vld [vmem:[%s3975 + $0x50] sm:$0xff]
    %v3987 = vld [vmem:[%s3975 + $0x58] sm:$0xff]
    %v3988 = vld [vmem:[%s3975 + $0x60] sm:$0xff]
    %v3989 = vld [vmem:[%s3975 + $0x68] sm:$0xff]
    %v3990 = vld [vmem:[%s3975 + $0x70] sm:$0xff]
    %v3991 = vld [vmem:[%s3975 + $0x78] sm:$0xff]
    %s3992 = scalar_lea.vmem [#allocation2], 1408
    %v3993 = vld [vmem:[%s3992] sm:$0xff]
    %v3994 = vld [vmem:[%s3992 + $0x8] sm:$0xff]
    %v3995 = vld [vmem:[%s3992 + $0x10] sm:$0xff]
    %v3996 = vld [vmem:[%s3992 + $0x18] sm:$0xff]
    %v3997 = vld [vmem:[%s3992 + $0x20] sm:$0xff]
    %v3998 = vld [vmem:[%s3992 + $0x28] sm:$0xff]
    %v3999 = vld [vmem:[%s3992 + $0x30] sm:$0xff]
    %v4000 = vld [vmem:[%s3992 + $0x38] sm:$0xff]
    %v4001 = vld [vmem:[%s3992 + $0x40] sm:$0xff]
    %v4002 = vld [vmem:[%s3992 + $0x48] sm:$0xff]
    %v4003 = vld [vmem:[%s3992 + $0x50] sm:$0xff]
    %v4004 = vld [vmem:[%s3992 + $0x58] sm:$0xff]
    %v4005 = vld [vmem:[%s3992 + $0x60] sm:$0xff]
    %v4006 = vld [vmem:[%s3992 + $0x68] sm:$0xff]
    %v4007 = vld [vmem:[%s3992 + $0x70] sm:$0xff]
    %v4008 = vld [vmem:[%s3992 + $0x78] sm:$0xff]
    %s4009 = scalar_lea.vmem [#allocation2], 1536
    %v4010 = vld [vmem:[%s4009] sm:$0xff]
    %v4011 = vld [vmem:[%s4009 + $0x8] sm:$0xff]
    %v4012 = vld [vmem:[%s4009 + $0x10] sm:$0xff]
    %v4013 = vld [vmem:[%s4009 + $0x18] sm:$0xff]
    %v4014 = vld [vmem:[%s4009 + $0x20] sm:$0xff]
    %v4015 = vld [vmem:[%s4009 + $0x28] sm:$0xff]
    %v4016 = vld [vmem:[%s4009 + $0x30] sm:$0xff]
    %v4017 = vld [vmem:[%s4009 + $0x38] sm:$0xff]
    %v4018 = vld [vmem:[%s4009 + $0x40] sm:$0xff]
    %v4019 = vld [vmem:[%s4009 + $0x48] sm:$0xff]
    %v4020 = vld [vmem:[%s4009 + $0x50] sm:$0xff]
    %v4021 = vld [vmem:[%s4009 + $0x58] sm:$0xff]
    %v4022 = vld [vmem:[%s4009 + $0x60] sm:$0xff]
    %v4023 = vld [vmem:[%s4009 + $0x68] sm:$0xff]
    %v4024 = vld [vmem:[%s4009 + $0x70] sm:$0xff]
    %v4025 = vld [vmem:[%s4009 + $0x78] sm:$0xff]
    %s4026 = scalar_lea.vmem [#allocation2], 1664
    %v4027 = vld [vmem:[%s4026] sm:$0xff]
    %v4028 = vld [vmem:[%s4026 + $0x8] sm:$0xff]
    %v4029 = vld [vmem:[%s4026 + $0x10] sm:$0xff]
    %v4030 = vld [vmem:[%s4026 + $0x18] sm:$0xff]
    %v4031 = vld [vmem:[%s4026 + $0x20] sm:$0xff]
    %v4032 = vld [vmem:[%s4026 + $0x28] sm:$0xff]
    %v4033 = vld [vmem:[%s4026 + $0x30] sm:$0xff]
    %v4034 = vld [vmem:[%s4026 + $0x38] sm:$0xff]
    %v4035 = vld [vmem:[%s4026 + $0x40] sm:$0xff]
    %v4036 = vld [vmem:[%s4026 + $0x48] sm:$0xff]
    %v4037 = vld [vmem:[%s4026 + $0x50] sm:$0xff]
    %v4038 = vld [vmem:[%s4026 + $0x58] sm:$0xff]
    %v4039 = vld [vmem:[%s4026 + $0x60] sm:$0xff]
    %v4040 = vld [vmem:[%s4026 + $0x68] sm:$0xff]
    %v4041 = vld [vmem:[%s4026 + $0x70] sm:$0xff]
    %v4042 = vld [vmem:[%s4026 + $0x78] sm:$0xff]
    %s4043 = scalar_lea.vmem [#allocation2], 1792
    %v4044 = vld [vmem:[%s4043] sm:$0xff]
    %v4045 = vld [vmem:[%s4043 + $0x8] sm:$0xff]
    %v4046 = vld [vmem:[%s4043 + $0x10] sm:$0xff]
    %v4047 = vld [vmem:[%s4043 + $0x18] sm:$0xff]
    %v4048 = vld [vmem:[%s4043 + $0x20] sm:$0xff]
    %v4049 = vld [vmem:[%s4043 + $0x28] sm:$0xff]
    %v4050 = vld [vmem:[%s4043 + $0x30] sm:$0xff]
    %v4051 = vld [vmem:[%s4043 + $0x38] sm:$0xff]
    %v4052 = vld [vmem:[%s4043 + $0x40] sm:$0xff]
    %v4053 = vld [vmem:[%s4043 + $0x48] sm:$0xff]
    %v4054 = vld [vmem:[%s4043 + $0x50] sm:$0xff]
    %v4055 = vld [vmem:[%s4043 + $0x58] sm:$0xff]
    %v4056 = vld [vmem:[%s4043 + $0x60] sm:$0xff]
    %v4057 = vld [vmem:[%s4043 + $0x68] sm:$0xff]
    %v4058 = vld [vmem:[%s4043 + $0x70] sm:$0xff]
    %v4059 = vld [vmem:[%s4043 + $0x78] sm:$0xff]
    %s4060 = scalar_lea.vmem %s4, 8
    %v4061 = vld [vmem:[%s4060] sm:$0x1]
    %s4062 = scalar_lea.vmem %s4, 9
    %v4063 = vld [vmem:[%s4062] sm:$0x1]
    %s4064 = scalar_lea.vmem %s4, 10
    %v4065 = vld [vmem:[%s4064] sm:$0x1]
    %s4066 = scalar_lea.vmem %s4, 11
    %v4067 = vld [vmem:[%s4066] sm:$0x1]
    %v4069 = vlaneseq
    %v4070 = vshrl.u32 %v4069, 7
    %v4071 = vsub.s32 0, %v4070
    %v4072 = vrot.slane %v4061, %v4071
    %4074 = vmatprep.subr.mxu0 0.0
    %4075 = vmatpush1.msra.mxu0 %v3976
    %4076 = vmatprep.subr.mxu0 0.0
    %4077 = vmatpush1.msra.mxu0 %v3977
    %4078 = vmatprep.subr.mxu0 0.0
    %4079 = vmatpush1.msra.mxu0 %v3978
    %4080 = vmatprep.subr.mxu0 0.0
    %4081 = vmatpush1.msra.mxu0 %v3979
    %4082 = vmatprep.subr.mxu0 0.0
    %4083 = vmatpush1.msra.mxu0 %v3980
    %4084 = vmatprep.subr.mxu0 0.0
    %4085 = vmatpush1.msra.mxu0 %v3981
    %4086 = vmatprep.subr.mxu0 0.0
    %4087 = vmatpush1.msra.mxu0 %v3982
    %4088 = vmatprep.subr.mxu0 0.0
    %4089 = vmatpush1.msra.mxu0 %v3983
    %4090 = vmatprep.subr.mxu0 0.0
    %4091 = vmatpush1.msra.mxu0 %v3984
    %4092 = vmatprep.subr.mxu0 0.0
    %4093 = vmatpush1.msra.mxu0 %v3985
    %4094 = vmatprep.subr.mxu0 0.0
    %4095 = vmatpush1.msra.mxu0 %v3986
    %4096 = vmatprep.subr.mxu0 0.0
    %4097 = vmatpush1.msra.mxu0 %v3987
    %4098 = vmatprep.subr.mxu0 0.0
    %4099 = vmatpush1.msra.mxu0 %v3988
    %4100 = vmatprep.subr.mxu0 0.0
    %4101 = vmatpush1.msra.mxu0 %v3989
    %4102 = vmatprep.subr.mxu0 0.0
    %4103 = vmatpush1.msra.mxu0 %v3990
    %4104 = vmatprep.subr.mxu0 0.0
    %4105 = vmatpush1.msra.mxu0 %v3991
    %4106 = vmatprep.subr.mxu0 0.0
    %4107 = vmatpush1.msra.mxu0 0.0
    %4108 = vmatprep.subr.mxu0 0.0
    %4109 = vmatpush1.msra.mxu0 0.0
    %4110 = vmatprep.subr.mxu0 0.0
    %4111 = vmatpush1.msra.mxu0 0.0
    %4112 = vmatprep.subr.mxu0 0.0
    %4113 = vmatpush1.msra.mxu0 0.0
    %4114 = vmatprep.subr.mxu0 0.0
    %4115 = vmatpush1.msra.mxu0 0.0
    %4116 = vmatprep.subr.mxu0 0.0
    %4117 = vmatpush1.msra.mxu0 0.0
    %4118 = vmatprep.subr.mxu0 0.0
    %4119 = vmatpush1.msra.mxu0 0.0
    %4120 = vmatprep.subr.mxu0 0.0
    %4121 = vmatpush1.msra.mxu0 0.0
    %4122 = vmatprep.subr.mxu0 0.0
    %4123 = vmatpush1.msra.mxu0 0.0
    %4124 = vmatprep.subr.mxu0 0.0
    %4125 = vmatpush1.msra.mxu0 0.0
    %4126 = vmatprep.subr.mxu0 0.0
    %4127 = vmatpush1.msra.mxu0 0.0
    %4128 = vmatprep.subr.mxu0 0.0
    %4129 = vmatpush1.msra.mxu0 0.0
    %4130 = vmatprep.subr.mxu0 0.0
    %4131 = vmatpush1.msra.mxu0 0.0
    %4132 = vmatprep.subr.mxu0 0.0
    %4133 = vmatpush1.msra.mxu0 0.0
    %4134 = vmatprep.subr.mxu0 0.0
    %4135 = vmatpush1.msra.mxu0 0.0
    %4136 = vmatprep.subr.mxu0 0.0
    %4137 = vmatpush1.msra.mxu0 0.0
    %4138 = vmatprep.mubr.f32.mxu0 0.0
    %4139 = vmatmul.mubr.f32.gmra.mrb[0].mxu0 %v331
    %v4140 = vpop.f32.mrb[0].mxu0
    %v4141 = vadd.f32 %v4072, %v4140
    %v4142 = vpop.f32.mrb[0].mxu0
    %4143 = vmatprep.mubr.f32.mxu0 0.0
    %4144 = vmatmul.mubr.f32.gmra.mrb[0].mxu0 %v333
    %v4145 = vpop.f32.mrb[0].mxu0
    %v4146 = vadd.f32 %v4072, %v4145
    %v4147 = vpop.f32.mrb[0].mxu0
    %4148 = vmatprep.mubr.f32.mxu0 0.0
    %4149 = vmatmul.mubr.f32.gmra.mrb[0].mxu0 %v335
    %v4150 = vpop.f32.mrb[0].mxu0
    %v4151 = vadd.f32 %v4072, %v4150
    %v4152 = vpop.f32.mrb[0].mxu0
    %4153 = vmatprep.mubr.f32.mxu0 0.0
    %4154 = vmatmul.mubr.f32.gmra.mrb[0].mxu0 %v337
    %v4155 = vpop.f32.mrb[0].mxu0
    %v4156 = vadd.f32 %v4072, %v4155
    %v4157 = vpop.f32.mrb[0].mxu0
    %4158 = vmatprep.mubr.f32.mxu0 0.0
    %4159 = vmatmul.mubr.f32.gmra.mrb[0].mxu0 %v339
    %v4160 = vpop.f32.mrb[0].mxu0
    %v4161 = vadd.f32 %v4072, %v4160
    %v4162 = vpop.f32.mrb[0].mxu0
    %4163 = vmatprep.mubr.f32.mxu0 0.0
    %4164 = vmatmul.mubr.f32.gmra.mrb[0].mxu0 %v341
    %v4165 = vpop.f32.mrb[0].mxu0
    %v4166 = vadd.f32 %v4072, %v4165
    %v4167 = vpop.f32.mrb[0].mxu0
    %4168 = vmatprep.mubr.f32.mxu0 0.0
    %4169 = vmatmul.mubr.f32.gmra.mrb[0].mxu0 %v343
    %v4170 = vpop.f32.mrb[0].mxu0
    %v4171 = vadd.f32 %v4072, %v4170
    %v4172 = vpop.f32.mrb[0].mxu0
    %4173 = vmatprep.mubr.f32.mxu0 0.0
    %4174 = vmatmul.mubr.f32.gmra.mrb[0].mxu0 %v345
    %v4175 = vpop.f32.mrb[0].mxu0
    %v4176 = vadd.f32 %v4072, %v4175
    %v4177 = vpop.f32.mrb[0].mxu0
    %4178 = vmatprep.mubr.f32.mxu0 0.0
    %4179 = vmatmul.mubr.f32.gmra.mrb[0].mxu0 %v347
    %v4180 = vpop.f32.mrb[0].mxu0
    %v4181 = vadd.f32 %v4072, %v4180
    %v4182 = vpop.f32.mrb[0].mxu0
    %4183 = vmatprep.mubr.f32.mxu0 0.0
    %4184 = vmatmul.mubr.f32.gmra.mrb[0].mxu0 %v349
    %v4185 = vpop.f32.mrb[0].mxu0
    %v4186 = vadd.f32 %v4072, %v4185
    %v4187 = vpop.f32.mrb[0].mxu0
    %4188 = vmatprep.mubr.f32.mxu0 0.0
    %4189 = vmatmul.mubr.f32.gmra.mrb[0].mxu0 %v351
    %v4190 = vpop.f32.mrb[0].mxu0
    %v4191 = vadd.f32 %v4072, %v4190
    %v4192 = vpop.f32.mrb[0].mxu0
    %4193 = vmatprep.mubr.f32.mxu0 0.0
    %4194 = vmatmul.mubr.f32.gmra.mrb[0].mxu0 %v353
    %v4195 = vpop.f32.mrb[0].mxu0
    %v4196 = vadd.f32 %v4072, %v4195
    %v4197 = vpop.f32.mrb[0].mxu0
    %4198 = vmatprep.mubr.f32.mxu0 0.0
    %4199 = vmatmul.mubr.f32.gmra.mrb[0].mxu0 %v355
    %v4200 = vpop.f32.mrb[0].mxu0
    %v4201 = vadd.f32 %v4072, %v4200
    %v4202 = vpop.f32.mrb[0].mxu0
    %4203 = vmatprep.mubr.f32.mxu0 0.0
    %4204 = vmatmul.mubr.f32.gmra.mrb[0].mxu0 %v357
    %v4205 = vpop.f32.mrb[0].mxu0
    %v4206 = vadd.f32 %v4072, %v4205
    %v4207 = vpop.f32.mrb[0].mxu0
    %4208 = vmatprep.mubr.f32.mxu0 0.0
    %4209 = vmatmul.mubr.f32.gmra.mrb[0].mxu0 %v359
    %v4210 = vpop.f32.mrb[0].mxu0
    %v4211 = vadd.f32 %v4072, %v4210
    %v4212 = vpop.f32.mrb[0].mxu0
    %4213 = vmatprep.mubr.f32.mxu0 0.0
    %4214 = vmatmul.mubr.f32.gmra.mrb[0].mxu0 %v361
    %v4215 = vpop.f32.mrb[0].mxu0
    %v4216 = vadd.f32 %v4072, %v4215
    %v4217 = vpop.f32.mrb[0].mxu0
    %4218 = vmatprep.mubr.f32.mxu0 0.0
    %4219 = vmatmul.mubr.f32.gmra.mrb[0].mxu0 %v363
    %v4220 = vpop.f32.mrb[0].mxu0
    %v4221 = vadd.f32 %v4072, %v4220
    %v4222 = vpop.f32.mrb[0].mxu0
    %4223 = vmatprep.mubr.f32.mxu0 0.0
    %4224 = vmatmul.mubr.f32.gmra.mrb[0].mxu0 %v365
    %v4225 = vpop.f32.mrb[0].mxu0
    %v4226 = vadd.f32 %v4072, %v4225
    %v4227 = vpop.f32.mrb[0].mxu0
    %4228 = vmatprep.mubr.f32.mxu0 0.0
    %4229 = vmatmul.mubr.f32.gmra.mrb[0].mxu0 %v367
    %v4230 = vpop.f32.mrb[0].mxu0
    %v4231 = vadd.f32 %v4072, %v4230
    %v4232 = vpop.f32.mrb[0].mxu0
    %4233 = vmatprep.mubr.f32.mxu0 0.0
    %4234 = vmatmul.mubr.f32.gmra.mrb[0].mxu0 %v369
    %v4235 = vpop.f32.mrb[0].mxu0
    %v4236 = vadd.f32 %v4072, %v4235
    %v4237 = vpop.f32.mrb[0].mxu0
    %4238 = vmatprep.mubr.f32.mxu0 0.0
    %4239 = vmatmul.mubr.f32.gmra.mrb[0].mxu0 %v371
    %v4240 = vpop.f32.mrb[0].mxu0
    %v4241 = vadd.f32 %v4072, %v4240
    %v4242 = vpop.f32.mrb[0].mxu0
    %4243 = vmatprep.mubr.f32.mxu0 0.0
    %4244 = vmatmul.mubr.f32.gmra.mrb[0].mxu0 %v373
    %v4245 = vpop.f32.mrb[0].mxu0
    %v4246 = vadd.f32 %v4072, %v4245
    %v4247 = vpop.f32.mrb[0].mxu0
    %4248 = vmatprep.mubr.f32.mxu0 0.0
    %4249 = vmatmul.mubr.f32.gmra.mrb[0].mxu0 %v375
    %v4250 = vpop.f32.mrb[0].mxu0
    %v4251 = vadd.f32 %v4072, %v4250
    %v4252 = vpop.f32.mrb[0].mxu0
    %4253 = vmatprep.mubr.f32.mxu0 0.0
    %4254 = vmatmul.mubr.f32.gmra.mrb[0].mxu0 %v377
    %v4255 = vpop.f32.mrb[0].mxu0
    %v4256 = vadd.f32 %v4072, %v4255
    %v4257 = vpop.f32.mrb[0].mxu0
    %4258 = vmatprep.mubr.f32.mxu0 0.0
    %4259 = vmatmul.mubr.f32.gmra.mrb[0].mxu0 %v379
    %v4260 = vpop.f32.mrb[0].mxu0
    %v4261 = vadd.f32 %v4072, %v4260
    %v4262 = vpop.f32.mrb[0].mxu0
    %4263 = vmatprep.mubr.f32.mxu0 0.0
    %4264 = vmatmul.mubr.f32.gmra.mrb[0].mxu0 %v381
    %v4265 = vpop.f32.mrb[0].mxu0
    %v4266 = vadd.f32 %v4072, %v4265
    %v4267 = vpop.f32.mrb[0].mxu0
    %4268 = vmatprep.mubr.f32.mxu0 0.0
    %4269 = vmatmul.mubr.f32.gmra.mrb[0].mxu0 %v383
    %v4270 = vpop.f32.mrb[0].mxu0
    %v4271 = vadd.f32 %v4072, %v4270
    %v4272 = vpop.f32.mrb[0].mxu0
    %4273 = vmatprep.mubr.f32.mxu0 0.0
    %4274 = vmatmul.mubr.f32.gmra.mrb[0].mxu0 %v385
    %v4275 = vpop.f32.mrb[0].mxu0
    %v4276 = vadd.f32 %v4072, %v4275
    %v4277 = vpop.f32.mrb[0].mxu0
    %4278 = vmatprep.mubr.f32.mxu0 0.0
    %4279 = vmatmul.mubr.f32.gmra.mrb[0].mxu0 %v387
    %v4280 = vpop.f32.mrb[0].mxu0
    %v4281 = vadd.f32 %v4072, %v4280
    %v4282 = vpop.f32.mrb[0].mxu0
    %4283 = vmatprep.mubr.f32.mxu0 0.0
    %4284 = vmatmul.mubr.f32.gmra.mrb[0].mxu0 %v389
    %v4285 = vpop.f32.mrb[0].mxu0
    %v4286 = vadd.f32 %v4072, %v4285
    %v4287 = vpop.f32.mrb[0].mxu0
    %4288 = vmatprep.mubr.f32.mxu0 0.0
    %4289 = vmatmul.mubr.f32.gmra.mrb[0].mxu0 %v391
    %v4290 = vpop.f32.mrb[0].mxu0
    %v4291 = vadd.f32 %v4072, %v4290
    %v4292 = vpop.f32.mrb[0].mxu0
    %4293 = vmatprep.mubr.f32.mxu0 0.0
    %4294 = vmatmul.mubr.f32.gmra.mrb[0].mxu0 %v393
    %v4295 = vpop.f32.mrb[0].mxu0
    %v4296 = vadd.f32 %v4072, %v4295
    %v4297 = vpop.f32.mrb[0].mxu0
    %4298 = vdwg.mxu0
    %v4299 = vmax.f32 %v4141, 0.0
    %v4300 = vmax.f32 %v4146, 0.0
    %v4301 = vmax.f32 %v4151, 0.0
    %v4302 = vmax.f32 %v4156, 0.0
    %v4303 = vmax.f32 %v4161, 0.0
    %v4304 = vmax.f32 %v4166, 0.0
    %v4305 = vmax.f32 %v4171, 0.0
    %v4306 = vmax.f32 %v4176, 0.0
    %v4307 = vmax.f32 %v4181, 0.0
    %v4308 = vmax.f32 %v4186, 0.0
    %v4309 = vmax.f32 %v4191, 0.0
    %v4310 = vmax.f32 %v4196, 0.0
    %v4311 = vmax.f32 %v4201, 0.0
    %v4312 = vmax.f32 %v4206, 0.0
    %v4313 = vmax.f32 %v4211, 0.0
    %v4314 = vmax.f32 %v4216, 0.0
    %v4315 = vmax.f32 %v4221, 0.0
    %v4316 = vmax.f32 %v4226, 0.0
    %v4317 = vmax.f32 %v4231, 0.0
    %v4318 = vmax.f32 %v4236, 0.0
    %v4319 = vmax.f32 %v4241, 0.0
    %v4320 = vmax.f32 %v4246, 0.0
    %v4321 = vmax.f32 %v4251, 0.0
    %v4322 = vmax.f32 %v4256, 0.0
    %v4323 = vmax.f32 %v4261, 0.0
    %v4324 = vmax.f32 %v4266, 0.0
    %v4325 = vmax.f32 %v4271, 0.0
    %v4326 = vmax.f32 %v4276, 0.0
    %v4327 = vmax.f32 %v4281, 0.0
    %v4328 = vmax.f32 %v4286, 0.0
    %v4329 = vmax.f32 %v4291, 0.0
    %v4330 = vmax.f32 %v4296, 0.0
    %v4331 = vand.u32 2147483647, %v4141
    %v4332 = vand.u32 2147483647, %v4146
    %v4333 = vand.u32 2147483647, %v4151
    %v4334 = vand.u32 2147483647, %v4156
    %v4335 = vand.u32 2147483647, %v4161
    %v4336 = vand.u32 2147483647, %v4166
    %v4337 = vand.u32 2147483647, %v4171
    %v4338 = vand.u32 2147483647, %v4176
    %v4339 = vand.u32 2147483647, %v4181
    %v4340 = vand.u32 2147483647, %v4186
    %v4341 = vand.u32 2147483647, %v4191
    %v4342 = vand.u32 2147483647, %v4196
    %v4343 = vand.u32 2147483647, %v4201
    %v4344 = vand.u32 2147483647, %v4206
    %v4345 = vand.u32 2147483647, %v4211
    %v4346 = vand.u32 2147483647, %v4216
    %v4347 = vand.u32 2147483647, %v4221
    %v4348 = vand.u32 2147483647, %v4226
    %v4349 = vand.u32 2147483647, %v4231
    %v4350 = vand.u32 2147483647, %v4236
    %v4351 = vand.u32 2147483647, %v4241
    %v4352 = vand.u32 2147483647, %v4246
    %v4353 = vand.u32 2147483647, %v4251
    %v4354 = vand.u32 2147483647, %v4256
    %v4355 = vand.u32 2147483647, %v4261
    %v4356 = vand.u32 2147483647, %v4266
    %v4357 = vand.u32 2147483647, %v4271
    %v4358 = vand.u32 2147483647, %v4276
    %v4359 = vand.u32 2147483647, %v4281
    %v4360 = vand.u32 2147483647, %v4286
    %v4361 = vand.u32 2147483647, %v4291
    %v4362 = vand.u32 2147483647, %v4296
    %v4363 = vsub.f32 0.0, %v4331
    %v4364 = vsub.f32 0.0, %v4332
    %v4365 = vsub.f32 0.0, %v4333
    %v4366 = vsub.f32 0.0, %v4334
    %v4367 = vsub.f32 0.0, %v4335
    %v4368 = vsub.f32 0.0, %v4336
    %v4369 = vsub.f32 0.0, %v4337
    %v4370 = vsub.f32 0.0, %v4338
    %v4371 = vsub.f32 0.0, %v4339
    %v4372 = vsub.f32 0.0, %v4340
    %v4373 = vsub.f32 0.0, %v4341
    %v4374 = vsub.f32 0.0, %v4342
    %v4375 = vsub.f32 0.0, %v4343
    %v4376 = vsub.f32 0.0, %v4344
    %v4377 = vsub.f32 0.0, %v4345
    %v4378 = vsub.f32 0.0, %v4346
    %v4379 = vsub.f32 0.0, %v4347
    %v4380 = vsub.f32 0.0, %v4348
    %v4381 = vsub.f32 0.0, %v4349
    %v4382 = vsub.f32 0.0, %v4350
    %v4383 = vsub.f32 0.0, %v4351
    %v4384 = vsub.f32 0.0, %v4352
    %v4385 = vsub.f32 0.0, %v4353
    %v4386 = vsub.f32 0.0, %v4354
    %v4387 = vsub.f32 0.0, %v4355
    %v4388 = vsub.f32 0.0, %v4356
    %v4389 = vsub.f32 0.0, %v4357
    %v4390 = vsub.f32 0.0, %v4358
    %v4391 = vsub.f32 0.0, %v4359
    %v4392 = vsub.f32 0.0, %v4360
    %v4393 = vsub.f32 0.0, %v4361
    %v4394 = vsub.f32 0.0, %v4362
    %v4395 = vmul.f32 %v4363, 1.442695
    %v4396 = vpow.pop %v4395
    %v4397 = vmul.f32 %v4364, 1.442695
    %v4398 = vpow.pop %v4397
    %v4399 = vmul.f32 %v4365, 1.442695
    %v4400 = vpow.pop %v4399
    %v4401 = vmul.f32 %v4366, 1.442695
    %v4402 = vpow.pop %v4401
    %v4403 = vmul.f32 %v4367, 1.442695
    %v4404 = vpow.pop %v4403
    %v4405 = vmul.f32 %v4368, 1.442695
    %v4406 = vpow.pop %v4405
    %v4407 = vmul.f32 %v4369, 1.442695
    %v4408 = vpow.pop %v4407
    %v4409 = vmul.f32 %v4370, 1.442695
    %v4410 = vpow.pop %v4409
    %v4411 = vmul.f32 %v4371, 1.442695
    %v4412 = vpow.pop %v4411
    %v4413 = vmul.f32 %v4372, 1.442695
    %v4414 = vpow.pop %v4413
    %v4415 = vmul.f32 %v4373, 1.442695
    %v4416 = vpow.pop %v4415
    %v4417 = vmul.f32 %v4374, 1.442695
    %v4418 = vpow.pop %v4417
    %v4419 = vmul.f32 %v4375, 1.442695
    %v4420 = vpow.pop %v4419
    %v4421 = vmul.f32 %v4376, 1.442695
    %v4422 = vpow.pop %v4421
    %v4423 = vmul.f32 %v4377, 1.442695
    %v4424 = vpow.pop %v4423
    %v4425 = vmul.f32 %v4378, 1.442695
    %v4426 = vpow.pop %v4425
    %v4427 = vmul.f32 %v4379, 1.442695
    %v4428 = vpow.pop %v4427
    %v4429 = vmul.f32 %v4380, 1.442695
    %v4430 = vpow.pop %v4429
    %v4431 = vmul.f32 %v4381, 1.442695
    %v4432 = vpow.pop %v4431
    %v4433 = vmul.f32 %v4382, 1.442695
    %v4434 = vpow.pop %v4433
    %v4435 = vmul.f32 %v4383, 1.442695
    %v4436 = vpow.pop %v4435
    %v4437 = vmul.f32 %v4384, 1.442695
    %v4438 = vpow.pop %v4437
    %v4439 = vmul.f32 %v4385, 1.442695
    %v4440 = vpow.pop %v4439
    %v4441 = vmul.f32 %v4386, 1.442695
    %v4442 = vpow.pop %v4441
    %v4443 = vmul.f32 %v4387, 1.442695
    %v4444 = vpow.pop %v4443
    %v4445 = vmul.f32 %v4388, 1.442695
    %v4446 = vpow.pop %v4445
    %v4447 = vmul.f32 %v4389, 1.442695
    %v4448 = vpow.pop %v4447
    %v4449 = vmul.f32 %v4390, 1.442695
    %v4450 = vpow.pop %v4449
    %v4451 = vmul.f32 %v4391, 1.442695
    %v4452 = vpow.pop %v4451
    %v4453 = vmul.f32 %v4392, 1.442695
    %v4454 = vpow.pop %v4453
    %v4455 = vmul.f32 %v4393, 1.442695
    %v4456 = vpow.pop %v4455
    %v4457 = vmul.f32 %v4394, 1.442695
    %v4458 = vpow.pop %v4457
    %v4459 = vadd.f32 %v4396, 1.0
    %v4460 = vlog2.pop %v4459
    %v4461 = vmul.f32 %v4460, 0.6931472
    %v4462 = vmul.f32 -0.5, %v4396
    %v4463 = vadd.f32 %v4462, 1.0
    %v4464 = vmul.f32 %v4463, %v4396
    %v4465 = vand.u32 2147483647, %v4396
    %vm4466 = vcmp.lt.f32.partialorder %v4465, 0.0004427343
    %v4467 = vsel %vm4466, %v4464, %v4461
    %v4468 = vadd.f32 %v4398, 1.0
    %v4469 = vlog2.pop %v4468
    %v4470 = vmul.f32 %v4469, 0.6931472
    %v4471 = vmul.f32 -0.5, %v4398
    %v4472 = vadd.f32 %v4471, 1.0
    %v4473 = vmul.f32 %v4472, %v4398
    %v4474 = vand.u32 2147483647, %v4398
    %vm4475 = vcmp.lt.f32.partialorder %v4474, 0.0004427343
    %v4476 = vsel %vm4475, %v4473, %v4470
    %v4477 = vadd.f32 %v4400, 1.0
    %v4478 = vlog2.pop %v4477
    %v4479 = vmul.f32 %v4478, 0.6931472
    %v4480 = vmul.f32 -0.5, %v4400
    %v4481 = vadd.f32 %v4480, 1.0
    %v4482 = vmul.f32 %v4481, %v4400
    %v4483 = vand.u32 2147483647, %v4400
    %vm4484 = vcmp.lt.f32.partialorder %v4483, 0.0004427343
    %v4485 = vsel %vm4484, %v4482, %v4479
    %v4486 = vadd.f32 %v4402, 1.0
    %v4487 = vlog2.pop %v4486
    %v4488 = vmul.f32 %v4487, 0.6931472
    %v4489 = vmul.f32 -0.5, %v4402
    %v4490 = vadd.f32 %v4489, 1.0
    %v4491 = vmul.f32 %v4490, %v4402
    %v4492 = vand.u32 2147483647, %v4402
    %vm4493 = vcmp.lt.f32.partialorder %v4492, 0.0004427343
    %v4494 = vsel %vm4493, %v4491, %v4488
    %v4495 = vadd.f32 %v4404, 1.0
    %v4496 = vlog2.pop %v4495
    %v4497 = vmul.f32 %v4496, 0.6931472
    %v4498 = vmul.f32 -0.5, %v4404
    %v4499 = vadd.f32 %v4498, 1.0
    %v4500 = vmul.f32 %v4499, %v4404
    %v4501 = vand.u32 2147483647, %v4404
    %vm4502 = vcmp.lt.f32.partialorder %v4501, 0.0004427343
    %v4503 = vsel %vm4502, %v4500, %v4497
    %v4504 = vadd.f32 %v4406, 1.0
    %v4505 = vlog2.pop %v4504
    %v4506 = vmul.f32 %v4505, 0.6931472
    %v4507 = vmul.f32 -0.5, %v4406
    %v4508 = vadd.f32 %v4507, 1.0
    %v4509 = vmul.f32 %v4508, %v4406
    %v4510 = vand.u32 2147483647, %v4406
    %vm4511 = vcmp.lt.f32.partialorder %v4510, 0.0004427343
    %v4512 = vsel %vm4511, %v4509, %v4506
    %v4513 = vadd.f32 %v4408, 1.0
    %v4514 = vlog2.pop %v4513
    %v4515 = vmul.f32 %v4514, 0.6931472
    %v4516 = vmul.f32 -0.5, %v4408
    %v4517 = vadd.f32 %v4516, 1.0
    %v4518 = vmul.f32 %v4517, %v4408
    %v4519 = vand.u32 2147483647, %v4408
    %vm4520 = vcmp.lt.f32.partialorder %v4519, 0.0004427343
    %v4521 = vsel %vm4520, %v4518, %v4515
    %v4522 = vadd.f32 %v4410, 1.0
    %v4523 = vlog2.pop %v4522
    %v4524 = vmul.f32 %v4523, 0.6931472
    %v4525 = vmul.f32 -0.5, %v4410
    %v4526 = vadd.f32 %v4525, 1.0
    %v4527 = vmul.f32 %v4526, %v4410
    %v4528 = vand.u32 2147483647, %v4410
    %vm4529 = vcmp.lt.f32.partialorder %v4528, 0.0004427343
    %v4530 = vsel %vm4529, %v4527, %v4524
    %v4531 = vadd.f32 %v4412, 1.0
    %v4532 = vlog2.pop %v4531
    %v4533 = vmul.f32 %v4532, 0.6931472
    %v4534 = vmul.f32 -0.5, %v4412
    %v4535 = vadd.f32 %v4534, 1.0
    %v4536 = vmul.f32 %v4535, %v4412
    %v4537 = vand.u32 2147483647, %v4412
    %vm4538 = vcmp.lt.f32.partialorder %v4537, 0.0004427343
    %v4539 = vsel %vm4538, %v4536, %v4533
    %v4540 = vadd.f32 %v4414, 1.0
    %v4541 = vlog2.pop %v4540
    %v4542 = vmul.f32 %v4541, 0.6931472
    %v4543 = vmul.f32 -0.5, %v4414
    %v4544 = vadd.f32 %v4543, 1.0
    %v4545 = vmul.f32 %v4544, %v4414
    %v4546 = vand.u32 2147483647, %v4414
    %vm4547 = vcmp.lt.f32.partialorder %v4546, 0.0004427343
    %v4548 = vsel %vm4547, %v4545, %v4542
    %v4549 = vadd.f32 %v4416, 1.0
    %v4550 = vlog2.pop %v4549
    %v4551 = vmul.f32 %v4550, 0.6931472
    %v4552 = vmul.f32 -0.5, %v4416
    %v4553 = vadd.f32 %v4552, 1.0
    %v4554 = vmul.f32 %v4553, %v4416
    %v4555 = vand.u32 2147483647, %v4416
    %vm4556 = vcmp.lt.f32.partialorder %v4555, 0.0004427343
    %v4557 = vsel %vm4556, %v4554, %v4551
    %v4558 = vadd.f32 %v4418, 1.0
    %v4559 = vlog2.pop %v4558
    %v4560 = vmul.f32 %v4559, 0.6931472
    %v4561 = vmul.f32 -0.5, %v4418
    %v4562 = vadd.f32 %v4561, 1.0
    %v4563 = vmul.f32 %v4562, %v4418
    %v4564 = vand.u32 2147483647, %v4418
    %vm4565 = vcmp.lt.f32.partialorder %v4564, 0.0004427343
    %v4566 = vsel %vm4565, %v4563, %v4560
    %v4567 = vadd.f32 %v4420, 1.0
    %v4568 = vlog2.pop %v4567
    %v4569 = vmul.f32 %v4568, 0.6931472
    %v4570 = vmul.f32 -0.5, %v4420
    %v4571 = vadd.f32 %v4570, 1.0
    %v4572 = vmul.f32 %v4571, %v4420
    %v4573 = vand.u32 2147483647, %v4420
    %vm4574 = vcmp.lt.f32.partialorder %v4573, 0.0004427343
    %v4575 = vsel %vm4574, %v4572, %v4569
    %v4576 = vadd.f32 %v4422, 1.0
    %v4577 = vlog2.pop %v4576
    %v4578 = vmul.f32 %v4577, 0.6931472
    %v4579 = vmul.f32 -0.5, %v4422
    %v4580 = vadd.f32 %v4579, 1.0
    %v4581 = vmul.f32 %v4580, %v4422
    %v4582 = vand.u32 2147483647, %v4422
    %vm4583 = vcmp.lt.f32.partialorder %v4582, 0.0004427343
    %v4584 = vsel %vm4583, %v4581, %v4578
    %v4585 = vadd.f32 %v4424, 1.0
    %v4586 = vlog2.pop %v4585
    %v4587 = vmul.f32 %v4586, 0.6931472
    %v4588 = vmul.f32 -0.5, %v4424
    %v4589 = vadd.f32 %v4588, 1.0
    %v4590 = vmul.f32 %v4589, %v4424
    %v4591 = vand.u32 2147483647, %v4424
    %vm4592 = vcmp.lt.f32.partialorder %v4591, 0.0004427343
    %v4593 = vsel %vm4592, %v4590, %v4587
    %v4594 = vadd.f32 %v4426, 1.0
    %v4595 = vlog2.pop %v4594
    %v4596 = vmul.f32 %v4595, 0.6931472
    %v4597 = vmul.f32 -0.5, %v4426
    %v4598 = vadd.f32 %v4597, 1.0
    %v4599 = vmul.f32 %v4598, %v4426
    %v4600 = vand.u32 2147483647, %v4426
    %vm4601 = vcmp.lt.f32.partialorder %v4600, 0.0004427343
    %v4602 = vsel %vm4601, %v4599, %v4596
    %v4603 = vadd.f32 %v4428, 1.0
    %v4604 = vlog2.pop %v4603
    %v4605 = vmul.f32 %v4604, 0.6931472
    %v4606 = vmul.f32 -0.5, %v4428
    %v4607 = vadd.f32 %v4606, 1.0
    %v4608 = vmul.f32 %v4607, %v4428
    %v4609 = vand.u32 2147483647, %v4428
    %vm4610 = vcmp.lt.f32.partialorder %v4609, 0.0004427343
    %v4611 = vsel %vm4610, %v4608, %v4605
    %v4612 = vadd.f32 %v4430, 1.0
    %v4613 = vlog2.pop %v4612
    %v4614 = vmul.f32 %v4613, 0.6931472
    %v4615 = vmul.f32 -0.5, %v4430
    %v4616 = vadd.f32 %v4615, 1.0
    %v4617 = vmul.f32 %v4616, %v4430
    %v4618 = vand.u32 2147483647, %v4430
    %vm4619 = vcmp.lt.f32.partialorder %v4618, 0.0004427343
    %v4620 = vsel %vm4619, %v4617, %v4614
    %v4621 = vadd.f32 %v4432, 1.0
    %v4622 = vlog2.pop %v4621
    %v4623 = vmul.f32 %v4622, 0.6931472
    %v4624 = vmul.f32 -0.5, %v4432
    %v4625 = vadd.f32 %v4624, 1.0
    %v4626 = vmul.f32 %v4625, %v4432
    %v4627 = vand.u32 2147483647, %v4432
    %vm4628 = vcmp.lt.f32.partialorder %v4627, 0.0004427343
    %v4629 = vsel %vm4628, %v4626, %v4623
    %v4630 = vadd.f32 %v4434, 1.0
    %v4631 = vlog2.pop %v4630
    %v4632 = vmul.f32 %v4631, 0.6931472
    %v4633 = vmul.f32 -0.5, %v4434
    %v4634 = vadd.f32 %v4633, 1.0
    %v4635 = vmul.f32 %v4634, %v4434
    %v4636 = vand.u32 2147483647, %v4434
    %vm4637 = vcmp.lt.f32.partialorder %v4636, 0.0004427343
    %v4638 = vsel %vm4637, %v4635, %v4632
    %v4639 = vadd.f32 %v4436, 1.0
    %v4640 = vlog2.pop %v4639
    %v4641 = vmul.f32 %v4640, 0.6931472
    %v4642 = vmul.f32 -0.5, %v4436
    %v4643 = vadd.f32 %v4642, 1.0
    %v4644 = vmul.f32 %v4643, %v4436
    %v4645 = vand.u32 2147483647, %v4436
    %vm4646 = vcmp.lt.f32.partialorder %v4645, 0.0004427343
    %v4647 = vsel %vm4646, %v4644, %v4641
    %v4648 = vadd.f32 %v4438, 1.0
    %v4649 = vlog2.pop %v4648
    %v4650 = vmul.f32 %v4649, 0.6931472
    %v4651 = vmul.f32 -0.5, %v4438
    %v4652 = vadd.f32 %v4651, 1.0
    %v4653 = vmul.f32 %v4652, %v4438
    %v4654 = vand.u32 2147483647, %v4438
    %vm4655 = vcmp.lt.f32.partialorder %v4654, 0.0004427343
    %v4656 = vsel %vm4655, %v4653, %v4650
    %v4657 = vadd.f32 %v4440, 1.0
    %v4658 = vlog2.pop %v4657
    %v4659 = vmul.f32 %v4658, 0.6931472
    %v4660 = vmul.f32 -0.5, %v4440
    %v4661 = vadd.f32 %v4660, 1.0
    %v4662 = vmul.f32 %v4661, %v4440
    %v4663 = vand.u32 2147483647, %v4440
    %vm4664 = vcmp.lt.f32.partialorder %v4663, 0.0004427343
    %v4665 = vsel %vm4664, %v4662, %v4659
    %v4666 = vadd.f32 %v4442, 1.0
    %v4667 = vlog2.pop %v4666
    %v4668 = vmul.f32 %v4667, 0.6931472
    %v4669 = vmul.f32 -0.5, %v4442
    %v4670 = vadd.f32 %v4669, 1.0
    %v4671 = vmul.f32 %v4670, %v4442
    %v4672 = vand.u32 2147483647, %v4442
    %vm4673 = vcmp.lt.f32.partialorder %v4672, 0.0004427343
    %v4674 = vsel %vm4673, %v4671, %v4668
    %v4675 = vadd.f32 %v4444, 1.0
    %v4676 = vlog2.pop %v4675
    %v4677 = vmul.f32 %v4676, 0.6931472
    %v4678 = vmul.f32 -0.5, %v4444
    %v4679 = vadd.f32 %v4678, 1.0
    %v4680 = vmul.f32 %v4679, %v4444
    %v4681 = vand.u32 2147483647, %v4444
    %vm4682 = vcmp.lt.f32.partialorder %v4681, 0.0004427343
    %v4683 = vsel %vm4682, %v4680, %v4677
    %v4684 = vadd.f32 %v4446, 1.0
    %v4685 = vlog2.pop %v4684
    %v4686 = vmul.f32 %v4685, 0.6931472
    %v4687 = vmul.f32 -0.5, %v4446
    %v4688 = vadd.f32 %v4687, 1.0
    %v4689 = vmul.f32 %v4688, %v4446
    %v4690 = vand.u32 2147483647, %v4446
    %vm4691 = vcmp.lt.f32.partialorder %v4690, 0.0004427343
    %v4692 = vsel %vm4691, %v4689, %v4686
    %v4693 = vadd.f32 %v4448, 1.0
    %v4694 = vlog2.pop %v4693
    %v4695 = vmul.f32 %v4694, 0.6931472
    %v4696 = vmul.f32 -0.5, %v4448
    %v4697 = vadd.f32 %v4696, 1.0
    %v4698 = vmul.f32 %v4697, %v4448
    %v4699 = vand.u32 2147483647, %v4448
    %vm4700 = vcmp.lt.f32.partialorder %v4699, 0.0004427343
    %v4701 = vsel %vm4700, %v4698, %v4695
    %v4702 = vadd.f32 %v4450, 1.0
    %v4703 = vlog2.pop %v4702
    %v4704 = vmul.f32 %v4703, 0.6931472
    %v4705 = vmul.f32 -0.5, %v4450
    %v4706 = vadd.f32 %v4705, 1.0
    %v4707 = vmul.f32 %v4706, %v4450
    %v4708 = vand.u32 2147483647, %v4450
    %vm4709 = vcmp.lt.f32.partialorder %v4708, 0.0004427343
    %v4710 = vsel %vm4709, %v4707, %v4704
    %v4711 = vadd.f32 %v4452, 1.0
    %v4712 = vlog2.pop %v4711
    %v4713 = vmul.f32 %v4712, 0.6931472
    %v4714 = vmul.f32 -0.5, %v4452
    %v4715 = vadd.f32 %v4714, 1.0
    %v4716 = vmul.f32 %v4715, %v4452
    %v4717 = vand.u32 2147483647, %v4452
    %vm4718 = vcmp.lt.f32.partialorder %v4717, 0.0004427343
    %v4719 = vsel %vm4718, %v4716, %v4713
    %v4720 = vadd.f32 %v4454, 1.0
    %v4721 = vlog2.pop %v4720
    %v4722 = vmul.f32 %v4721, 0.6931472
    %v4723 = vmul.f32 -0.5, %v4454
    %v4724 = vadd.f32 %v4723, 1.0
    %v4725 = vmul.f32 %v4724, %v4454
    %v4726 = vand.u32 2147483647, %v4454
    %vm4727 = vcmp.lt.f32.partialorder %v4726, 0.0004427343
    %v4728 = vsel %vm4727, %v4725, %v4722
    %v4729 = vadd.f32 %v4456, 1.0
    %v4730 = vlog2.pop %v4729
    %v4731 = vmul.f32 %v4730, 0.6931472
    %v4732 = vmul.f32 -0.5, %v4456
    %v4733 = vadd.f32 %v4732, 1.0
    %v4734 = vmul.f32 %v4733, %v4456
    %v4735 = vand.u32 2147483647, %v4456
    %vm4736 = vcmp.lt.f32.partialorder %v4735, 0.0004427343
    %v4737 = vsel %vm4736, %v4734, %v4731
    %v4738 = vadd.f32 %v4458, 1.0
    %v4739 = vlog2.pop %v4738
    %v4740 = vmul.f32 %v4739, 0.6931472
    %v4741 = vmul.f32 -0.5, %v4458
    %v4742 = vadd.f32 %v4741, 1.0
    %v4743 = vmul.f32 %v4742, %v4458
    %v4744 = vand.u32 2147483647, %v4458
    %vm4745 = vcmp.lt.f32.partialorder %v4744, 0.0004427343
    %v4746 = vsel %vm4745, %v4743, %v4740
    %v4747 = vadd.f32 %v4299, %v4467
    %v4748 = vadd.f32 %v4300, %v4476
    %v4749 = vadd.f32 %v4301, %v4485
    %v4750 = vadd.f32 %v4302, %v4494
    %v4751 = vadd.f32 %v4303, %v4503
    %v4752 = vadd.f32 %v4304, %v4512
    %v4753 = vadd.f32 %v4305, %v4521
    %v4754 = vadd.f32 %v4306, %v4530
    %v4755 = vadd.f32 %v4307, %v4539
    %v4756 = vadd.f32 %v4308, %v4548
    %v4757 = vadd.f32 %v4309, %v4557
    %v4758 = vadd.f32 %v4310, %v4566
    %v4759 = vadd.f32 %v4311, %v4575
    %v4760 = vadd.f32 %v4312, %v4584
    %v4761 = vadd.f32 %v4313, %v4593
    %v4762 = vadd.f32 %v4314, %v4602
    %v4763 = vadd.f32 %v4315, %v4611
    %v4764 = vadd.f32 %v4316, %v4620
    %v4765 = vadd.f32 %v4317, %v4629
    %v4766 = vadd.f32 %v4318, %v4638
    %v4767 = vadd.f32 %v4319, %v4647
    %v4768 = vadd.f32 %v4320, %v4656
    %v4769 = vadd.f32 %v4321, %v4665
    %v4770 = vadd.f32 %v4322, %v4674
    %v4771 = vadd.f32 %v4323, %v4683
    %v4772 = vadd.f32 %v4324, %v4692
    %v4773 = vadd.f32 %v4325, %v4701
    %v4774 = vadd.f32 %v4326, %v4710
    %v4775 = vadd.f32 %v4327, %v4719
    %v4776 = vadd.f32 %v4328, %v4728
    %v4777 = vadd.f32 %v4329, %v4737
    %v4778 = vadd.f32 %v4330, %v4746
    %v4779 = vsub.f32 %v4747, 0.6931472
    %v4780 = vsub.f32 %v4748, 0.6931472
    %v4781 = vsub.f32 %v4749, 0.6931472
    %v4782 = vsub.f32 %v4750, 0.6931472
    %v4783 = vsub.f32 %v4751, 0.6931472
    %v4784 = vsub.f32 %v4752, 0.6931472
    %v4785 = vsub.f32 %v4753, 0.6931472
    %v4786 = vsub.f32 %v4754, 0.6931472
    %v4787 = vsub.f32 %v4755, 0.6931472
    %v4788 = vsub.f32 %v4756, 0.6931472
    %v4789 = vsub.f32 %v4757, 0.6931472
    %v4790 = vsub.f32 %v4758, 0.6931472
    %v4791 = vsub.f32 %v4759, 0.6931472
    %v4792 = vsub.f32 %v4760, 0.6931472
    %v4793 = vsub.f32 %v4761, 0.6931472
    %v4794 = vsub.f32 %v4762, 0.6931472
    %v4795 = vsub.f32 %v4763, 0.6931472
    %v4796 = vsub.f32 %v4764, 0.6931472
    %v4797 = vsub.f32 %v4765, 0.6931472
    %v4798 = vsub.f32 %v4766, 0.6931472
    %v4799 = vsub.f32 %v4767, 0.6931472
    %v4800 = vsub.f32 %v4768, 0.6931472
    %v4801 = vsub.f32 %v4769, 0.6931472
    %v4802 = vsub.f32 %v4770, 0.6931472
    %v4803 = vsub.f32 %v4771, 0.6931472
    %v4804 = vsub.f32 %v4772, 0.6931472
    %v4805 = vsub.f32 %v4773, 0.6931472
    %v4806 = vsub.f32 %v4774, 0.6931472
    %v4807 = vsub.f32 %v4775, 0.6931472
    %v4808 = vsub.f32 %v4776, 0.6931472
    %v4809 = vsub.f32 %v4777, 0.6931472
    %v4810 = vsub.f32 %v4778, 0.6931472
    %v4812 = vlaneseq
    %v4813 = vshrl.u32 %v4812, 7
    %v4814 = vsub.s32 0, %v4813
    %v4815 = vrot.slane %v4063, %v4814
    %4817 = vmatprep.subr.mxu0 0.0
    %4818 = vmatpush1.msra.mxu0 %v3993
    %4819 = vmatprep.subr.mxu0 0.0
    %4820 = vmatpush1.msra.mxu0 %v3994
    %4821 = vmatprep.subr.mxu0 0.0
    %4822 = vmatpush1.msra.mxu0 %v3995
    %4823 = vmatprep.subr.mxu0 0.0
    %4824 = vmatpush1.msra.mxu0 %v3996
    %4825 = vmatprep.subr.mxu0 0.0
    %4826 = vmatpush1.msra.mxu0 %v3997
    %4827 = vmatprep.subr.mxu0 0.0
    %4828 = vmatpush1.msra.mxu0 %v3998
    %4829 = vmatprep.subr.mxu0 0.0
    %4830 = vmatpush1.msra.mxu0 %v3999
    %4831 = vmatprep.subr.mxu0 0.0
    %4832 = vmatpush1.msra.mxu0 %v4000
    %4833 = vmatprep.subr.mxu0 0.0
    %4834 = vmatpush1.msra.mxu0 %v4001
    %4835 = vmatprep.subr.mxu0 0.0
    %4836 = vmatpush1.msra.mxu0 %v4002
    %4837 = vmatprep.subr.mxu0 0.0
    %4838 = vmatpush1.msra.mxu0 %v4003
    %4839 = vmatprep.subr.mxu0 0.0
    %4840 = vmatpush1.msra.mxu0 %v4004
    %4841 = vmatprep.subr.mxu0 0.0
    %4842 = vmatpush1.msra.mxu0 %v4005
    %4843 = vmatprep.subr.mxu0 0.0
    %4844 = vmatpush1.msra.mxu0 %v4006
    %4845 = vmatprep.subr.mxu0 0.0
    %4846 = vmatpush1.msra.mxu0 %v4007
    %4847 = vmatprep.subr.mxu0 0.0
    %4848 = vmatpush1.msra.mxu0 %v4008
    %4849 = vmatprep.subr.mxu0 0.0
    %4850 = vmatpush1.msra.mxu0 0.0
    %4851 = vmatprep.subr.mxu0 0.0
    %4852 = vmatpush1.msra.mxu0 0.0
    %4853 = vmatprep.subr.mxu0 0.0
    %4854 = vmatpush1.msra.mxu0 0.0
    %4855 = vmatprep.subr.mxu0 0.0
    %4856 = vmatpush1.msra.mxu0 0.0
    %4857 = vmatprep.subr.mxu0 0.0
    %4858 = vmatpush1.msra.mxu0 0.0
    %4859 = vmatprep.subr.mxu0 0.0
    %4860 = vmatpush1.msra.mxu0 0.0
    %4861 = vmatprep.subr.mxu0 0.0
    %4862 = vmatpush1.msra.mxu0 0.0
    %4863 = vmatprep.subr.mxu0 0.0
    %4864 = vmatpush1.msra.mxu0 0.0
    %4865 = vmatprep.subr.mxu0 0.0
    %4866 = vmatpush1.msra.mxu0 0.0
    %4867 = vmatprep.subr.mxu0 0.0
    %4868 = vmatpush1.msra.mxu0 0.0
    %4869 = vmatprep.subr.mxu0 0.0
    %4870 = vmatpush1.msra.mxu0 0.0
    %4871 = vmatprep.subr.mxu0 0.0
    %4872 = vmatpush1.msra.mxu0 0.0
    %4873 = vmatprep.subr.mxu0 0.0
    %4874 = vmatpush1.msra.mxu0 0.0
    %4875 = vmatprep.subr.mxu0 0.0
    %4876 = vmatpush1.msra.mxu0 0.0
    %4877 = vmatprep.subr.mxu0 0.0
    %4878 = vmatpush1.msra.mxu0 0.0
    %4879 = vmatprep.subr.mxu0 0.0
    %4880 = vmatpush1.msra.mxu0 0.0
    %4881 = vmatprep.mubr.f32.mxu0 0.0
    %4882 = vmatmul.mubr.f32.gmra.mrb[0].mxu0 %v4779
    %v4883 = vpop.f32.mrb[0].mxu0
    %v4884 = vadd.f32 %v4815, %v4883
    %v4885 = vpop.f32.mrb[0].mxu0
    %4886 = vmatprep.mubr.f32.mxu0 0.0
    %4887 = vmatmul.mubr.f32.gmra.mrb[0].mxu0 %v4780
    %v4888 = vpop.f32.mrb[0].mxu0
    %v4889 = vadd.f32 %v4815, %v4888
    %v4890 = vpop.f32.mrb[0].mxu0
    %4891 = vmatprep.mubr.f32.mxu0 0.0
    %4892 = vmatmul.mubr.f32.gmra.mrb[0].mxu0 %v4781
    %v4893 = vpop.f32.mrb[0].mxu0
    %v4894 = vadd.f32 %v4815, %v4893
    %v4895 = vpop.f32.mrb[0].mxu0
    %4896 = vmatprep.mubr.f32.mxu0 0.0
    %4897 = vmatmul.mubr.f32.gmra.mrb[0].mxu0 %v4782
    %v4898 = vpop.f32.mrb[0].mxu0
    %v4899 = vadd.f32 %v4815, %v4898
    %v4900 = vpop.f32.mrb[0].mxu0
    %4901 = vmatprep.mubr.f32.mxu0 0.0
    %4902 = vmatmul.mubr.f32.gmra.mrb[0].mxu0 %v4783
    %v4903 = vpop.f32.mrb[0].mxu0
    %v4904 = vadd.f32 %v4815, %v4903
    %v4905 = vpop.f32.mrb[0].mxu0
    %4906 = vmatprep.mubr.f32.mxu0 0.0
    %4907 = vmatmul.mubr.f32.gmra.mrb[0].mxu0 %v4784
    %v4908 = vpop.f32.mrb[0].mxu0
    %v4909 = vadd.f32 %v4815, %v4908
    %v4910 = vpop.f32.mrb[0].mxu0
    %4911 = vmatprep.mubr.f32.mxu0 0.0
    %4912 = vmatmul.mubr.f32.gmra.mrb[0].mxu0 %v4785
    %v4913 = vpop.f32.mrb[0].mxu0
    %v4914 = vadd.f32 %v4815, %v4913
    %v4915 = vpop.f32.mrb[0].mxu0
    %4916 = vmatprep.mubr.f32.mxu0 0.0
    %4917 = vmatmul.mubr.f32.gmra.mrb[0].mxu0 %v4786
    %v4918 = vpop.f32.mrb[0].mxu0
    %v4919 = vadd.f32 %v4815, %v4918
    %v4920 = vpop.f32.mrb[0].mxu0
    %4921 = vmatprep.mubr.f32.mxu0 0.0
    %4922 = vmatmul.mubr.f32.gmra.mrb[0].mxu0 %v4787
    %v4923 = vpop.f32.mrb[0].mxu0
    %v4924 = vadd.f32 %v4815, %v4923
    %v4925 = vpop.f32.mrb[0].mxu0
    %4926 = vmatprep.mubr.f32.mxu0 0.0
    %4927 = vmatmul.mubr.f32.gmra.mrb[0].mxu0 %v4788
    %v4928 = vpop.f32.mrb[0].mxu0
    %v4929 = vadd.f32 %v4815, %v4928
    %v4930 = vpop.f32.mrb[0].mxu0
    %4931 = vmatprep.mubr.f32.mxu0 0.0
    %4932 = vmatmul.mubr.f32.gmra.mrb[0].mxu0 %v4789
    %v4933 = vpop.f32.mrb[0].mxu0
    %v4934 = vadd.f32 %v4815, %v4933
    %v4935 = vpop.f32.mrb[0].mxu0
    %4936 = vmatprep.mubr.f32.mxu0 0.0
    %4937 = vmatmul.mubr.f32.gmra.mrb[0].mxu0 %v4790
    %v4938 = vpop.f32.mrb[0].mxu0
    %v4939 = vadd.f32 %v4815, %v4938
    %v4940 = vpop.f32.mrb[0].mxu0
    %4941 = vmatprep.mubr.f32.mxu0 0.0
    %4942 = vmatmul.mubr.f32.gmra.mrb[0].mxu0 %v4791
    %v4943 = vpop.f32.mrb[0].mxu0
    %v4944 = vadd.f32 %v4815, %v4943
    %v4945 = vpop.f32.mrb[0].mxu0
    %4946 = vmatprep.mubr.f32.mxu0 0.0
    %4947 = vmatmul.mubr.f32.gmra.mrb[0].mxu0 %v4792
    %v4948 = vpop.f32.mrb[0].mxu0
    %v4949 = vadd.f32 %v4815, %v4948
    %v4950 = vpop.f32.mrb[0].mxu0
    %4951 = vmatprep.mubr.f32.mxu0 0.0
    %4952 = vmatmul.mubr.f32.gmra.mrb[0].mxu0 %v4793
    %v4953 = vpop.f32.mrb[0].mxu0
    %v4954 = vadd.f32 %v4815, %v4953
    %v4955 = vpop.f32.mrb[0].mxu0
    %4956 = vmatprep.mubr.f32.mxu0 0.0
    %4957 = vmatmul.mubr.f32.gmra.mrb[0].mxu0 %v4794
    %v4958 = vpop.f32.mrb[0].mxu0
    %v4959 = vadd.f32 %v4815, %v4958
    %v4960 = vpop.f32.mrb[0].mxu0
    %4961 = vmatprep.mubr.f32.mxu0 0.0
    %4962 = vmatmul.mubr.f32.gmra.mrb[0].mxu0 %v4795
    %v4963 = vpop.f32.mrb[0].mxu0
    %v4964 = vadd.f32 %v4815, %v4963
    %v4965 = vpop.f32.mrb[0].mxu0
    %4966 = vmatprep.mubr.f32.mxu0 0.0
    %4967 = vmatmul.mubr.f32.gmra.mrb[0].mxu0 %v4796
    %v4968 = vpop.f32.mrb[0].mxu0
    %v4969 = vadd.f32 %v4815, %v4968
    %v4970 = vpop.f32.mrb[0].mxu0
    %4971 = vmatprep.mubr.f32.mxu0 0.0
    %4972 = vmatmul.mubr.f32.gmra.mrb[0].mxu0 %v4797
    %v4973 = vpop.f32.mrb[0].mxu0
    %v4974 = vadd.f32 %v4815, %v4973
    %v4975 = vpop.f32.mrb[0].mxu0
    %4976 = vmatprep.mubr.f32.mxu0 0.0
    %4977 = vmatmul.mubr.f32.gmra.mrb[0].mxu0 %v4798
    %v4978 = vpop.f32.mrb[0].mxu0
    %v4979 = vadd.f32 %v4815, %v4978
    %v4980 = vpop.f32.mrb[0].mxu0
    %4981 = vmatprep.mubr.f32.mxu0 0.0
    %4982 = vmatmul.mubr.f32.gmra.mrb[0].mxu0 %v4799
    %v4983 = vpop.f32.mrb[0].mxu0
    %v4984 = vadd.f32 %v4815, %v4983
    %v4985 = vpop.f32.mrb[0].mxu0
    %4986 = vmatprep.mubr.f32.mxu0 0.0
    %4987 = vmatmul.mubr.f32.gmra.mrb[0].mxu0 %v4800
    %v4988 = vpop.f32.mrb[0].mxu0
    %v4989 = vadd.f32 %v4815, %v4988
    %v4990 = vpop.f32.mrb[0].mxu0
    %4991 = vmatprep.mubr.f32.mxu0 0.0
    %4992 = vmatmul.mubr.f32.gmra.mrb[0].mxu0 %v4801
    %v4993 = vpop.f32.mrb[0].mxu0
    %v4994 = vadd.f32 %v4815, %v4993
    %v4995 = vpop.f32.mrb[0].mxu0
    %4996 = vmatprep.mubr.f32.mxu0 0.0
    %4997 = vmatmul.mubr.f32.gmra.mrb[0].mxu0 %v4802
    %v4998 = vpop.f32.mrb[0].mxu0
    %v4999 = vadd.f32 %v4815, %v4998
    %v5000 = vpop.f32.mrb[0].mxu0
    %5001 = vmatprep.mubr.f32.mxu0 0.0
    %5002 = vmatmul.mubr.f32.gmra.mrb[0].mxu0 %v4803
    %v5003 = vpop.f32.mrb[0].mxu0
    %v5004 = vadd.f32 %v4815, %v5003
    %v5005 = vpop.f32.mrb[0].mxu0
    %5006 = vmatprep.mubr.f32.mxu0 0.0
    %5007 = vmatmul.mubr.f32.gmra.mrb[0].mxu0 %v4804
    %v5008 = vpop.f32.mrb[0].mxu0
    %v5009 = vadd.f32 %v4815, %v5008
    %v5010 = vpop.f32.mrb[0].mxu0
    %5011 = vmatprep.mubr.f32.mxu0 0.0
    %5012 = vmatmul.mubr.f32.gmra.mrb[0].mxu0 %v4805
    %v5013 = vpop.f32.mrb[0].mxu0
    %v5014 = vadd.f32 %v4815, %v5013
    %v5015 = vpop.f32.mrb[0].mxu0
    %5016 = vmatprep.mubr.f32.mxu0 0.0
    %5017 = vmatmul.mubr.f32.gmra.mrb[0].mxu0 %v4806
    %v5018 = vpop.f32.mrb[0].mxu0
    %v5019 = vadd.f32 %v4815, %v5018
    %v5020 = vpop.f32.mrb[0].mxu0
    %5021 = vmatprep.mubr.f32.mxu0 0.0
    %5022 = vmatmul.mubr.f32.gmra.mrb[0].mxu0 %v4807
    %v5023 = vpop.f32.mrb[0].mxu0
    %v5024 = vadd.f32 %v4815, %v5023
    %v5025 = vpop.f32.mrb[0].mxu0
    %5026 = vmatprep.mubr.f32.mxu0 0.0
    %5027 = vmatmul.mubr.f32.gmra.mrb[0].mxu0 %v4808
    %v5028 = vpop.f32.mrb[0].mxu0
    %v5029 = vadd.f32 %v4815, %v5028
    %v5030 = vpop.f32.mrb[0].mxu0
    %5031 = vmatprep.mubr.f32.mxu0 0.0
    %5032 = vmatmul.mubr.f32.gmra.mrb[0].mxu0 %v4809
    %v5033 = vpop.f32.mrb[0].mxu0
    %v5034 = vadd.f32 %v4815, %v5033
    %v5035 = vpop.f32.mrb[0].mxu0
    %5036 = vmatprep.mubr.f32.mxu0 0.0
    %5037 = vmatmul.mubr.f32.gmra.mrb[0].mxu0 %v4810
    %v5038 = vpop.f32.mrb[0].mxu0
    %v5039 = vadd.f32 %v4815, %v5038
    %v5040 = vpop.f32.mrb[0].mxu0
    %5041 = vdwg.mxu0
    %v5042 = vmul.f32 %v4884, %v1465
    %v5043 = vmul.f32 %v4889, %v1469
    %v5044 = vmul.f32 %v4894, %v1473
    %v5045 = vmul.f32 %v4899, %v1477
    %v5046 = vmul.f32 %v4904, %v1481
    %v5047 = vmul.f32 %v4909, %v1485
    %v5048 = vmul.f32 %v4914, %v1489
    %v5049 = vmul.f32 %v4919, %v1493
    %v5050 = vmul.f32 %v4924, %v1497
    %v5051 = vmul.f32 %v4929, %v1501
    %v5052 = vmul.f32 %v4934, %v1505
    %v5053 = vmul.f32 %v4939, %v1509
    %v5054 = vmul.f32 %v4944, %v1513
    %v5055 = vmul.f32 %v4949, %v1517
    %v5056 = vmul.f32 %v4954, %v1521
    %v5057 = vmul.f32 %v4959, %v1525
    %v5058 = vmul.f32 %v4964, %v1529
    %v5059 = vmul.f32 %v4969, %v1533
    %v5060 = vmul.f32 %v4974, %v1537
    %v5061 = vmul.f32 %v4979, %v1541
    %v5062 = vmul.f32 %v4984, %v1545
    %v5063 = vmul.f32 %v4989, %v1549
    %v5064 = vmul.f32 %v4994, %v1553
    %v5065 = vmul.f32 %v4999, %v1557
    %v5066 = vmul.f32 %v5004, %v1561
    %v5067 = vmul.f32 %v5009, %v1565
    %v5068 = vmul.f32 %v5014, %v1569
    %v5069 = vmul.f32 %v5019, %v1573
    %v5070 = vmul.f32 %v5024, %v1577
    %v5071 = vmul.f32 %v5029, %v1581
    %v5072 = vmul.f32 %v5034, %v1585
    %v5073 = vmul.f32 %v5039, %v1589
    %5074 = vmatprep.subr.mxu0 0.0
    %5075 = vmatpush1.msra.mxu0 %v4010
    %5076 = vmatprep.subr.mxu0 0.0
    %5077 = vmatpush1.msra.mxu0 %v4011
    %5078 = vmatprep.subr.mxu0 0.0
    %5079 = vmatpush1.msra.mxu0 %v4012
    %5080 = vmatprep.subr.mxu0 0.0
    %5081 = vmatpush1.msra.mxu0 %v4013
    %5082 = vmatprep.subr.mxu0 0.0
    %5083 = vmatpush1.msra.mxu0 %v4014
    %5084 = vmatprep.subr.mxu0 0.0
    %5085 = vmatpush1.msra.mxu0 %v4015
    %5086 = vmatprep.subr.mxu0 0.0
    %5087 = vmatpush1.msra.mxu0 %v4016
    %5088 = vmatprep.subr.mxu0 0.0
    %5089 = vmatpush1.msra.mxu0 %v4017
    %5090 = vmatprep.subr.mxu0 0.0
    %5091 = vmatpush1.msra.mxu0 %v4018
    %5092 = vmatprep.subr.mxu0 0.0
    %5093 = vmatpush1.msra.mxu0 %v4019
    %5094 = vmatprep.subr.mxu0 0.0
    %5095 = vmatpush1.msra.mxu0 %v4020
    %5096 = vmatprep.subr.mxu0 0.0
    %5097 = vmatpush1.msra.mxu0 %v4021
    %5098 = vmatprep.subr.mxu0 0.0
    %5099 = vmatpush1.msra.mxu0 %v4022
    %5100 = vmatprep.subr.mxu0 0.0
    %5101 = vmatpush1.msra.mxu0 %v4023
    %5102 = vmatprep.subr.mxu0 0.0
    %5103 = vmatpush1.msra.mxu0 %v4024
    %5104 = vmatprep.subr.mxu0 0.0
    %5105 = vmatpush1.msra.mxu0 %v4025
    %5106 = vmatprep.subr.mxu0 0.0
    %5107 = vmatpush1.msra.mxu0 0.0
    %5108 = vmatprep.subr.mxu0 0.0
    %5109 = vmatpush1.msra.mxu0 0.0
    %5110 = vmatprep.subr.mxu0 0.0
    %5111 = vmatpush1.msra.mxu0 0.0
    %5112 = vmatprep.subr.mxu0 0.0
    %5113 = vmatpush1.msra.mxu0 0.0
    %5114 = vmatprep.subr.mxu0 0.0
    %5115 = vmatpush1.msra.mxu0 0.0
    %5116 = vmatprep.subr.mxu0 0.0
    %5117 = vmatpush1.msra.mxu0 0.0
    %5118 = vmatprep.subr.mxu0 0.0
    %5119 = vmatpush1.msra.mxu0 0.0
    %5120 = vmatprep.subr.mxu0 0.0
    %5121 = vmatpush1.msra.mxu0 0.0
    %5122 = vmatprep.subr.mxu0 0.0
    %5123 = vmatpush1.msra.mxu0 0.0
    %5124 = vmatprep.subr.mxu0 0.0
    %5125 = vmatpush1.msra.mxu0 0.0
    %5126 = vmatprep.subr.mxu0 0.0
    %5127 = vmatpush1.msra.mxu0 0.0
    %5128 = vmatprep.subr.mxu0 0.0
    %5129 = vmatpush1.msra.mxu0 0.0
    %5130 = vmatprep.subr.mxu0 0.0
    %5131 = vmatpush1.msra.mxu0 0.0
    %5132 = vmatprep.subr.mxu0 0.0
    %5133 = vmatpush1.msra.mxu0 0.0
    %5134 = vmatprep.subr.mxu0 0.0
    %5135 = vmatpush1.msra.mxu0 0.0
    %5136 = vmatprep.subr.mxu0 0.0
    %5137 = vmatpush1.msra.mxu0 0.0
    %5138 = vmatprep.mubr.f32.mxu0 0.0
    %5139 = vmatmul.mubr.f32.gmra.mrb[0].mxu0 %v3971
    %v5140 = vpop.f32.mrb[0].mxu0
    %v5141 = vadd.f32 0.0, %v5140
    %v5142 = vpop.f32.mrb[0].mxu0
    %5143 = vmatprep.mubr.f32.mxu0 0.0
    %5144 = vmatmul.mubr.f32.gmra.mrb[0].mxu0 %v3972
    %v5145 = vpop.f32.mrb[0].mxu0
    %v5146 = vadd.f32 0.0, %v5145
    %v5147 = vpop.f32.mrb[0].mxu0
    %5148 = vmatprep.mubr.f32.mxu0 0.0
    %5149 = vmatmul.mubr.f32.gmra.mrb[0].mxu0 %v3973
    %v5150 = vpop.f32.mrb[0].mxu0
    %v5151 = vadd.f32 0.0, %v5150
    %v5152 = vpop.f32.mrb[0].mxu0
    %5153 = vmatprep.mubr.f32.mxu0 0.0
    %5154 = vmatmul.mubr.f32.gmra.mrb[0].mxu0 %v3974
    %v5155 = vpop.f32.mrb[0].mxu0
    %v5156 = vadd.f32 0.0, %v5155
    %v5157 = vpop.f32.mrb[0].mxu0
    %5158 = vdwg.mxu0
    %v5159 = vmul.f32 %v5042, %v5141
    %v5160 = vmul.f32 %v5043, %v5141
    %v5161 = vmul.f32 %v5044, %v5141
    %v5162 = vmul.f32 %v5045, %v5141
    %v5163 = vmul.f32 %v5046, %v5141
    %v5164 = vmul.f32 %v5047, %v5141
    %v5165 = vmul.f32 %v5048, %v5141
    %v5166 = vmul.f32 %v5049, %v5141
    %v5167 = vmul.f32 %v5050, %v5146
    %v5168 = vmul.f32 %v5051, %v5146
    %v5169 = vmul.f32 %v5052, %v5146
    %v5170 = vmul.f32 %v5053, %v5146
    %v5171 = vmul.f32 %v5054, %v5146
    %v5172 = vmul.f32 %v5055, %v5146
    %v5173 = vmul.f32 %v5056, %v5146
    %v5174 = vmul.f32 %v5057, %v5146
    %v5175 = vmul.f32 %v5058, %v5151
    %v5176 = vmul.f32 %v5059, %v5151
    %v5177 = vmul.f32 %v5060, %v5151
    %v5178 = vmul.f32 %v5061, %v5151
    %v5179 = vmul.f32 %v5062, %v5151
    %v5180 = vmul.f32 %v5063, %v5151
    %v5181 = vmul.f32 %v5064, %v5151
    %v5182 = vmul.f32 %v5065, %v5151
    %v5183 = vmul.f32 %v5066, %v5156
    %v5184 = vmul.f32 %v5067, %v5156
    %v5185 = vmul.f32 %v5068, %v5156
    %v5186 = vmul.f32 %v5069, %v5156
    %v5187 = vmul.f32 %v5070, %v5156
    %v5188 = vmul.f32 %v5071, %v5156
    %v5189 = vmul.f32 %v5072, %v5156
    %v5190 = vmul.f32 %v5073, %v5156
    %v5191 = vrot.slane %v5159, 4
    %v5192 = vadd.f32 %v5159, %v5191
    %v5193 = vrot.slane %v5192, 2
    %v5194 = vadd.f32 %v5192, %v5193
    %v5195 = vrot.slane %v5194, 1
    %v5196 = vadd.f32 %v5194, %v5195
    %v5197 = vrot.slane %v5160, 4
    %v5198 = vadd.f32 %v5160, %v5197
    %v5199 = vrot.slane %v5198, 2
    %v5200 = vadd.f32 %v5198, %v5199
    %v5201 = vrot.slane %v5200, 1
    %v5202 = vadd.f32 %v5200, %v5201
    %v5203 = vrot.slane %v5161, 4
    %v5204 = vadd.f32 %v5161, %v5203
    %v5205 = vrot.slane %v5204, 2
    %v5206 = vadd.f32 %v5204, %v5205
    %v5207 = vrot.slane %v5206, 1
    %v5208 = vadd.f32 %v5206, %v5207
    %v5209 = vrot.slane %v5162, 4
    %v5210 = vadd.f32 %v5162, %v5209
    %v5211 = vrot.slane %v5210, 2
    %v5212 = vadd.f32 %v5210, %v5211
    %v5213 = vrot.slane %v5212, 1
    %v5214 = vadd.f32 %v5212, %v5213
    %v5215 = vrot.slane %v5163, 4
    %v5216 = vadd.f32 %v5163, %v5215
    %v5217 = vrot.slane %v5216, 2
    %v5218 = vadd.f32 %v5216, %v5217
    %v5219 = vrot.slane %v5218, 1
    %v5220 = vadd.f32 %v5218, %v5219
    %v5221 = vrot.slane %v5164, 4
    %v5222 = vadd.f32 %v5164, %v5221
    %v5223 = vrot.slane %v5222, 2
    %v5224 = vadd.f32 %v5222, %v5223
    %v5225 = vrot.slane %v5224, 1
    %v5226 = vadd.f32 %v5224, %v5225
    %v5227 = vrot.slane %v5165, 4
    %v5228 = vadd.f32 %v5165, %v5227
    %v5229 = vrot.slane %v5228, 2
    %v5230 = vadd.f32 %v5228, %v5229
    %v5231 = vrot.slane %v5230, 1
    %v5232 = vadd.f32 %v5230, %v5231
    %v5233 = vrot.slane %v5166, 4
    %v5234 = vadd.f32 %v5166, %v5233
    %v5235 = vrot.slane %v5234, 2
    %v5236 = vadd.f32 %v5234, %v5235
    %v5237 = vrot.slane %v5236, 1
    %v5238 = vadd.f32 %v5236, %v5237
    %v5239 = vrot.slane %v5167, 4
    %v5240 = vadd.f32 %v5167, %v5239
    %v5241 = vrot.slane %v5240, 2
    %v5242 = vadd.f32 %v5240, %v5241
    %v5243 = vrot.slane %v5242, 1
    %v5244 = vadd.f32 %v5242, %v5243
    %v5245 = vrot.slane %v5168, 4
    %v5246 = vadd.f32 %v5168, %v5245
    %v5247 = vrot.slane %v5246, 2
    %v5248 = vadd.f32 %v5246, %v5247
    %v5249 = vrot.slane %v5248, 1
    %v5250 = vadd.f32 %v5248, %v5249
    %v5251 = vrot.slane %v5169, 4
    %v5252 = vadd.f32 %v5169, %v5251
    %v5253 = vrot.slane %v5252, 2
    %v5254 = vadd.f32 %v5252, %v5253
    %v5255 = vrot.slane %v5254, 1
    %v5256 = vadd.f32 %v5254, %v5255
    %v5257 = vrot.slane %v5170, 4
    %v5258 = vadd.f32 %v5170, %v5257
    %v5259 = vrot.slane %v5258, 2
    %v5260 = vadd.f32 %v5258, %v5259
    %v5261 = vrot.slane %v5260, 1
    %v5262 = vadd.f32 %v5260, %v5261
    %v5263 = vrot.slane %v5171, 4
    %v5264 = vadd.f32 %v5171, %v5263
    %v5265 = vrot.slane %v5264, 2
    %v5266 = vadd.f32 %v5264, %v5265
    %v5267 = vrot.slane %v5266, 1
    %v5268 = vadd.f32 %v5266, %v5267
    %v5269 = vrot.slane %v5172, 4
    %v5270 = vadd.f32 %v5172, %v5269
    %v5271 = vrot.slane %v5270, 2
    %v5272 = vadd.f32 %v5270, %v5271
    %v5273 = vrot.slane %v5272, 1
    %v5274 = vadd.f32 %v5272, %v5273
    %v5275 = vrot.slane %v5173, 4
    %v5276 = vadd.f32 %v5173, %v5275
    %v5277 = vrot.slane %v5276, 2
    %v5278 = vadd.f32 %v5276, %v5277
    %v5279 = vrot.slane %v5278, 1
    %v5280 = vadd.f32 %v5278, %v5279
    %v5281 = vrot.slane %v5174, 4
    %v5282 = vadd.f32 %v5174, %v5281
    %v5283 = vrot.slane %v5282, 2
    %v5284 = vadd.f32 %v5282, %v5283
    %v5285 = vrot.slane %v5284, 1
    %v5286 = vadd.f32 %v5284, %v5285
    %v5287 = vrot.slane %v5175, 4
    %v5288 = vadd.f32 %v5175, %v5287
    %v5289 = vrot.slane %v5288, 2
    %v5290 = vadd.f32 %v5288, %v5289
    %v5291 = vrot.slane %v5290, 1
    %v5292 = vadd.f32 %v5290, %v5291
    %v5293 = vrot.slane %v5176, 4
    %v5294 = vadd.f32 %v5176, %v5293
    %v5295 = vrot.slane %v5294, 2
    %v5296 = vadd.f32 %v5294, %v5295
    %v5297 = vrot.slane %v5296, 1
    %v5298 = vadd.f32 %v5296, %v5297
    %v5299 = vrot.slane %v5177, 4
    %v5300 = vadd.f32 %v5177, %v5299
    %v5301 = vrot.slane %v5300, 2
    %v5302 = vadd.f32 %v5300, %v5301
    %v5303 = vrot.slane %v5302, 1
    %v5304 = vadd.f32 %v5302, %v5303
    %v5305 = vrot.slane %v5178, 4
    %v5306 = vadd.f32 %v5178, %v5305
    %v5307 = vrot.slane %v5306, 2
    %v5308 = vadd.f32 %v5306, %v5307
    %v5309 = vrot.slane %v5308, 1
    %v5310 = vadd.f32 %v5308, %v5309
    %v5311 = vrot.slane %v5179, 4
    %v5312 = vadd.f32 %v5179, %v5311
    %v5313 = vrot.slane %v5312, 2
    %v5314 = vadd.f32 %v5312, %v5313
    %v5315 = vrot.slane %v5314, 1
    %v5316 = vadd.f32 %v5314, %v5315
    %v5317 = vrot.slane %v5180, 4
    %v5318 = vadd.f32 %v5180, %v5317
    %v5319 = vrot.slane %v5318, 2
    %v5320 = vadd.f32 %v5318, %v5319
    %v5321 = vrot.slane %v5320, 1
    %v5322 = vadd.f32 %v5320, %v5321
    %v5323 = vrot.slane %v5181, 4
    %v5324 = vadd.f32 %v5181, %v5323
    %v5325 = vrot.slane %v5324, 2
    %v5326 = vadd.f32 %v5324, %v5325
    %v5327 = vrot.slane %v5326, 1
    %v5328 = vadd.f32 %v5326, %v5327
    %v5329 = vrot.slane %v5182, 4
    %v5330 = vadd.f32 %v5182, %v5329
    %v5331 = vrot.slane %v5330, 2
    %v5332 = vadd.f32 %v5330, %v5331
    %v5333 = vrot.slane %v5332, 1
    %v5334 = vadd.f32 %v5332, %v5333
    %v5335 = vrot.slane %v5183, 4
    %v5336 = vadd.f32 %v5183, %v5335
    %v5337 = vrot.slane %v5336, 2
    %v5338 = vadd.f32 %v5336, %v5337
    %v5339 = vrot.slane %v5338, 1
    %v5340 = vadd.f32 %v5338, %v5339
    %v5341 = vrot.slane %v5184, 4
    %v5342 = vadd.f32 %v5184, %v5341
    %v5343 = vrot.slane %v5342, 2
    %v5344 = vadd.f32 %v5342, %v5343
    %v5345 = vrot.slane %v5344, 1
    %v5346 = vadd.f32 %v5344, %v5345
    %v5347 = vrot.slane %v5185, 4
    %v5348 = vadd.f32 %v5185, %v5347
    %v5349 = vrot.slane %v5348, 2
    %v5350 = vadd.f32 %v5348, %v5349
    %v5351 = vrot.slane %v5350, 1
    %v5352 = vadd.f32 %v5350, %v5351
    %v5353 = vrot.slane %v5186, 4
    %v5354 = vadd.f32 %v5186, %v5353
    %v5355 = vrot.slane %v5354, 2
    %v5356 = vadd.f32 %v5354, %v5355
    %v5357 = vrot.slane %v5356, 1
    %v5358 = vadd.f32 %v5356, %v5357
    %v5359 = vrot.slane %v5187, 4
    %v5360 = vadd.f32 %v5187, %v5359
    %v5361 = vrot.slane %v5360, 2
    %v5362 = vadd.f32 %v5360, %v5361
    %v5363 = vrot.slane %v5362, 1
    %v5364 = vadd.f32 %v5362, %v5363
    %v5365 = vrot.slane %v5188, 4
    %v5366 = vadd.f32 %v5188, %v5365
    %v5367 = vrot.slane %v5366, 2
    %v5368 = vadd.f32 %v5366, %v5367
    %v5369 = vrot.slane %v5368, 1
    %v5370 = vadd.f32 %v5368, %v5369
    %v5371 = vrot.slane %v5189, 4
    %v5372 = vadd.f32 %v5189, %v5371
    %v5373 = vrot.slane %v5372, 2
    %v5374 = vadd.f32 %v5372, %v5373
    %v5375 = vrot.slane %v5374, 1
    %v5376 = vadd.f32 %v5374, %v5375
    %v5377 = vrot.slane %v5190, 4
    %v5378 = vadd.f32 %v5190, %v5377
    %v5379 = vrot.slane %v5378, 2
    %v5380 = vadd.f32 %v5378, %v5379
    %v5381 = vrot.slane %v5380, 1
    %v5382 = vadd.f32 %v5380, %v5381
    %v5384 = vlaneseq
    %v5385 = vshrl.u32 %v5384, 7
    %v5386 = vsub.s32 0, %v5385
    %v5387 = vrot.slane %v4065, %v5386
    %v5421 = vsel %vm1970, %v5202, %v5196
    %v5422 = vsel %vm1972, %v5208, %v5421
    %v5423 = vsel %vm1974, %v5214, %v5422
    %v5424 = vsel %vm1976, %v5220, %v5423
    %v5425 = vsel %vm1978, %v5226, %v5424
    %v5426 = vsel %vm1980, %v5232, %v5425
    %v5427 = vsel %vm1982, %v5238, %v5426
    %v5428 = vsel %vm1970, %v5250, %v5244
    %v5429 = vsel %vm1972, %v5256, %v5428
    %v5430 = vsel %vm1974, %v5262, %v5429
    %v5431 = vsel %vm1976, %v5268, %v5430
    %v5432 = vsel %vm1978, %v5274, %v5431
    %v5433 = vsel %vm1980, %v5280, %v5432
    %v5434 = vsel %vm1982, %v5286, %v5433
    %v5435 = vsel %vm1970, %v5298, %v5292
    %v5436 = vsel %vm1972, %v5304, %v5435
    %v5437 = vsel %vm1974, %v5310, %v5436
    %v5438 = vsel %vm1976, %v5316, %v5437
    %v5439 = vsel %vm1978, %v5322, %v5438
    %v5440 = vsel %vm1980, %v5328, %v5439
    %v5441 = vsel %vm1982, %v5334, %v5440
    %v5442 = vsel %vm1970, %v5346, %v5340
    %v5443 = vsel %vm1972, %v5352, %v5442
    %v5444 = vsel %vm1974, %v5358, %v5443
    %v5445 = vsel %vm1976, %v5364, %v5444
    %v5446 = vsel %vm1978, %v5370, %v5445
    %v5447 = vsel %vm1980, %v5376, %v5446
    %v5448 = vsel %vm1982, %v5382, %v5447
    %5453 = vmatprep.subr.mxu0 0.0
    %5454 = vmatpush1.msra.mxu0 %v4027
    %5455 = vmatprep.subr.mxu0 0.0
    %5456 = vmatpush1.msra.mxu0 %v4028
    %5457 = vmatprep.subr.mxu0 0.0
    %5458 = vmatpush1.msra.mxu0 %v4029
    %5459 = vmatprep.subr.mxu0 0.0
    %5460 = vmatpush1.msra.mxu0 %v4030
    %5461 = vmatprep.subr.mxu0 0.0
    %5462 = vmatpush1.msra.mxu0 %v4031
    %5463 = vmatprep.subr.mxu0 0.0
    %5464 = vmatpush1.msra.mxu0 %v4032
    %5465 = vmatprep.subr.mxu0 0.0
    %5466 = vmatpush1.msra.mxu0 %v4033
    %5467 = vmatprep.subr.mxu0 0.0
    %5468 = vmatpush1.msra.mxu0 %v4034
    %5469 = vmatprep.subr.mxu0 0.0
    %5470 = vmatpush1.msra.mxu0 %v4035
    %5471 = vmatprep.subr.mxu0 0.0
    %5472 = vmatpush1.msra.mxu0 %v4036
    %5473 = vmatprep.subr.mxu0 0.0
    %5474 = vmatpush1.msra.mxu0 %v4037
    %5475 = vmatprep.subr.mxu0 0.0
    %5476 = vmatpush1.msra.mxu0 %v4038
    %5477 = vmatprep.subr.mxu0 0.0
    %5478 = vmatpush1.msra.mxu0 %v4039
    %5479 = vmatprep.subr.mxu0 0.0
    %5480 = vmatpush1.msra.mxu0 %v4040
    %5481 = vmatprep.subr.mxu0 0.0
    %5482 = vmatpush1.msra.mxu0 %v4041
    %5483 = vmatprep.subr.mxu0 0.0
    %5484 = vmatpush1.msra.mxu0 %v4042
    %5485 = vmatprep.subr.mxu0 0.0
    %5486 = vmatpush1.msra.mxu0 0.0
    %5487 = vmatprep.subr.mxu0 0.0
    %5488 = vmatpush1.msra.mxu0 0.0
    %5489 = vmatprep.subr.mxu0 0.0
    %5490 = vmatpush1.msra.mxu0 0.0
    %5491 = vmatprep.subr.mxu0 0.0
    %5492 = vmatpush1.msra.mxu0 0.0
    %5493 = vmatprep.subr.mxu0 0.0
    %5494 = vmatpush1.msra.mxu0 0.0
    %5495 = vmatprep.subr.mxu0 0.0
    %5496 = vmatpush1.msra.mxu0 0.0
    %5497 = vmatprep.subr.mxu0 0.0
    %5498 = vmatpush1.msra.mxu0 0.0
    %5499 = vmatprep.subr.mxu0 0.0
    %5500 = vmatpush1.msra.mxu0 0.0
    %5501 = vmatprep.subr.mxu0 0.0
    %5502 = vmatpush1.msra.mxu0 0.0
    %5503 = vmatprep.subr.mxu0 0.0
    %5504 = vmatpush1.msra.mxu0 0.0
    %5505 = vmatprep.subr.mxu0 0.0
    %5506 = vmatpush1.msra.mxu0 0.0
    %5507 = vmatprep.subr.mxu0 0.0
    %5508 = vmatpush1.msra.mxu0 0.0
    %5509 = vmatprep.subr.mxu0 0.0
    %5510 = vmatpush1.msra.mxu0 0.0
    %5511 = vmatprep.subr.mxu0 0.0
    %5512 = vmatpush1.msra.mxu0 0.0
    %5513 = vmatprep.subr.mxu0 0.0
    %5514 = vmatpush1.msra.mxu0 0.0
    %5515 = vmatprep.subr.mxu0 0.0
    %5516 = vmatpush1.msra.mxu0 0.0
    %5517 = vmatprep.mubr.f32.mxu0 0.0
    %5518 = vmatmul.mubr.f32.gmra.mrb[0].mxu0 %v5427
    %v5519 = vpop.f32.mrb[0].mxu0
    %v5520 = vadd.f32 %v5387, %v5519
    %v5521 = vpop.f32.mrb[0].mxu0
    %5522 = vmatprep.mubr.f32.mxu0 0.0
    %5523 = vmatmul.mubr.f32.gmra.mrb[0].mxu0 %v5434
    %v5524 = vpop.f32.mrb[0].mxu0
    %v5525 = vadd.f32 %v5387, %v5524
    %v5526 = vpop.f32.mrb[0].mxu0
    %5527 = vmatprep.mubr.f32.mxu0 0.0
    %5528 = vmatmul.mubr.f32.gmra.mrb[0].mxu0 %v5441
    %v5529 = vpop.f32.mrb[0].mxu0
    %v5530 = vadd.f32 %v5387, %v5529
    %v5531 = vpop.f32.mrb[0].mxu0
    %5532 = vmatprep.mubr.f32.mxu0 0.0
    %5533 = vmatmul.mubr.f32.gmra.mrb[0].mxu0 %v5448
    %v5534 = vpop.f32.mrb[0].mxu0
    %v5535 = vadd.f32 %v5387, %v5534
    %v5536 = vpop.f32.mrb[0].mxu0
    %5537 = vdwg.mxu0
    %v5538 = vmax.f32 %v5520, 0.0
    %v5539 = vmax.f32 %v5525, 0.0
    %v5540 = vmax.f32 %v5530, 0.0
    %v5541 = vmax.f32 %v5535, 0.0
    %v5542 = vand.u32 2147483647, %v5520
    %v5543 = vand.u32 2147483647, %v5525
    %v5544 = vand.u32 2147483647, %v5530
    %v5545 = vand.u32 2147483647, %v5535
    %v5546 = vsub.f32 0.0, %v5542
    %v5547 = vsub.f32 0.0, %v5543
    %v5548 = vsub.f32 0.0, %v5544
    %v5549 = vsub.f32 0.0, %v5545
    %v5550 = vmul.f32 %v5546, 1.442695
    %v5551 = vpow.pop %v5550
    %v5552 = vmul.f32 %v5547, 1.442695
    %v5553 = vpow.pop %v5552
    %v5554 = vmul.f32 %v5548, 1.442695
    %v5555 = vpow.pop %v5554
    %v5556 = vmul.f32 %v5549, 1.442695
    %v5557 = vpow.pop %v5556
    %v5558 = vadd.f32 %v5551, 1.0
    %v5559 = vlog2.pop %v5558
    %v5560 = vmul.f32 %v5559, 0.6931472
    %v5561 = vmul.f32 -0.5, %v5551
    %v5562 = vadd.f32 %v5561, 1.0
    %v5563 = vmul.f32 %v5562, %v5551
    %v5564 = vand.u32 2147483647, %v5551
    %vm5565 = vcmp.lt.f32.partialorder %v5564, 0.0004427343
    %v5566 = vsel %vm5565, %v5563, %v5560
    %v5567 = vadd.f32 %v5553, 1.0
    %v5568 = vlog2.pop %v5567
    %v5569 = vmul.f32 %v5568, 0.6931472
    %v5570 = vmul.f32 -0.5, %v5553
    %v5571 = vadd.f32 %v5570, 1.0
    %v5572 = vmul.f32 %v5571, %v5553
    %v5573 = vand.u32 2147483647, %v5553
    %vm5574 = vcmp.lt.f32.partialorder %v5573, 0.0004427343
    %v5575 = vsel %vm5574, %v5572, %v5569
    %v5576 = vadd.f32 %v5555, 1.0
    %v5577 = vlog2.pop %v5576
    %v5578 = vmul.f32 %v5577, 0.6931472
    %v5579 = vmul.f32 -0.5, %v5555
    %v5580 = vadd.f32 %v5579, 1.0
    %v5581 = vmul.f32 %v5580, %v5555
    %v5582 = vand.u32 2147483647, %v5555
    %vm5583 = vcmp.lt.f32.partialorder %v5582, 0.0004427343
    %v5584 = vsel %vm5583, %v5581, %v5578
    %v5585 = vadd.f32 %v5557, 1.0
    %v5586 = vlog2.pop %v5585
    %v5587 = vmul.f32 %v5586, 0.6931472
    %v5588 = vmul.f32 -0.5, %v5557
    %v5589 = vadd.f32 %v5588, 1.0
    %v5590 = vmul.f32 %v5589, %v5557
    %v5591 = vand.u32 2147483647, %v5557
    %vm5592 = vcmp.lt.f32.partialorder %v5591, 0.0004427343
    %v5593 = vsel %vm5592, %v5590, %v5587
    %v5594 = vadd.f32 %v5538, %v5566
    %v5595 = vadd.f32 %v5539, %v5575
    %v5596 = vadd.f32 %v5540, %v5584
    %v5597 = vadd.f32 %v5541, %v5593
    %v5598 = vsub.f32 %v5594, 0.6931472
    %v5599 = vsub.f32 %v5595, 0.6931472
    %v5600 = vsub.f32 %v5596, 0.6931472
    %v5601 = vsub.f32 %v5597, 0.6931472
    %v5603 = vlaneseq
    %v5604 = vshrl.u32 %v5603, 7
    %v5605 = vsub.s32 0, %v5604
    %v5606 = vrot.slane %v4067, %v5605
    %5608 = vmatprep.subr.mxu0 0.0
    %5609 = vmatpush1.msra.mxu0 %v4044
    %5610 = vmatprep.subr.mxu0 0.0
    %5611 = vmatpush1.msra.mxu0 %v4045
    %5612 = vmatprep.subr.mxu0 0.0
    %5613 = vmatpush1.msra.mxu0 %v4046
    %5614 = vmatprep.subr.mxu0 0.0
    %5615 = vmatpush1.msra.mxu0 %v4047
    %5616 = vmatprep.subr.mxu0 0.0
    %5617 = vmatpush1.msra.mxu0 %v4048
    %5618 = vmatprep.subr.mxu0 0.0
    %5619 = vmatpush1.msra.mxu0 %v4049
    %5620 = vmatprep.subr.mxu0 0.0
    %5621 = vmatpush1.msra.mxu0 %v4050
    %5622 = vmatprep.subr.mxu0 0.0
    %5623 = vmatpush1.msra.mxu0 %v4051
    %5624 = vmatprep.subr.mxu0 0.0
    %5625 = vmatpush1.msra.mxu0 %v4052
    %5626 = vmatprep.subr.mxu0 0.0
    %5627 = vmatpush1.msra.mxu0 %v4053
    %5628 = vmatprep.subr.mxu0 0.0
    %5629 = vmatpush1.msra.mxu0 %v4054
    %5630 = vmatprep.subr.mxu0 0.0
    %5631 = vmatpush1.msra.mxu0 %v4055
    %5632 = vmatprep.subr.mxu0 0.0
    %5633 = vmatpush1.msra.mxu0 %v4056
    %5634 = vmatprep.subr.mxu0 0.0
    %5635 = vmatpush1.msra.mxu0 %v4057
    %5636 = vmatprep.subr.mxu0 0.0
    %5637 = vmatpush1.msra.mxu0 %v4058
    %5638 = vmatprep.subr.mxu0 0.0
    %5639 = vmatpush1.msra.mxu0 %v4059
    %5640 = vmatprep.subr.mxu0 0.0
    %5641 = vmatpush1.msra.mxu0 0.0
    %5642 = vmatprep.subr.mxu0 0.0
    %5643 = vmatpush1.msra.mxu0 0.0
    %5644 = vmatprep.subr.mxu0 0.0
    %5645 = vmatpush1.msra.mxu0 0.0
    %5646 = vmatprep.subr.mxu0 0.0
    %5647 = vmatpush1.msra.mxu0 0.0
    %5648 = vmatprep.subr.mxu0 0.0
    %5649 = vmatpush1.msra.mxu0 0.0
    %5650 = vmatprep.subr.mxu0 0.0
    %5651 = vmatpush1.msra.mxu0 0.0
    %5652 = vmatprep.subr.mxu0 0.0
    %5653 = vmatpush1.msra.mxu0 0.0
    %5654 = vmatprep.subr.mxu0 0.0
    %5655 = vmatpush1.msra.mxu0 0.0
    %5656 = vmatprep.subr.mxu0 0.0
    %5657 = vmatpush1.msra.mxu0 0.0
    %5658 = vmatprep.subr.mxu0 0.0
    %5659 = vmatpush1.msra.mxu0 0.0
    %5660 = vmatprep.subr.mxu0 0.0
    %5661 = vmatpush1.msra.mxu0 0.0
    %5662 = vmatprep.subr.mxu0 0.0
    %5663 = vmatpush1.msra.mxu0 0.0
    %5664 = vmatprep.subr.mxu0 0.0
    %5665 = vmatpush1.msra.mxu0 0.0
    %5666 = vmatprep.subr.mxu0 0.0
    %5667 = vmatpush1.msra.mxu0 0.0
    %5668 = vmatprep.subr.mxu0 0.0
    %5669 = vmatpush1.msra.mxu0 0.0
    %5670 = vmatprep.subr.mxu0 0.0
    %5671 = vmatpush1.msra.mxu0 0.0
    %5672 = vmatprep.mubr.f32.mxu0 0.0
    %5673 = vmatmul.mubr.f32.gmra.mrb[0].mxu0 %v5598
    %v5674 = vpop.f32.mrb[0].mxu0
    %v5675 = vadd.f32 %v5606, %v5674
    %v5676 = vpop.f32.mrb[0].mxu0
    %5677 = vmatprep.mubr.f32.mxu0 0.0
    %5678 = vmatmul.mubr.f32.gmra.mrb[0].mxu0 %v5599
    %v5679 = vpop.f32.mrb[0].mxu0
    %v5680 = vadd.f32 %v5606, %v5679
    %v5681 = vpop.f32.mrb[0].mxu0
    %5682 = vmatprep.mubr.f32.mxu0 0.0
    %5683 = vmatmul.mubr.f32.gmra.mrb[0].mxu0 %v5600
    %v5684 = vpop.f32.mrb[0].mxu0
    %v5685 = vadd.f32 %v5606, %v5684
    %v5686 = vpop.f32.mrb[0].mxu0
    %5687 = vmatprep.mubr.f32.mxu0 0.0
    %5688 = vmatmul.mubr.f32.gmra.mrb[0].mxu0 %v5601
    %v5689 = vpop.f32.mrb[0].mxu0
    %v5690 = vadd.f32 %v5606, %v5689
    %v5691 = vpop.f32.mrb[0].mxu0
    %5692 = vdwg.mxu0
    %v5693 = vadd.f32 %v3971, %v5675
    %v5694 = vadd.f32 %v3972, %v5680
    %v5695 = vadd.f32 %v3973, %v5685
    %v5696 = vadd.f32 %v3974, %v5690
    %5697 = vst [vmem:[#allocation5] sm:$0xff] %v5693
    %5698 = vst [vmem:[#allocation5 + $0x8] sm:$0xff] %v5694
    %5699 = vst [vmem:[#allocation5 + $0x10] sm:$0xff] %v5695
    %5700 = vst [vmem:[#allocation5 + $0x18] sm:$0xff] %v5696
    // Predicated region
    $region26: #{tpu_custom_call.1} parent=1 // pred_check
      _
    $region27: #{tpu_custom_call.1} parent=1 // pred_check_branch
      %5702 = sbr.rel (0) target = $region29
    $region28: #{tpu_custom_call.1} parent=1 // pred_region
      %s5704 = ssub.s32 512, 512
      %5705 = vsyncadd [#allocation4], %s5704
      %s5706 = sshll.u32 [#allocation5], 4
      %s5707 = int_to_ptr.vmem [resolvable:$true] %s5706
      %5712 = dma.vmem_to_hbm [thread:$0]  %s5707, 512, %s5, [#allocation4], 128, 128, 8
    $region29: #{tpu_custom_call.1} parent=1 // pred_fallthru
      _
    // Predicated region
    $region30: #{tpu_custom_call.1} parent=1 // pred_check
      _
    $region31: #{tpu_custom_call.1} parent=1 // pred_check_branch
      %5714 = sbr.rel (0) target = $region33
    $region32: #{tpu_custom_call.1} parent=1 // pred_region
      %5715 = dma.done [#allocation4], 512
    $region33: #{tpu_custom_call.1} parent=1 // pred_fallthru
      _
    %5716 = vsyncpa [#allocation3], 1
    %5717 = vsyncpa [#allocation4], 1

</llo_original>
